<compile_context>
chip_gen: v7x
topology: tpu7x:2x2x1
jax: 0.10.0
libtpu: 0.0.40
codegen_flags: <defaults>
</compile_context>

<pallas_src>
import jax
import jax.numpy as jnp
from jax.experimental import pallas as pl
from jax.experimental.pallas import tpu as pltpu

HIDDEN = 768          # fixed by nn.Linear(768, d_model)
D_MODEL = 128         # args.d_model (lane-dense choice)
VOCAB = 100
BATCH = 16            # small demo batch; kernel tiles any B
SEQ = 32
BM = 8                # demo batch tile (multiple of 8 sublanes); use 128/256 in prod


def _round_up(x, m):
    return ((x + m - 1) // m) * m


def news_encoder_kernel(emb_ref, mask_ref, wp_ref, bp_ref, wr_ref, br_ref, out_ref):
    """One grid step = one batch tile of `bm` news items.

    emb_ref : (bm, S, H)  f32   token embeddings (batch tile)
    mask_ref: (bm, S)     f32   attention mask (1.0 = keep)
    wp_ref  : (H, H)      bf16  BERT pooler dense weight (stand-in), resident
    bp_ref  : (1, H)      f32   BERT pooler dense bias
    wr_ref  : (H, D)      bf16  reduce_dim_linear weight (transposed vs torch), resident
    br_ref  : (1, D)      f32   reduce_dim_linear bias
    out_ref : (bm, D)     f32   final_news_vector tile
    """
    emb = emb_ref[...]                                   # (bm, S, H) f32
    mask = mask_ref[...]                                 # (bm, S)    f32

    # mask-weighted mean pooling over sequence -> (bm, H); keep f32 on the VPU.
    pooled_sum = jnp.sum(emb * mask[:, :, None], axis=1)           # (bm, H)
    denom = jnp.sum(mask, axis=1, keepdims=True)                   # (bm, 1)
    inv = pl.reciprocal(jnp.maximum(denom, 1.0), approx=True)      # EUP slot
    pooled = pooled_sum * inv                                      # (bm, H) f32

    # BERT-style pooler: tanh(pooled @ Wp + bp) -> pooler_output (bm, 768)
    # bf16 operands, f32 accumulation on the MXU.
    pooler_out = jnp.tanh(
        jnp.dot(pooled.astype(jnp.bfloat16), wp_ref[...],
                preferred_element_type=jnp.float32)
        + bp_ref[...]
    )                                                              # (bm, H) f32

    # reduce_dim_linear: pooler_out @ Wr + br -> (bm, d_model)
    out = (
        jnp.dot(pooler_out.astype(jnp.bfloat16), wr_ref[...],
                preferred_element_type=jnp.float32)
        + br_ref[...]
    )
    out_ref[...] = out.astype(out_ref.dtype)


def news_encoder_forward(emb, mask, w_pool, b_pool, w_red, b_red, *, bm=128):
    """emb: (B, S, 768) f32, mask: (B, S) f32, w_pool: (768,768) bf16,
    b_pool: (1,768) f32, w_red: (768, d_model) bf16, b_red: (1, d_model) f32."""
    B, S, H = emb.shape
    D = w_red.shape[1]

    # Sublane-aligned batch tile; pad batch so every tile is full.
    bm = _round_up(min(bm, max(B, 1)), 8)
    Bp = _round_up(B, bm)
    if Bp != B:
        emb = jnp.pad(emb, ((0, Bp - B), (0, 0), (0, 0)))
        mask = jnp.pad(mask, ((0, Bp - B), (0, 0)))   # zero mask -> zero output rows

    grid = (Bp // bm,)

    out = pl.pallas_call(
        news_encoder_kernel,
        out_shape=jax.ShapeDtypeStruct((Bp, D), jnp.float32),
        grid_spec=pltpu.PrefetchScalarGridSpec(
            num_scalar_prefetch=0,
            grid=grid,
            in_specs=[
                pl.BlockSpec((bm, S, H), lambda i: (i, 0, 0)),   # emb tile per step
                pl.BlockSpec((bm, S), lambda i: (i, 0)),         # mask tile per step
                pl.BlockSpec((H, H), lambda i: (0, 0)),          # pooler W, resident
                pl.BlockSpec((1, H), lambda i: (0, 0)),          # pooler b, resident
                pl.BlockSpec((H, D), lambda i: (0, 0)),          # reduce_dim W, resident
                pl.BlockSpec((1, D), lambda i: (0, 0)),          # reduce_dim b, resident
            ],
            out_specs=pl.BlockSpec((bm, D), lambda i: (i, 0)),
        ),
        compiler_params=pltpu.CompilerParams(
            # independent batch tiles -> shard across both TCs on v7x
            dimension_semantics=("parallel",),
            # fits v7x's 64 MiB VMEM with headroom; well under v5e/v6e 128 MiB
            vmem_limit_bytes=48 * 1024 * 1024,
        ),
    )(emb, mask, w_pool, b_pool, w_red, b_red)
    return out[:B]


if __name__ == "__main__":
    key = jax.random.PRNGKey(0)
    k_emb, k_ids, k_wp, k_bp, k_wr, k_br, k_len = jax.random.split(key, 7)

    # Deterministic "parameters" (synthetic, not a checkpoint load).
    emb_table = jax.random.normal(k_emb, (VOCAB, HIDDEN), dtype=jnp.float32) * 0.02
    w_pool = (jax.random.normal(k_wp, (HIDDEN, HIDDEN), dtype=jnp.float32) * 0.02
              ).astype(jnp.bfloat16)
    b_pool = jax.random.normal(k_bp, (1, HIDDEN), dtype=jnp.float32) * 0.01
    w_red = (jax.random.normal(k_wr, (HIDDEN, D_MODEL), dtype=jnp.float32) * 0.03
             ).astype(jnp.bfloat16)
    b_red = jax.random.normal(k_br, (1, D_MODEL), dtype=jnp.float32) * 0.01

    # Inputs: token ids and variable-length attention mask.
    inputs_ids = jax.random.randint(k_ids, (BATCH, SEQ), 0, VOCAB)
    lengths = jax.random.randint(k_len, (BATCH, 1), SEQ // 2, SEQ + 1)
    mask = (jnp.arange(SEQ)[None, :] < lengths).astype(jnp.float32)

    # Embedding gather stays in XLA glue for this small demo.
    # TODO(synk): for production S/B, fuse the gather into the Pallas pipeline
    # via scalar-prefetched token ids (PrefetchScalarGridSpec + pl.Element row
    # gather) instead of materializing (B, S, 768) f32 in HBM.
    emb = emb_table[inputs_ids]                                  # (B, S, H)

    out = news_encoder_forward(emb, mask, w_pool, b_pool, w_red, b_red, bm=BM)
    jax.block_until_ready(out)

    # Pure-JAX reference mirroring kernel numerics (bf16 MXU operands, f32 acc).
    m3 = mask[:, :, None]
    pooled_ref = jnp.sum(emb * m3, axis=1) / jnp.maximum(
        jnp.sum(mask, axis=1, keepdims=True), 1.0
    )
    pooler_ref = jnp.tanh(
        jnp.dot(pooled_ref.astype(jnp.bfloat16), w_pool,
                preferred_element_type=jnp.float32) + b_pool
    )
    ref = jnp.dot(pooler_ref.astype(jnp.bfloat16), w_red,
                  preferred_element_type=jnp.float32) + b_red

    assert out.shape == (BATCH, D_MODEL)
    assert jnp.allclose(out, ref, atol=2e-3, rtol=2e-2), float(
        jnp.max(jnp.abs(out - ref))
    )

    print("KERNEL_OK")
</pallas_src>

<mosaic_0001>
module attributes {stable_mosaic.version = 11 : i64} {
  func.func @news_encoder_kernel(%arg0: i32, %arg1: memref<8x32x768xf32, #tpu.memory_space<vmem>>, %arg2: memref<8x32xf32, #tpu.memory_space<vmem>>, %arg3: memref<768x768xbf16, #tpu.memory_space<vmem>>, %arg4: memref<1x768xf32, #tpu.memory_space<vmem>>, %arg5: memref<768x128xbf16, #tpu.memory_space<vmem>>, %arg6: memref<1x128xf32, #tpu.memory_space<vmem>>, %arg7: memref<8x128xf32, #tpu.memory_space<vmem>>) attributes {dimension_semantics = [#tpu.dimension_semantics<parallel>], iteration_bounds = array<i64: 2>, scalar_prefetch = 0 : i64, scratch_operands = 0 : i64, tpu.core_type = #tpu.core_type<tc>, window_params = [{transform_indices = @transform_0, window_bounds = array<i64: 8, 32, 768>}, {transform_indices = @transform_1, window_bounds = array<i64: 8, 32>}, {pipeline_mode = #tpu.pipeline_mode<synchronous>, transform_indices = @transform_2, window_bounds = array<i64: 768, 768>}, {pipeline_mode = #tpu.pipeline_mode<synchronous>, transform_indices = @transform_3, window_bounds = array<i64: 1, 768>}, {pipeline_mode = #tpu.pipeline_mode<synchronous>, transform_indices = @transform_4, window_bounds = array<i64: 768, 128>}, {pipeline_mode = #tpu.pipeline_mode<synchronous>, transform_indices = @transform_5, window_bounds = array<i64: 1, 128>}, {transform_indices = @transform_6, window_bounds = array<i64: 8, 128>}]} {
    %c0 = arith.constant 0 : index
    %c0_0 = arith.constant 0 : index
    %c0_1 = arith.constant 0 : index
    %0 = vector.load %arg1[%c0, %c0_0, %c0_1] : memref<8x32x768xf32, #tpu.memory_space<vmem>>, vector<8x32x768xf32>
    %c0_2 = arith.constant 0 : index
    %c0_3 = arith.constant 0 : index
    %1 = vector.load %arg2[%c0_2, %c0_3] : memref<8x32xf32, #tpu.memory_space<vmem>>, vector<8x32xf32>
    %2 = vector.shape_cast %1 : vector<8x32xf32> to vector<8x32x1xf32>
    %3 = vector.broadcast %2 : vector<8x32x1xf32> to vector<8x32x768xf32>
    %4 = arith.mulf %0, %3 : vector<8x32x768xf32>
    %cst = arith.constant dense<0.000000e+00> : vector<8x768xf32>
    %5 = vector.multi_reduction <add>, %4, %cst [1] : vector<8x32x768xf32> to vector<8x768xf32>
    %cst_4 = arith.constant dense<0.000000e+00> : vector<8xf32>
    %6 = vector.multi_reduction <add>, %1, %cst_4 [1] : vector<8x32xf32> to vector<8xf32>
    %7 = vector.shape_cast %6 : vector<8xf32> to vector<8x1xf32>
    %cst_5 = arith.constant 1.000000e+00 : f32
    %8 = vector.broadcast %cst_5 : f32 to vector<8x1xf32>
    %9 = arith.maximumf %7, %8 : vector<8x1xf32>
    %10 = tpu.reciprocal %9 {approx = true} : vector<8x1xf32> -> vector<8x1xf32>
    %11 = vector.broadcast %10 : vector<8x1xf32> to vector<8x768xf32>
    %12 = arith.mulf %5, %11 : vector<8x768xf32>
    %13 = arith.truncf %12 : vector<8x768xf32> to vector<8x768xbf16>
    %c0_6 = arith.constant 0 : index
    %c0_7 = arith.constant 0 : index
    %14 = vector.load %arg3[%c0_6, %c0_7] : memref<768x768xbf16, #tpu.memory_space<vmem>>, vector<768x768xbf16>
    %cst_8 = arith.constant dense<0.000000e+00> : vector<8x768xf32>
    %15 = tpu.matmul %13, %14, %cst_8 {dimension_numbers = #tpu.dot_dimension_numbers<[1], [0], [0], [1], [0, 0, 1, 1], [], []>} : vector<8x768xbf16>, vector<768x768xbf16>, vector<8x768xf32> -> vector<8x768xf32>
    %c0_9 = arith.constant 0 : index
    %c0_10 = arith.constant 0 : index
    %16 = vector.load %arg4[%c0_9, %c0_10] : memref<1x768xf32, #tpu.memory_space<vmem>>, vector<1x768xf32>
    %17 = vector.broadcast %16 : vector<1x768xf32> to vector<8x768xf32>
    %18 = arith.addf %15, %17 : vector<8x768xf32>
    %19 = math.tanh %18 : vector<8x768xf32>
    %20 = arith.truncf %19 : vector<8x768xf32> to vector<8x768xbf16>
    %c0_11 = arith.constant 0 : index
    %c0_12 = arith.constant 0 : index
    %21 = vector.load %arg5[%c0_11, %c0_12] : memref<768x128xbf16, #tpu.memory_space<vmem>>, vector<768x128xbf16>
    %cst_13 = arith.constant dense<0.000000e+00> : vector<8x128xf32>
    %22 = tpu.matmul %20, %21, %cst_13 {dimension_numbers = #tpu.dot_dimension_numbers<[1], [0], [0], [1], [0, 0, 1, 1], [], []>} : vector<8x768xbf16>, vector<768x128xbf16>, vector<8x128xf32> -> vector<8x128xf32>
    %c0_14 = arith.constant 0 : index
    %c0_15 = arith.constant 0 : index
    %23 = vector.load %arg6[%c0_14, %c0_15] : memref<1x128xf32, #tpu.memory_space<vmem>>, vector<1x128xf32>
    %24 = vector.broadcast %23 : vector<1x128xf32> to vector<8x128xf32>
    %25 = arith.addf %22, %24 : vector<8x128xf32>
    %c0_16 = arith.constant 0 : index
    %c0_17 = arith.constant 0 : index
    %26 = vector.load %arg7[%c0_16, %c0_17] : memref<8x128xf32, #tpu.memory_space<vmem>>, vector<8x128xf32>
    tpu.vector_store %arg7[%c0_16, %c0_17], %25 {strides = array<i32>} : memref<8x128xf32, #tpu.memory_space<vmem>>, vector<8x128xf32>,
    return
  }
  func.func @transform_0(%arg0: i32) -> (i32, i32, i32) {
    %c0_i32 = arith.constant 0 : i32
    %c0_i32_0 = arith.constant 0 : i32
    %c0_i32_1 = arith.constant 0 : i32
    return %arg0, %c0_i32, %c0_i32_0 : i32, i32, i32
  }
  func.func @transform_1(%arg0: i32) -> (i32, i32) {
    %c0_i32 = arith.constant 0 : i32
    %c0_i32_0 = arith.constant 0 : i32
    return %arg0, %c0_i32 : i32, i32
  }
  func.func @transform_2(%arg0: i32) -> (i32, i32) {
    %c0_i32 = arith.constant 0 : i32
    %c0_i32_0 = arith.constant 0 : i32
    %c0_i32_1 = arith.constant 0 : i32
    return %c0_i32, %c0_i32_0 : i32, i32
  }
  func.func @transform_3(%arg0: i32) -> (i32, i32) {
    %c0_i32 = arith.constant 0 : i32
    %c0_i32_0 = arith.constant 0 : i32
    %c0_i32_1 = arith.constant 0 : i32
    return %c0_i32, %c0_i32_0 : i32, i32
  }
  func.func @transform_4(%arg0: i32) -> (i32, i32) {
    %c0_i32 = arith.constant 0 : i32
    %c0_i32_0 = arith.constant 0 : i32
    %c0_i32_1 = arith.constant 0 : i32
    return %c0_i32, %c0_i32_0 : i32, i32
  }
  func.func @transform_5(%arg0: i32) -> (i32, i32) {
    %c0_i32 = arith.constant 0 : i32
    %c0_i32_0 = arith.constant 0 : i32
    %c0_i32_1 = arith.constant 0 : i32
    return %c0_i32, %c0_i32_0 : i32, i32
  }
  func.func @transform_6(%arg0: i32) -> (i32, i32) {
    %c0_i32 = arith.constant 0 : i32
    %c0_i32_0 = arith.constant 0 : i32
    return %arg0, %c0_i32 : i32, i32
  }
}

</mosaic_0001>

<llo_original>
// kernel: tpu_custom_call.1
$region0: #{tpu_custom_call.1}
  #allocation0 [shape = 'u32[]', space=smem, size = 0x4, offset = 0x4, fixed_abs, tag = 'smem constant byte address 0x4 - core index']
  #allocation1 [shape = 'u32[144,128]{1,0:T(1,128)}', space=vmem, size = 0x12000, scoped, tag = 'internal scratch']
  %s0 = inlined_call_operand.hbm [shape: f32[16,32,768], index: 0, kind: input, shape index: {}]
  %s1 = inlined_call_operand.hbm [shape: f32[16,32], index: 1, kind: input, shape index: {}]
  %s2 = inlined_call_operand.hbm [shape: bf16[768,768], index: 2, kind: input, shape index: {}]
  %s3 = inlined_call_operand.hbm [shape: f32[1,768], index: 3, kind: input, shape index: {}]
  %s4 = inlined_call_operand.hbm [shape: bf16[768,128], index: 4, kind: input, shape index: {}]
  %s5 = inlined_call_operand.hbm [shape: f32[1,128], index: 5, kind: input, shape index: {}]
  %s6 = inlined_call_operand.hbm [shape: f32[16,128], index: 6, kind: output, shape index: {}]
  %s7 = sld [smem:[#allocation0]]
  $region81: #{tpu_custom_call.1} parent=0
    _
  %s9 = ssub.s32 1, %s7
  %s10 = scalar_select 0, %s9, %s7
  $region1: #{tpu_custom_call.1} parent=0
    #allocation2 [shape = 'u8[1572864]{0}', space=vmem, size = 0x180000, scoped, tag = 'input window, operand 0']
    #allocation3 [shape = 's32[2]{0}', space=sflag, size = 0x8, scoped, tag = 'scoped memory for tpu_custom_call.1']
    #allocation4 [shape = 's32[2]{0}', space=sflag, size = 0x8, scoped, tag = 'scoped memory for tpu_custom_call.1']
    #allocation5 [shape = 'u8[8192]{0}', space=vmem, size = 0x2000, scoped, tag = 'input window, operand 1']
    #allocation6 [shape = 's32[2]{0}', space=sflag, size = 0x8, scoped, tag = 'scoped memory for tpu_custom_call.1']
    #allocation7 [shape = 'u8[1179648]{0}', space=vmem, size = 0x120000, scoped, tag = 'input window, operand 2, single buffered']
    #allocation8 [shape = 'u8[3072]{0}', space=vmem, size = 0xc00, scoped, tag = 'input window, operand 3, single buffered']
    #allocation9 [shape = 's32[1]{0}', space=sflag, size = 0x4, scoped, tag = 'scoped memory for tpu_custom_call.1']
    #allocation10 [shape = 'u8[196608]{0}', space=vmem, size = 0x30000, scoped, tag = 'input window, operand 4, single buffered']
    #allocation11 [shape = 'u8[512]{0}', space=vmem, size = 0x400, scoped, tag = 'input window, operand 5, single buffered']
    #allocation12 [shape = 's32[1]{0}', space=sflag, size = 0x4, scoped, tag = 'scoped memory for tpu_custom_call.1']
    #allocation13 [shape = 'u8[8192]{0}', space=vmem, size = 0x2000, scoped, tag = 'output window, operand 0']
    %11 = vsyncpa [#allocation3], 0
    %s12 = scalar_lea.sflag [#allocation3], 1
    %13 = vsyncpa %s12, 0
    %14 = vsyncpa [#allocation6], 0
    %s15 = scalar_lea.sflag [#allocation6], 1
    %16 = vsyncpa %s15, 0
    %17 = vsyncpa [#allocation9], 0
    %18 = vsyncpa [#allocation12], 0
    %19 = vsyncpa [#allocation4], 0
    %s20 = scalar_lea.sflag [#allocation4], 1
    %21 = vsyncpa %s20, 0
    loop: start=0, step=1, limit=4
    $region2: #{tpu_custom_call.1} parent=1 // loop_pre_header
      _
    $region3: #{tpu_custom_call.1} parent=1 // loop_header
      %s23 = sphi 0, %s27
      %p24 = scmp.ge.s32.totalorder %s23, 4
      %s33 = sphi 0, %s35
      %s36 = sphi 0, %s33
      %s37 = sphi 0, %s36
      %s53 = sphi 0, %s37
      %s59 = sphi 0, %s61
      %s62 = sphi 0, %s59
      %s63 = sphi 0, %s62
      %s79 = sphi 0, %s63
      %s83 = sphi 0, %s83
      %s85 = sphi 0, %s83
      %s86 = sphi 0, %s85
      %s100 = sphi 0, %s86
      %s104 = sphi 0, %s104
      %s106 = sphi 0, %s104
      %s107 = sphi 0, %s106
      %s121 = sphi 0, %s107
      %s125 = sphi 0, %s125
      %s127 = sphi 0, %s125
      %s128 = sphi 0, %s127
      %s142 = sphi 0, %s128
      %s146 = sphi 0, %s146
      %s148 = sphi 0, %s146
      %s149 = sphi 0, %s148
      %s163 = sphi 0, %s149
      %s169 = sphi 0, %s171
      %s172 = sphi 0, %s169
      %s173 = sphi 0, %s172
      %s189 = sphi 0, %s173
    $region4: #{tpu_custom_call.1} parent=1 // loop_header_branch
      %26 = sbr.rel (%p24) target = $region8
    $region5: #{tpu_custom_call.1} parent=1 // loop_body
      %s28 = ssub.s32 %s23, 1
      %s29 = ssub.s32 %s23, 2
      %s30 = sadd.s32 %s23, 1
      %s31 = ssub.s32 %s23, %s30
      %p32 = scmp.eq.s32.totalorder %s31, 0
      %s34 = sadd.s32 %s33, 1
      %s35 = scalar_select %p32, %s33, %s34
      %p38 = pneg %p32
      %p39 = scmp.eq.s32.totalorder %s23, 1
      %p40 = por %p38, %p39
      %p41 = scmp.ne.s32.totalorder %s33, %s36
      %p42 = scmp.eq.s32.totalorder %s23, 0
      %p43 = por %p41, %p42
      %p44 = scmp.ne.s32.totalorder %s33, %s36
      %p45 = scmp.eq.s32.totalorder %s28, 1
      %p46 = por %p44, %p45
      %p47 = scmp.ne.s32.totalorder %s36, %s37
      %p48 = scmp.eq.s32.totalorder %s28, 0
      %p49 = por %p47, %p48
      %p50 = scmp.ne.s32.totalorder %s36, %s37
      %p51 = scmp.eq.s32.totalorder %s29, 1
      %p52 = por %p50, %p51
      %p54 = scmp.ne.s32.totalorder %s37, %s53
      %p55 = scmp.eq.s32.totalorder %s29, 0
      %p56 = por %p54, %p55
      %s57 = ssub.s32 %s23, %s30
      %p58 = scmp.eq.s32.totalorder %s57, 0
      %s60 = sadd.s32 %s59, 1
      %s61 = scalar_select %p58, %s59, %s60
      %p64 = pneg %p58
      %p65 = scmp.eq.s32.totalorder %s23, 1
      %p66 = por %p64, %p65
      %p67 = scmp.ne.s32.totalorder %s59, %s62
      %p68 = scmp.eq.s32.totalorder %s23, 0
      %p69 = por %p67, %p68
      %p70 = scmp.ne.s32.totalorder %s59, %s62
      %p71 = scmp.eq.s32.totalorder %s28, 1
      %p72 = por %p70, %p71
      %p73 = scmp.ne.s32.totalorder %s62, %s63
      %p74 = scmp.eq.s32.totalorder %s28, 0
      %p75 = por %p73, %p74
      %p76 = scmp.ne.s32.totalorder %s62, %s63
      %p77 = scmp.eq.s32.totalorder %s29, 1
      %p78 = por %p76, %p77
      %p80 = scmp.ne.s32.totalorder %s63, %s79
      %p81 = scmp.eq.s32.totalorder %s29, 0
      %p82 = por %p80, %p81
      %s84 = sadd.s32 %s83, 1
      %p87 = scmp.eq.s32.totalorder %s23, 1
      %p88 = scmp.ne.s32.totalorder %s83, %s85
      %p89 = scmp.eq.s32.totalorder %s23, 0
      %p90 = por %p88, %p89
      %p91 = scmp.ne.s32.totalorder %s83, %s85
      %p92 = scmp.eq.s32.totalorder %s28, 1
      %p93 = por %p91, %p92
      %p94 = scmp.ne.s32.totalorder %s85, %s86
      %p95 = scmp.eq.s32.totalorder %s28, 0
      %p96 = por %p94, %p95
      %p97 = scmp.ne.s32.totalorder %s85, %s86
      %p98 = scmp.eq.s32.totalorder %s29, 1
      %p99 = por %p97, %p98
      %p101 = scmp.ne.s32.totalorder %s86, %s100
      %p102 = scmp.eq.s32.totalorder %s29, 0
      %p103 = por %p101, %p102
      %s105 = sadd.s32 %s104, 1
      %p108 = scmp.eq.s32.totalorder %s23, 1
      %p109 = scmp.ne.s32.totalorder %s104, %s106
      %p110 = scmp.eq.s32.totalorder %s23, 0
      %p111 = por %p109, %p110
      %p112 = scmp.ne.s32.totalorder %s104, %s106
      %p113 = scmp.eq.s32.totalorder %s28, 1
      %p114 = por %p112, %p113
      %p115 = scmp.ne.s32.totalorder %s106, %s107
      %p116 = scmp.eq.s32.totalorder %s28, 0
      %p117 = por %p115, %p116
      %p118 = scmp.ne.s32.totalorder %s106, %s107
      %p119 = scmp.eq.s32.totalorder %s29, 1
      %p120 = por %p118, %p119
      %p122 = scmp.ne.s32.totalorder %s107, %s121
      %p123 = scmp.eq.s32.totalorder %s29, 0
      %p124 = por %p122, %p123
      %s126 = sadd.s32 %s125, 1
      %p129 = scmp.eq.s32.totalorder %s23, 1
      %p130 = scmp.ne.s32.totalorder %s125, %s127
      %p131 = scmp.eq.s32.totalorder %s23, 0
      %p132 = por %p130, %p131
      %p133 = scmp.ne.s32.totalorder %s125, %s127
      %p134 = scmp.eq.s32.totalorder %s28, 1
      %p135 = por %p133, %p134
      %p136 = scmp.ne.s32.totalorder %s127, %s128
      %p137 = scmp.eq.s32.totalorder %s28, 0
      %p138 = por %p136, %p137
      %p139 = scmp.ne.s32.totalorder %s127, %s128
      %p140 = scmp.eq.s32.totalorder %s29, 1
      %p141 = por %p139, %p140
      %p143 = scmp.ne.s32.totalorder %s128, %s142
      %p144 = scmp.eq.s32.totalorder %s29, 0
      %p145 = por %p143, %p144
      %s147 = sadd.s32 %s146, 1
      %p150 = scmp.eq.s32.totalorder %s23, 1
      %p151 = scmp.ne.s32.totalorder %s146, %s148
      %p152 = scmp.eq.s32.totalorder %s23, 0
      %p153 = por %p151, %p152
      %p154 = scmp.ne.s32.totalorder %s146, %s148
      %p155 = scmp.eq.s32.totalorder %s28, 1
      %p156 = por %p154, %p155
      %p157 = scmp.ne.s32.totalorder %s148, %s149
      %p158 = scmp.eq.s32.totalorder %s28, 0
      %p159 = por %p157, %p158
      %p160 = scmp.ne.s32.totalorder %s148, %s149
      %p161 = scmp.eq.s32.totalorder %s29, 1
      %p162 = por %p160, %p161
      %p164 = scmp.ne.s32.totalorder %s149, %s163
      %p165 = scmp.eq.s32.totalorder %s29, 0
      %p166 = por %p164, %p165
      %s167 = ssub.s32 %s23, %s30
      %p168 = scmp.eq.s32.totalorder %s167, 0
      %s170 = sadd.s32 %s169, 1
      %s171 = scalar_select %p168, %s169, %s170
      %p174 = pneg %p168
      %p175 = scmp.eq.s32.totalorder %s23, 1
      %p176 = por %p174, %p175
      %p177 = scmp.ne.s32.totalorder %s169, %s172
      %p178 = scmp.eq.s32.totalorder %s23, 0
      %p179 = por %p177, %p178
      %p180 = scmp.ne.s32.totalorder %s169, %s172
      %p181 = scmp.eq.s32.totalorder %s28, 1
      %p182 = por %p180, %p181
      %p183 = scmp.ne.s32.totalorder %s172, %s173
      %p184 = scmp.eq.s32.totalorder %s28, 0
      %p185 = por %p183, %p184
      %p186 = scmp.ne.s32.totalorder %s172, %s173
      %p187 = scmp.eq.s32.totalorder %s29, 1
      %p188 = por %p186, %p187
      %p190 = scmp.ne.s32.totalorder %s173, %s189
      %p191 = scmp.eq.s32.totalorder %s29, 0
      %p192 = por %p190, %p191
      %p193 = scmp.le.s32.totalorder 1, %s23
      %p194 = scmp.lt.s32.totalorder %s23, 3
      %p195 = pnand %p193, %p194
      %p196 = pneg %p195
      // Predicated region
      $region9: #{tpu_custom_call.1} parent=5 // pred_check
        _
      $region10: #{tpu_custom_call.1} parent=5 // pred_check_branch
        %198 = sbr.rel (%p195) target = $region12
      $region11: #{tpu_custom_call.1} parent=5 // pred_region
        %s199 = ssub.s32 %s23, 1
        // Predicated region
        $region13: #{tpu_custom_call.1} parent=11 // pred_check
          %p200 = pneg %p96
        $region14: #{tpu_custom_call.1} parent=11 // pred_check_branch
          %202 = sbr.rel (%p200) target = $region16
        $region15: #{tpu_custom_call.1} parent=11 // pred_region
          %s204 = ssub.s32 36864, 36864
          %205 = vsyncadd [#allocation6], %s204
          %s206 = sshll.u32 [#allocation7], 4
          %s207 = int_to_ptr.vmem [resolvable:$true] %s206
          %212 = dma.hbm_to_vmem [thread:$0]  %s2, 36864, %s207, [#allocation6], 384, 384, 24
        $region16: #{tpu_custom_call.1} parent=11 // pred_fallthru
          _
        // Predicated region
        $region17: #{tpu_custom_call.1} parent=11 // pred_check
          %p213 = pneg %p117
        $region18: #{tpu_custom_call.1} parent=11 // pred_check_branch
          %215 = sbr.rel (%p213) target = $region20
        $region19: #{tpu_custom_call.1} parent=11 // pred_region
          %s217 = ssub.s32 96, 96
          %218 = vsyncadd [#allocation9], %s217
          %s220 = sshll.u32 [#allocation8], 4
          %s221 = int_to_ptr.vmem [resolvable:$true] %s220
          %223 = dma.hbm_to_vmem [thread:$0]  %s3, 96, %s221, [#allocation9]
        $region20: #{tpu_custom_call.1} parent=11 // pred_fallthru
          _
        // Predicated region
        $region21: #{tpu_custom_call.1} parent=11 // pred_check
          %p224 = pneg %p138
        $region22: #{tpu_custom_call.1} parent=11 // pred_check_branch
          %226 = sbr.rel (%p224) target = $region24
        $region23: #{tpu_custom_call.1} parent=11 // pred_region
          %s228 = ssub.s32 6144, 6144
          %229 = vsyncadd [#allocation9], %s228
          %s230 = sshll.u32 [#allocation10], 4
          %s231 = int_to_ptr.vmem [resolvable:$true] %s230
          %236 = dma.hbm_to_vmem [thread:$0]  %s4, 6144, %s231, [#allocation9], 64, 64, 4
        $region24: #{tpu_custom_call.1} parent=11 // pred_fallthru
          _
        // Predicated region
        $region25: #{tpu_custom_call.1} parent=11 // pred_check
          %p237 = pneg %p159
        $region26: #{tpu_custom_call.1} parent=11 // pred_check_branch
          %239 = sbr.rel (%p237) target = $region28
        $region27: #{tpu_custom_call.1} parent=11 // pred_region
          %s241 = ssub.s32 16, 16
          %242 = vsyncadd [#allocation12], %s241
          %s244 = sshll.u32 [#allocation11], 4
          %s245 = int_to_ptr.vmem [resolvable:$true] %s244
          %247 = dma.hbm_to_vmem [thread:$0]  %s5, 16, %s245, [#allocation12]
        $region28: #{tpu_custom_call.1} parent=11 // pred_fallthru
          _
      $region12: #{tpu_custom_call.1} parent=5 // pred_fallthru
        _
      %p248 = scmp.lt.s32.totalorder %s23, 2
      // Predicated region
      $region29: #{tpu_custom_call.1} parent=5 // pred_check
        %p249 = pneg %p248
      $region30: #{tpu_custom_call.1} parent=5 // pred_check_branch
        %251 = sbr.rel (%p249) target = $region32
      $region31: #{tpu_custom_call.1} parent=5 // pred_region
        // Predicated region
        $region33: #{tpu_custom_call.1} parent=31 // pred_check
          %p252 = pneg %p43
        $region34: #{tpu_custom_call.1} parent=31 // pred_check_branch
          %254 = sbr.rel (%p252) target = $region36
        $region35: #{tpu_custom_call.1} parent=31 // pred_region
          %s255 = sand.u32 %s33, 1
          %s256 = scalar_lea.sflag [#allocation3], %s255
          %s257 = sand.u32 %s33, 1
          %s258 = smul.addr %s257, 1536
          %s259 = scalar_lea.vmem [#allocation2], %s258
          %s260 = smul.u32 8, %s23
          %s262 = ssub.s32 24576, 24576
          %263 = vsyncadd %s256, %s262
          %s264 = smul.addr %s260, 24
          %s265 = smul.addr %s264, 128
          %s266 = scalar_lea.hbm %s0, %s265
          %s267 = sshll.u32 %s259, 4
          %s268 = int_to_ptr.vmem [resolvable:$true] %s267
          %273 = dma.hbm_to_vmem [thread:$0]  %s266, 24576, %s268, %s256, 768, 768, 48
        $region36: #{tpu_custom_call.1} parent=31 // pred_fallthru
          _
        // Predicated region
        $region37: #{tpu_custom_call.1} parent=31 // pred_check
          %p274 = pneg %p69
        $region38: #{tpu_custom_call.1} parent=31 // pred_check_branch
          %276 = sbr.rel (%p274) target = $region40
        $region39: #{tpu_custom_call.1} parent=31 // pred_region
          %s277 = sand.u32 %s23, 1
          %s278 = scalar_lea.sflag [#allocation6], %s277
          %s279 = sand.u32 %s59, 1
          %s280 = smul.addr %s279, 8
          %s281 = scalar_lea.vmem [#allocation5], %s280
          %s283 = ssub.s32 128, 128
          %284 = vsyncadd %s278, %s283
          %s285 = smul.addr %s23, 128
          %s286 = scalar_lea.hbm %s1, %s285
          %s288 = sshll.u32 %s281, 4
          %s289 = int_to_ptr.vmem [resolvable:$true] %s288
          %291 = dma.hbm_to_vmem [thread:$0]  %s286, 128, %s289, %s278
        $region40: #{tpu_custom_call.1} parent=31 // pred_fallthru
          _
      $region32: #{tpu_custom_call.1} parent=5 // pred_fallthru
        _
      %p292 = scmp.le.s32.totalorder 1, %s23
      %p293 = scmp.lt.s32.totalorder %s23, 3
      %p294 = pnand %p292, %p293
      %p295 = pneg %p294
      // Predicated region
      $region41: #{tpu_custom_call.1} parent=5 // pred_check
        _
      $region42: #{tpu_custom_call.1} parent=5 // pred_check_branch
        %297 = sbr.rel (%p294) target = $region44
      $region43: #{tpu_custom_call.1} parent=5 // pred_region
        %s298 = ssub.s32 %s23, 1
        %s299 = sand.u32 %s36, 1
        %s300 = scalar_lea.sflag [#allocation3], %s299
        %s301 = sand.u32 %s36, 1
        %s302 = smul.addr %s301, 1536
        %s303 = scalar_lea.vmem [#allocation2], %s302
        // Predicated region
        $region45: #{tpu_custom_call.1} parent=43 // pred_check
          %p304 = pneg %p49
        $region46: #{tpu_custom_call.1} parent=43 // pred_check_branch
          %306 = sbr.rel (%p304) target = $region48
        $region47: #{tpu_custom_call.1} parent=43 // pred_region
          %307 = dma.done %s300, 24576
        $region48: #{tpu_custom_call.1} parent=43 // pred_fallthru
          _
        %s308 = sand.u32 %s28, 1
        %s309 = scalar_lea.sflag [#allocation6], %s308
        %s310 = sand.u32 %s62, 1
        %s311 = smul.addr %s310, 8
        %s312 = scalar_lea.vmem [#allocation5], %s311
        // Predicated region
        $region49: #{tpu_custom_call.1} parent=43 // pred_check
          %p313 = pneg %p75
        $region50: #{tpu_custom_call.1} parent=43 // pred_check_branch
          %315 = sbr.rel (%p313) target = $region52
        $region51: #{tpu_custom_call.1} parent=43 // pred_region
          %316 = dma.done %s309, 128
        $region52: #{tpu_custom_call.1} parent=43 // pred_fallthru
          _
        // Predicated region
        $region53: #{tpu_custom_call.1} parent=43 // pred_check
          %p317 = pneg %p96
        $region54: #{tpu_custom_call.1} parent=43 // pred_check_branch
          %319 = sbr.rel (%p317) target = $region56
        $region55: #{tpu_custom_call.1} parent=43 // pred_region
          %320 = dma.done [#allocation6], 36864
        $region56: #{tpu_custom_call.1} parent=43 // pred_fallthru
          _
        // Predicated region
        $region57: #{tpu_custom_call.1} parent=43 // pred_check
          %p321 = pneg %p117
        $region58: #{tpu_custom_call.1} parent=43 // pred_check_branch
          %323 = sbr.rel (%p321) target = $region60
        $region59: #{tpu_custom_call.1} parent=43 // pred_region
          %324 = dma.done [#allocation9], 96
        $region60: #{tpu_custom_call.1} parent=43 // pred_fallthru
          _
        // Predicated region
        $region61: #{tpu_custom_call.1} parent=43 // pred_check
          %p325 = pneg %p138
        $region62: #{tpu_custom_call.1} parent=43 // pred_check_branch
          %327 = sbr.rel (%p325) target = $region64
        $region63: #{tpu_custom_call.1} parent=43 // pred_region
          %328 = dma.done [#allocation9], 6144
        $region64: #{tpu_custom_call.1} parent=43 // pred_fallthru
          _
        // Predicated region
        $region65: #{tpu_custom_call.1} parent=43 // pred_check
          %p329 = pneg %p159
        $region66: #{tpu_custom_call.1} parent=43 // pred_check_branch
          %331 = sbr.rel (%p329) target = $region68
        $region67: #{tpu_custom_call.1} parent=43 // pred_region
          %332 = dma.done [#allocation12], 16
        $region68: #{tpu_custom_call.1} parent=43 // pred_fallthru
          _
        %s333 = sand.u32 %s36, 1
        %s334 = scalar_lea.sflag [#allocation3], %s333
        %s335 = sand.u32 %s36, 1
        %s336 = smul.addr %s335, 1536
        %s337 = scalar_lea.vmem [#allocation2], %s336
        %p338 = pneg %p49
        %p339 = pneg %p46
        %s340 = sand.u32 %s28, 1
        %s341 = scalar_lea.sflag [#allocation6], %s340
        %s342 = sand.u32 %s62, 1
        %s343 = smul.addr %s342, 8
        %s344 = scalar_lea.vmem [#allocation5], %s343
        %p345 = pneg %p75
        %p346 = pneg %p72
        %p347 = pneg %p96
        %p348 = pneg %p93
        %p349 = pneg %p117
        %p350 = pneg %p114
        %p351 = pneg %p138
        %p352 = pneg %p135
        %p353 = pneg %p159
        %p354 = pneg %p156
        %p355 = pneg %p185
        %p356 = pneg %p182
        %s357 = sand.u32 %s172, 1
        %s358 = scalar_lea.sflag [#allocation4], %s357
        %s359 = sand.u32 %s172, 1
        %s360 = smul.addr %s359, 8
        %s361 = scalar_lea.vmem [#allocation13], %s360
        %s362 = smul.u32 8, %s28
        %v364 = vld [vmem:[%s303] sm:$0xff]
        %v365 = vld [vmem:[%s303 + $0x8] sm:$0xff]
        %v366 = vld [vmem:[%s303 + $0x10] sm:$0xff]
        %v367 = vld [vmem:[%s303 + $0x18] sm:$0xff]
        %v368 = vld [vmem:[%s303 + $0x20] sm:$0xff]
        %v369 = vld [vmem:[%s303 + $0x28] sm:$0xff]
        %v370 = vld [vmem:[%s303 + $0x30] sm:$0xff]
        %v371 = vld [vmem:[%s303 + $0x38] sm:$0xff]
        %v372 = vld [vmem:[%s303 + $0x40] sm:$0xff]
        %v373 = vld [vmem:[%s303 + $0x48] sm:$0xff]
        %v374 = vld [vmem:[%s303 + $0x50] sm:$0xff]
        %v375 = vld [vmem:[%s303 + $0x58] sm:$0xff]
        %v376 = vld [vmem:[%s303 + $0x60] sm:$0xff]
        %v377 = vld [vmem:[%s303 + $0x68] sm:$0xff]
        %v378 = vld [vmem:[%s303 + $0x70] sm:$0xff]
        %v379 = vld [vmem:[%s303 + $0x78] sm:$0xff]
        %v380 = vld [vmem:[%s303 + $0x80] sm:$0xff]
        %v381 = vld [vmem:[%s303 + $0x88] sm:$0xff]
        %v382 = vld [vmem:[%s303 + $0x90] sm:$0xff]
        %v383 = vld [vmem:[%s303 + $0x98] sm:$0xff]
        %v384 = vld [vmem:[%s303 + $0xa0] sm:$0xff]
        %v385 = vld [vmem:[%s303 + $0xa8] sm:$0xff]
        %v386 = vld [vmem:[%s303 + $0xb0] sm:$0xff]
        %v387 = vld [vmem:[%s303 + $0xb8] sm:$0xff]
        %v388 = vld [vmem:[%s303 + $0xc0] sm:$0xff]
        %v389 = vld [vmem:[%s303 + $0xc8] sm:$0xff]
        %v390 = vld [vmem:[%s303 + $0xd0] sm:$0xff]
        %v391 = vld [vmem:[%s303 + $0xd8] sm:$0xff]
        %v392 = vld [vmem:[%s303 + $0xe0] sm:$0xff]
        %v393 = vld [vmem:[%s303 + $0xe8] sm:$0xff]
        %v394 = vld [vmem:[%s303 + $0xf0] sm:$0xff]
        %v395 = vld [vmem:[%s303 + $0xf8] sm:$0xff]
        %v396 = vld [vmem:[%s303 + $0x100] sm:$0xff]
        %v397 = vld [vmem:[%s303 + $0x108] sm:$0xff]
        %v398 = vld [vmem:[%s303 + $0x110] sm:$0xff]
        %v399 = vld [vmem:[%s303 + $0x118] sm:$0xff]
        %v400 = vld [vmem:[%s303 + $0x120] sm:$0xff]
        %v401 = vld [vmem:[%s303 + $0x128] sm:$0xff]
        %v402 = vld [vmem:[%s303 + $0x130] sm:$0xff]
        %v403 = vld [vmem:[%s303 + $0x138] sm:$0xff]
        %v404 = vld [vmem:[%s303 + $0x140] sm:$0xff]
        %v405 = vld [vmem:[%s303 + $0x148] sm:$0xff]
        %v406 = vld [vmem:[%s303 + $0x150] sm:$0xff]
        %v407 = vld [vmem:[%s303 + $0x158] sm:$0xff]
        %v408 = vld [vmem:[%s303 + $0x160] sm:$0xff]
        %v409 = vld [vmem:[%s303 + $0x168] sm:$0xff]
        %v410 = vld [vmem:[%s303 + $0x170] sm:$0xff]
        %v411 = vld [vmem:[%s303 + $0x178] sm:$0xff]
        %v412 = vld [vmem:[%s303 + $0x180] sm:$0xff]
        %v413 = vld [vmem:[%s303 + $0x188] sm:$0xff]
        %v414 = vld [vmem:[%s303 + $0x190] sm:$0xff]
        %v415 = vld [vmem:[%s303 + $0x198] sm:$0xff]
        %v416 = vld [vmem:[%s303 + $0x1a0] sm:$0xff]
        %v417 = vld [vmem:[%s303 + $0x1a8] sm:$0xff]
        %v418 = vld [vmem:[%s303 + $0x1b0] sm:$0xff]
        %v419 = vld [vmem:[%s303 + $0x1b8] sm:$0xff]
        %v420 = vld [vmem:[%s303 + $0x1c0] sm:$0xff]
        %v421 = vld [vmem:[%s303 + $0x1c8] sm:$0xff]
        %v422 = vld [vmem:[%s303 + $0x1d0] sm:$0xff]
        %v423 = vld [vmem:[%s303 + $0x1d8] sm:$0xff]
        %v424 = vld [vmem:[%s303 + $0x1e0] sm:$0xff]
        %v425 = vld [vmem:[%s303 + $0x1e8] sm:$0xff]
        %v426 = vld [vmem:[%s303 + $0x1f0] sm:$0xff]
        %v427 = vld [vmem:[%s303 + $0x1f8] sm:$0xff]
        %v428 = vld [vmem:[%s303 + $0x200] sm:$0xff]
        %v429 = vld [vmem:[%s303 + $0x208] sm:$0xff]
        %v430 = vld [vmem:[%s303 + $0x210] sm:$0xff]
        %v431 = vld [vmem:[%s303 + $0x218] sm:$0xff]
        %v432 = vld [vmem:[%s303 + $0x220] sm:$0xff]
        %v433 = vld [vmem:[%s303 + $0x228] sm:$0xff]
        %v434 = vld [vmem:[%s303 + $0x230] sm:$0xff]
        %v435 = vld [vmem:[%s303 + $0x238] sm:$0xff]
        %v436 = vld [vmem:[%s303 + $0x240] sm:$0xff]
        %v437 = vld [vmem:[%s303 + $0x248] sm:$0xff]
        %v438 = vld [vmem:[%s303 + $0x250] sm:$0xff]
        %v439 = vld [vmem:[%s303 + $0x258] sm:$0xff]
        %v440 = vld [vmem:[%s303 + $0x260] sm:$0xff]
        %v441 = vld [vmem:[%s303 + $0x268] sm:$0xff]
        %v442 = vld [vmem:[%s303 + $0x270] sm:$0xff]
        %v443 = vld [vmem:[%s303 + $0x278] sm:$0xff]
        %v444 = vld [vmem:[%s303 + $0x280] sm:$0xff]
        %v445 = vld [vmem:[%s303 + $0x288] sm:$0xff]
        %v446 = vld [vmem:[%s303 + $0x290] sm:$0xff]
        %v447 = vld [vmem:[%s303 + $0x298] sm:$0xff]
        %v448 = vld [vmem:[%s303 + $0x2a0] sm:$0xff]
        %v449 = vld [vmem:[%s303 + $0x2a8] sm:$0xff]
        %v450 = vld [vmem:[%s303 + $0x2b0] sm:$0xff]
        %v451 = vld [vmem:[%s303 + $0x2b8] sm:$0xff]
        %v452 = vld [vmem:[%s303 + $0x2c0] sm:$0xff]
        %v453 = vld [vmem:[%s303 + $0x2c8] sm:$0xff]
        %v454 = vld [vmem:[%s303 + $0x2d0] sm:$0xff]
        %v455 = vld [vmem:[%s303 + $0x2d8] sm:$0xff]
        %v456 = vld [vmem:[%s303 + $0x2e0] sm:$0xff]
        %v457 = vld [vmem:[%s303 + $0x2e8] sm:$0xff]
        %v458 = vld [vmem:[%s303 + $0x2f0] sm:$0xff]
        %v459 = vld [vmem:[%s303 + $0x2f8] sm:$0xff]
        %v460 = vld [vmem:[%s303 + $0x300] sm:$0xff]
        %v461 = vld [vmem:[%s303 + $0x308] sm:$0xff]
        %v462 = vld [vmem:[%s303 + $0x310] sm:$0xff]
        %v463 = vld [vmem:[%s303 + $0x318] sm:$0xff]
        %v464 = vld [vmem:[%s303 + $0x320] sm:$0xff]
        %v465 = vld [vmem:[%s303 + $0x328] sm:$0xff]
        %v466 = vld [vmem:[%s303 + $0x330] sm:$0xff]
        %v467 = vld [vmem:[%s303 + $0x338] sm:$0xff]
        %v468 = vld [vmem:[%s303 + $0x340] sm:$0xff]
        %v469 = vld [vmem:[%s303 + $0x348] sm:$0xff]
        %v470 = vld [vmem:[%s303 + $0x350] sm:$0xff]
        %v471 = vld [vmem:[%s303 + $0x358] sm:$0xff]
        %v472 = vld [vmem:[%s303 + $0x360] sm:$0xff]
        %v473 = vld [vmem:[%s303 + $0x368] sm:$0xff]
        %v474 = vld [vmem:[%s303 + $0x370] sm:$0xff]
        %v475 = vld [vmem:[%s303 + $0x378] sm:$0xff]
        %v476 = vld [vmem:[%s303 + $0x380] sm:$0xff]
        %v477 = vld [vmem:[%s303 + $0x388] sm:$0xff]
        %v478 = vld [vmem:[%s303 + $0x390] sm:$0xff]
        %v479 = vld [vmem:[%s303 + $0x398] sm:$0xff]
        %v480 = vld [vmem:[%s303 + $0x3a0] sm:$0xff]
        %v481 = vld [vmem:[%s303 + $0x3a8] sm:$0xff]
        %v482 = vld [vmem:[%s303 + $0x3b0] sm:$0xff]
        %v483 = vld [vmem:[%s303 + $0x3b8] sm:$0xff]
        %v484 = vld [vmem:[%s303 + $0x3c0] sm:$0xff]
        %v485 = vld [vmem:[%s303 + $0x3c8] sm:$0xff]
        %v486 = vld [vmem:[%s303 + $0x3d0] sm:$0xff]
        %v487 = vld [vmem:[%s303 + $0x3d8] sm:$0xff]
        %v488 = vld [vmem:[%s303 + $0x3e0] sm:$0xff]
        %v489 = vld [vmem:[%s303 + $0x3e8] sm:$0xff]
        %v490 = vld [vmem:[%s303 + $0x3f0] sm:$0xff]
        %v491 = vld [vmem:[%s303 + $0x3f8] sm:$0xff]
        %v492 = vld [vmem:[%s303 + $0x400] sm:$0xff]
        %v493 = vld [vmem:[%s303 + $0x408] sm:$0xff]
        %v494 = vld [vmem:[%s303 + $0x410] sm:$0xff]
        %v495 = vld [vmem:[%s303 + $0x418] sm:$0xff]
        %v496 = vld [vmem:[%s303 + $0x420] sm:$0xff]
        %v497 = vld [vmem:[%s303 + $0x428] sm:$0xff]
        %v498 = vld [vmem:[%s303 + $0x430] sm:$0xff]
        %v499 = vld [vmem:[%s303 + $0x438] sm:$0xff]
        %v500 = vld [vmem:[%s303 + $0x440] sm:$0xff]
        %v501 = vld [vmem:[%s303 + $0x448] sm:$0xff]
        %v502 = vld [vmem:[%s303 + $0x450] sm:$0xff]
        %v503 = vld [vmem:[%s303 + $0x458] sm:$0xff]
        %v504 = vld [vmem:[%s303 + $0x460] sm:$0xff]
        %v505 = vld [vmem:[%s303 + $0x468] sm:$0xff]
        %v506 = vld [vmem:[%s303 + $0x470] sm:$0xff]
        %v507 = vld [vmem:[%s303 + $0x478] sm:$0xff]
        %v508 = vld [vmem:[%s303 + $0x480] sm:$0xff]
        %v509 = vld [vmem:[%s303 + $0x488] sm:$0xff]
        %v510 = vld [vmem:[%s303 + $0x490] sm:$0xff]
        %v511 = vld [vmem:[%s303 + $0x498] sm:$0xff]
        %v512 = vld [vmem:[%s303 + $0x4a0] sm:$0xff]
        %v513 = vld [vmem:[%s303 + $0x4a8] sm:$0xff]
        %v514 = vld [vmem:[%s303 + $0x4b0] sm:$0xff]
        %v515 = vld [vmem:[%s303 + $0x4b8] sm:$0xff]
        %v516 = vld [vmem:[%s303 + $0x4c0] sm:$0xff]
        %v517 = vld [vmem:[%s303 + $0x4c8] sm:$0xff]
        %v518 = vld [vmem:[%s303 + $0x4d0] sm:$0xff]
        %v519 = vld [vmem:[%s303 + $0x4d8] sm:$0xff]
        %v520 = vld [vmem:[%s303 + $0x4e0] sm:$0xff]
        %v521 = vld [vmem:[%s303 + $0x4e8] sm:$0xff]
        %v522 = vld [vmem:[%s303 + $0x4f0] sm:$0xff]
        %v523 = vld [vmem:[%s303 + $0x4f8] sm:$0xff]
        %v524 = vld [vmem:[%s303 + $0x500] sm:$0xff]
        %v525 = vld [vmem:[%s303 + $0x508] sm:$0xff]
        %v526 = vld [vmem:[%s303 + $0x510] sm:$0xff]
        %v527 = vld [vmem:[%s303 + $0x518] sm:$0xff]
        %v528 = vld [vmem:[%s303 + $0x520] sm:$0xff]
        %v529 = vld [vmem:[%s303 + $0x528] sm:$0xff]
        %v530 = vld [vmem:[%s303 + $0x530] sm:$0xff]
        %v531 = vld [vmem:[%s303 + $0x538] sm:$0xff]
        %v532 = vld [vmem:[%s303 + $0x540] sm:$0xff]
        %v533 = vld [vmem:[%s303 + $0x548] sm:$0xff]
        %v534 = vld [vmem:[%s303 + $0x550] sm:$0xff]
        %v535 = vld [vmem:[%s303 + $0x558] sm:$0xff]
        %v536 = vld [vmem:[%s303 + $0x560] sm:$0xff]
        %v537 = vld [vmem:[%s303 + $0x568] sm:$0xff]
        %v538 = vld [vmem:[%s303 + $0x570] sm:$0xff]
        %v539 = vld [vmem:[%s303 + $0x578] sm:$0xff]
        %v540 = vld [vmem:[%s303 + $0x580] sm:$0xff]
        %v541 = vld [vmem:[%s303 + $0x588] sm:$0xff]
        %v542 = vld [vmem:[%s303 + $0x590] sm:$0xff]
        %v543 = vld [vmem:[%s303 + $0x598] sm:$0xff]
        %v544 = vld [vmem:[%s303 + $0x5a0] sm:$0xff]
        %v545 = vld [vmem:[%s303 + $0x5a8] sm:$0xff]
        %v546 = vld [vmem:[%s303 + $0x5b0] sm:$0xff]
        %v547 = vld [vmem:[%s303 + $0x5b8] sm:$0xff]
        %v548 = vld [vmem:[%s303 + $0x5c0] sm:$0xff]
        %v549 = vld [vmem:[%s303 + $0x5c8] sm:$0xff]
        %v550 = vld [vmem:[%s303 + $0x5d0] sm:$0xff]
        %v551 = vld [vmem:[%s303 + $0x5d8] sm:$0xff]
        %v552 = vld [vmem:[%s303 + $0x5e0] sm:$0xff]
        %v553 = vld [vmem:[%s303 + $0x5e8] sm:$0xff]
        %v554 = vld [vmem:[%s303 + $0x5f0] sm:$0xff]
        %v555 = vld [vmem:[%s303 + $0x5f8] sm:$0xff]
        %v556 = vld [vmem:[%s312] sm:$0xff]
        %v557 = vlaneseq
        %v558 = vshrl.u32 %v557, 7
        %v559 = vsub.s32 0, %v558
        %v560 = vrot.slane %v556, %v559
        %562 = vbcast.lane.b32.xlu0 %v560, 256
        %v563 = vpop.permute.xlu0 %562
        %s565 = sor.u32 256, 8
        %566 = vbcast.lane.b32.xlu0 %v560, %s565
        %v567 = vpop.permute.xlu0 %566
        %s569 = sor.u32 256, 16
        %570 = vbcast.lane.b32.xlu0 %v560, %s569
        %v571 = vpop.permute.xlu0 %570
        %s573 = sor.u32 256, 24
        %574 = vbcast.lane.b32.xlu0 %v560, %s573
        %v575 = vpop.permute.xlu0 %574
        %v576 = vlaneseq
        %v577 = vshrl.u32 %v576, 7
        %v578 = vsub.s32 1, %v577
        %v579 = vrot.slane %v556, %v578
        %581 = vbcast.lane.b32.xlu0 %v579, 256
        %v582 = vpop.permute.xlu0 %581
        %s584 = sor.u32 256, 8
        %585 = vbcast.lane.b32.xlu0 %v579, %s584
        %v586 = vpop.permute.xlu0 %585
        %s588 = sor.u32 256, 16
        %589 = vbcast.lane.b32.xlu0 %v579, %s588
        %v590 = vpop.permute.xlu0 %589
        %s592 = sor.u32 256, 24
        %593 = vbcast.lane.b32.xlu0 %v579, %s592
        %v594 = vpop.permute.xlu0 %593
        %v595 = vlaneseq
        %v596 = vshrl.u32 %v595, 7
        %v597 = vsub.s32 2, %v596
        %v598 = vrot.slane %v556, %v597
        %600 = vbcast.lane.b32.xlu0 %v598, 256
        %v601 = vpop.permute.xlu0 %600
        %s603 = sor.u32 256, 8
        %604 = vbcast.lane.b32.xlu0 %v598, %s603
        %v605 = vpop.permute.xlu0 %604
        %s607 = sor.u32 256, 16
        %608 = vbcast.lane.b32.xlu0 %v598, %s607
        %v609 = vpop.permute.xlu0 %608
        %s611 = sor.u32 256, 24
        %612 = vbcast.lane.b32.xlu0 %v598, %s611
        %v613 = vpop.permute.xlu0 %612
        %v614 = vlaneseq
        %v615 = vshrl.u32 %v614, 7
        %v616 = vsub.s32 3, %v615
        %v617 = vrot.slane %v556, %v616
        %619 = vbcast.lane.b32.xlu0 %v617, 256
        %v620 = vpop.permute.xlu0 %619
        %s622 = sor.u32 256, 8
        %623 = vbcast.lane.b32.xlu0 %v617, %s622
        %v624 = vpop.permute.xlu0 %623
        %s626 = sor.u32 256, 16
        %627 = vbcast.lane.b32.xlu0 %v617, %s626
        %v628 = vpop.permute.xlu0 %627
        %s630 = sor.u32 256, 24
        %631 = vbcast.lane.b32.xlu0 %v617, %s630
        %v632 = vpop.permute.xlu0 %631
        %v633 = vlaneseq
        %v634 = vshrl.u32 %v633, 7
        %v635 = vsub.s32 4, %v634
        %v636 = vrot.slane %v556, %v635
        %638 = vbcast.lane.b32.xlu0 %v636, 256
        %v639 = vpop.permute.xlu0 %638
        %s641 = sor.u32 256, 8
        %642 = vbcast.lane.b32.xlu0 %v636, %s641
        %v643 = vpop.permute.xlu0 %642
        %s645 = sor.u32 256, 16
        %646 = vbcast.lane.b32.xlu0 %v636, %s645
        %v647 = vpop.permute.xlu0 %646
        %s649 = sor.u32 256, 24
        %650 = vbcast.lane.b32.xlu0 %v636, %s649
        %v651 = vpop.permute.xlu0 %650
        %v652 = vlaneseq
        %v653 = vshrl.u32 %v652, 7
        %v654 = vsub.s32 5, %v653
        %v655 = vrot.slane %v556, %v654
        %657 = vbcast.lane.b32.xlu0 %v655, 256
        %v658 = vpop.permute.xlu0 %657
        %s660 = sor.u32 256, 8
        %661 = vbcast.lane.b32.xlu0 %v655, %s660
        %v662 = vpop.permute.xlu0 %661
        %s664 = sor.u32 256, 16
        %665 = vbcast.lane.b32.xlu0 %v655, %s664
        %v666 = vpop.permute.xlu0 %665
        %s668 = sor.u32 256, 24
        %669 = vbcast.lane.b32.xlu0 %v655, %s668
        %v670 = vpop.permute.xlu0 %669
        %v671 = vlaneseq
        %v672 = vshrl.u32 %v671, 7
        %v673 = vsub.s32 6, %v672
        %v674 = vrot.slane %v556, %v673
        %676 = vbcast.lane.b32.xlu0 %v674, 256
        %v677 = vpop.permute.xlu0 %676
        %s679 = sor.u32 256, 8
        %680 = vbcast.lane.b32.xlu0 %v674, %s679
        %v681 = vpop.permute.xlu0 %680
        %s683 = sor.u32 256, 16
        %684 = vbcast.lane.b32.xlu0 %v674, %s683
        %v685 = vpop.permute.xlu0 %684
        %s687 = sor.u32 256, 24
        %688 = vbcast.lane.b32.xlu0 %v674, %s687
        %v689 = vpop.permute.xlu0 %688
        %v690 = vlaneseq
        %v691 = vshrl.u32 %v690, 7
        %v692 = vsub.s32 7, %v691
        %v693 = vrot.slane %v556, %v692
        %695 = vbcast.lane.b32.xlu0 %v693, 256
        %v696 = vpop.permute.xlu0 %695
        %s698 = sor.u32 256, 8
        %699 = vbcast.lane.b32.xlu0 %v693, %s698
        %v700 = vpop.permute.xlu0 %699
        %s702 = sor.u32 256, 16
        %703 = vbcast.lane.b32.xlu0 %v693, %s702
        %v704 = vpop.permute.xlu0 %703
        %s706 = sor.u32 256, 24
        %707 = vbcast.lane.b32.xlu0 %v693, %s706
        %v708 = vpop.permute.xlu0 %707
        %v709 = vmul.f32 %v364, %v563
        %v710 = vmul.f32 %v365, %v563
        %v711 = vmul.f32 %v366, %v563
        %v712 = vmul.f32 %v367, %v563
        %v713 = vmul.f32 %v368, %v563
        %v714 = vmul.f32 %v369, %v563
        %v715 = vmul.f32 %v370, %v567
        %v716 = vmul.f32 %v371, %v567
        %v717 = vmul.f32 %v372, %v567
        %v718 = vmul.f32 %v373, %v567
        %v719 = vmul.f32 %v374, %v567
        %v720 = vmul.f32 %v375, %v567
        %v721 = vmul.f32 %v376, %v571
        %v722 = vmul.f32 %v377, %v571
        %v723 = vmul.f32 %v378, %v571
        %v724 = vmul.f32 %v379, %v571
        %v725 = vmul.f32 %v380, %v571
        %v726 = vmul.f32 %v381, %v571
        %v727 = vmul.f32 %v382, %v575
        %v728 = vmul.f32 %v383, %v575
        %v729 = vmul.f32 %v384, %v575
        %v730 = vmul.f32 %v385, %v575
        %v731 = vmul.f32 %v386, %v575
        %v732 = vmul.f32 %v387, %v575
        %v733 = vmul.f32 %v388, %v582
        %v734 = vmul.f32 %v389, %v582
        %v735 = vmul.f32 %v390, %v582
        %v736 = vmul.f32 %v391, %v582
        %v737 = vmul.f32 %v392, %v582
        %v738 = vmul.f32 %v393, %v582
        %v739 = vmul.f32 %v394, %v586
        %v740 = vmul.f32 %v395, %v586
        %v741 = vmul.f32 %v396, %v586
        %v742 = vmul.f32 %v397, %v586
        %v743 = vmul.f32 %v398, %v586
        %v744 = vmul.f32 %v399, %v586
        %v745 = vmul.f32 %v400, %v590
        %v746 = vmul.f32 %v401, %v590
        %v747 = vmul.f32 %v402, %v590
        %v748 = vmul.f32 %v403, %v590
        %v749 = vmul.f32 %v404, %v590
        %v750 = vmul.f32 %v405, %v590
        %v751 = vmul.f32 %v406, %v594
        %v752 = vmul.f32 %v407, %v594
        %v753 = vmul.f32 %v408, %v594
        %v754 = vmul.f32 %v409, %v594
        %v755 = vmul.f32 %v410, %v594
        %v756 = vmul.f32 %v411, %v594
        %v757 = vmul.f32 %v412, %v601
        %v758 = vmul.f32 %v413, %v601
        %v759 = vmul.f32 %v414, %v601
        %v760 = vmul.f32 %v415, %v601
        %v761 = vmul.f32 %v416, %v601
        %v762 = vmul.f32 %v417, %v601
        %v763 = vmul.f32 %v418, %v605
        %v764 = vmul.f32 %v419, %v605
        %v765 = vmul.f32 %v420, %v605
        %v766 = vmul.f32 %v421, %v605
        %v767 = vmul.f32 %v422, %v605
        %v768 = vmul.f32 %v423, %v605
        %v769 = vmul.f32 %v424, %v609
        %v770 = vmul.f32 %v425, %v609
        %v771 = vmul.f32 %v426, %v609
        %v772 = vmul.f32 %v427, %v609
        %v773 = vmul.f32 %v428, %v609
        %v774 = vmul.f32 %v429, %v609
        %v775 = vmul.f32 %v430, %v613
        %v776 = vmul.f32 %v431, %v613
        %v777 = vmul.f32 %v432, %v613
        %v778 = vmul.f32 %v433, %v613
        %v779 = vmul.f32 %v434, %v613
        %v780 = vmul.f32 %v435, %v613
        %v781 = vmul.f32 %v436, %v620
        %v782 = vmul.f32 %v437, %v620
        %v783 = vmul.f32 %v438, %v620
        %v784 = vmul.f32 %v439, %v620
        %v785 = vmul.f32 %v440, %v620
        %v786 = vmul.f32 %v441, %v620
        %v787 = vmul.f32 %v442, %v624
        %v788 = vmul.f32 %v443, %v624
        %v789 = vmul.f32 %v444, %v624
        %v790 = vmul.f32 %v445, %v624
        %v791 = vmul.f32 %v446, %v624
        %v792 = vmul.f32 %v447, %v624
        %v793 = vmul.f32 %v448, %v628
        %v794 = vmul.f32 %v449, %v628
        %v795 = vmul.f32 %v450, %v628
        %v796 = vmul.f32 %v451, %v628
        %v797 = vmul.f32 %v452, %v628
        %v798 = vmul.f32 %v453, %v628
        %v799 = vmul.f32 %v454, %v632
        %v800 = vmul.f32 %v455, %v632
        %v801 = vmul.f32 %v456, %v632
        %v802 = vmul.f32 %v457, %v632
        %v803 = vmul.f32 %v458, %v632
        %v804 = vmul.f32 %v459, %v632
        %v805 = vmul.f32 %v460, %v639
        %v806 = vmul.f32 %v461, %v639
        %v807 = vmul.f32 %v462, %v639
        %v808 = vmul.f32 %v463, %v639
        %v809 = vmul.f32 %v464, %v639
        %v810 = vmul.f32 %v465, %v639
        %v811 = vmul.f32 %v466, %v643
        %v812 = vmul.f32 %v467, %v643
        %v813 = vmul.f32 %v468, %v643
        %v814 = vmul.f32 %v469, %v643
        %v815 = vmul.f32 %v470, %v643
        %v816 = vmul.f32 %v471, %v643
        %v817 = vmul.f32 %v472, %v647
        %v818 = vmul.f32 %v473, %v647
        %v819 = vmul.f32 %v474, %v647
        %v820 = vmul.f32 %v475, %v647
        %v821 = vmul.f32 %v476, %v647
        %v822 = vmul.f32 %v477, %v647
        %v823 = vmul.f32 %v478, %v651
        %v824 = vmul.f32 %v479, %v651
        %v825 = vmul.f32 %v480, %v651
        %v826 = vmul.f32 %v481, %v651
        %v827 = vmul.f32 %v482, %v651
        %v828 = vmul.f32 %v483, %v651
        %v829 = vmul.f32 %v484, %v658
        %v830 = vmul.f32 %v485, %v658
        %v831 = vmul.f32 %v486, %v658
        %v832 = vmul.f32 %v487, %v658
        %v833 = vmul.f32 %v488, %v658
        %v834 = vmul.f32 %v489, %v658
        %v835 = vmul.f32 %v490, %v662
        %v836 = vmul.f32 %v491, %v662
        %v837 = vmul.f32 %v492, %v662
        %v838 = vmul.f32 %v493, %v662
        %v839 = vmul.f32 %v494, %v662
        %v840 = vmul.f32 %v495, %v662
        %v841 = vmul.f32 %v496, %v666
        %v842 = vmul.f32 %v497, %v666
        %v843 = vmul.f32 %v498, %v666
        %v844 = vmul.f32 %v499, %v666
        %v845 = vmul.f32 %v500, %v666
        %v846 = vmul.f32 %v501, %v666
        %v847 = vmul.f32 %v502, %v670
        %v848 = vmul.f32 %v503, %v670
        %v849 = vmul.f32 %v504, %v670
        %v850 = vmul.f32 %v505, %v670
        %v851 = vmul.f32 %v506, %v670
        %v852 = vmul.f32 %v507, %v670
        %v853 = vmul.f32 %v508, %v677
        %v854 = vmul.f32 %v509, %v677
        %v855 = vmul.f32 %v510, %v677
        %v856 = vmul.f32 %v511, %v677
        %v857 = vmul.f32 %v512, %v677
        %v858 = vmul.f32 %v513, %v677
        %v859 = vmul.f32 %v514, %v681
        %v860 = vmul.f32 %v515, %v681
        %v861 = vmul.f32 %v516, %v681
        %v862 = vmul.f32 %v517, %v681
        %v863 = vmul.f32 %v518, %v681
        %v864 = vmul.f32 %v519, %v681
        %v865 = vmul.f32 %v520, %v685
        %v866 = vmul.f32 %v521, %v685
        %v867 = vmul.f32 %v522, %v685
        %v868 = vmul.f32 %v523, %v685
        %v869 = vmul.f32 %v524, %v685
        %v870 = vmul.f32 %v525, %v685
        %v871 = vmul.f32 %v526, %v689
        %v872 = vmul.f32 %v527, %v689
        %v873 = vmul.f32 %v528, %v689
        %v874 = vmul.f32 %v529, %v689
        %v875 = vmul.f32 %v530, %v689
        %v876 = vmul.f32 %v531, %v689
        %v877 = vmul.f32 %v532, %v696
        %v878 = vmul.f32 %v533, %v696
        %v879 = vmul.f32 %v534, %v696
        %v880 = vmul.f32 %v535, %v696
        %v881 = vmul.f32 %v536, %v696
        %v882 = vmul.f32 %v537, %v696
        %v883 = vmul.f32 %v538, %v700
        %v884 = vmul.f32 %v539, %v700
        %v885 = vmul.f32 %v540, %v700
        %v886 = vmul.f32 %v541, %v700
        %v887 = vmul.f32 %v542, %v700
        %v888 = vmul.f32 %v543, %v700
        %v889 = vmul.f32 %v544, %v704
        %v890 = vmul.f32 %v545, %v704
        %v891 = vmul.f32 %v546, %v704
        %v892 = vmul.f32 %v547, %v704
        %v893 = vmul.f32 %v548, %v704
        %v894 = vmul.f32 %v549, %v704
        %v895 = vmul.f32 %v550, %v708
        %v896 = vmul.f32 %v551, %v708
        %v897 = vmul.f32 %v552, %v708
        %v898 = vmul.f32 %v553, %v708
        %v899 = vmul.f32 %v554, %v708
        %v900 = vmul.f32 %v555, %v708
        %v901 = vadd.f32 %v709, %v715
        %v902 = vadd.f32 %v901, %v721
        %v903 = vadd.f32 %v902, %v727
        %v904 = vrot.slane %v903, 4
        %v905 = vadd.f32 %v903, %v904
        %v906 = vrot.slane %v905, 2
        %v907 = vadd.f32 %v905, %v906
        %v908 = vrot.slane %v907, 1
        %v909 = vadd.f32 %v907, %v908
        %v910 = vadd.f32 %v710, %v716
        %v911 = vadd.f32 %v910, %v722
        %v912 = vadd.f32 %v911, %v728
        %v913 = vrot.slane %v912, 4
        %v914 = vadd.f32 %v912, %v913
        %v915 = vrot.slane %v914, 2
        %v916 = vadd.f32 %v914, %v915
        %v917 = vrot.slane %v916, 1
        %v918 = vadd.f32 %v916, %v917
        %v919 = vadd.f32 %v711, %v717
        %v920 = vadd.f32 %v919, %v723
        %v921 = vadd.f32 %v920, %v729
        %v922 = vrot.slane %v921, 4
        %v923 = vadd.f32 %v921, %v922
        %v924 = vrot.slane %v923, 2
        %v925 = vadd.f32 %v923, %v924
        %v926 = vrot.slane %v925, 1
        %v927 = vadd.f32 %v925, %v926
        %v928 = vadd.f32 %v712, %v718
        %v929 = vadd.f32 %v928, %v724
        %v930 = vadd.f32 %v929, %v730
        %v931 = vrot.slane %v930, 4
        %v932 = vadd.f32 %v930, %v931
        %v933 = vrot.slane %v932, 2
        %v934 = vadd.f32 %v932, %v933
        %v935 = vrot.slane %v934, 1
        %v936 = vadd.f32 %v934, %v935
        %v937 = vadd.f32 %v713, %v719
        %v938 = vadd.f32 %v937, %v725
        %v939 = vadd.f32 %v938, %v731
        %v940 = vrot.slane %v939, 4
        %v941 = vadd.f32 %v939, %v940
        %v942 = vrot.slane %v941, 2
        %v943 = vadd.f32 %v941, %v942
        %v944 = vrot.slane %v943, 1
        %v945 = vadd.f32 %v943, %v944
        %v946 = vadd.f32 %v714, %v720
        %v947 = vadd.f32 %v946, %v726
        %v948 = vadd.f32 %v947, %v732
        %v949 = vrot.slane %v948, 4
        %v950 = vadd.f32 %v948, %v949
        %v951 = vrot.slane %v950, 2
        %v952 = vadd.f32 %v950, %v951
        %v953 = vrot.slane %v952, 1
        %v954 = vadd.f32 %v952, %v953
        %v955 = vadd.f32 %v733, %v739
        %v956 = vadd.f32 %v955, %v745
        %v957 = vadd.f32 %v956, %v751
        %v958 = vrot.slane %v957, 4
        %v959 = vadd.f32 %v957, %v958
        %v960 = vrot.slane %v959, 2
        %v961 = vadd.f32 %v959, %v960
        %v962 = vrot.slane %v961, 1
        %v963 = vadd.f32 %v961, %v962
        %v964 = vadd.f32 %v734, %v740
        %v965 = vadd.f32 %v964, %v746
        %v966 = vadd.f32 %v965, %v752
        %v967 = vrot.slane %v966, 4
        %v968 = vadd.f32 %v966, %v967
        %v969 = vrot.slane %v968, 2
        %v970 = vadd.f32 %v968, %v969
        %v971 = vrot.slane %v970, 1
        %v972 = vadd.f32 %v970, %v971
        %v973 = vadd.f32 %v735, %v741
        %v974 = vadd.f32 %v973, %v747
        %v975 = vadd.f32 %v974, %v753
        %v976 = vrot.slane %v975, 4
        %v977 = vadd.f32 %v975, %v976
        %v978 = vrot.slane %v977, 2
        %v979 = vadd.f32 %v977, %v978
        %v980 = vrot.slane %v979, 1
        %v981 = vadd.f32 %v979, %v980
        %v982 = vadd.f32 %v736, %v742
        %v983 = vadd.f32 %v982, %v748
        %v984 = vadd.f32 %v983, %v754
        %v985 = vrot.slane %v984, 4
        %v986 = vadd.f32 %v984, %v985
        %v987 = vrot.slane %v986, 2
        %v988 = vadd.f32 %v986, %v987
        %v989 = vrot.slane %v988, 1
        %v990 = vadd.f32 %v988, %v989
        %v991 = vadd.f32 %v737, %v743
        %v992 = vadd.f32 %v991, %v749
        %v993 = vadd.f32 %v992, %v755
        %v994 = vrot.slane %v993, 4
        %v995 = vadd.f32 %v993, %v994
        %v996 = vrot.slane %v995, 2
        %v997 = vadd.f32 %v995, %v996
        %v998 = vrot.slane %v997, 1
        %v999 = vadd.f32 %v997, %v998
        %v1000 = vadd.f32 %v738, %v744
        %v1001 = vadd.f32 %v1000, %v750
        %v1002 = vadd.f32 %v1001, %v756
        %v1003 = vrot.slane %v1002, 4
        %v1004 = vadd.f32 %v1002, %v1003
        %v1005 = vrot.slane %v1004, 2
        %v1006 = vadd.f32 %v1004, %v1005
        %v1007 = vrot.slane %v1006, 1
        %v1008 = vadd.f32 %v1006, %v1007
        %v1009 = vadd.f32 %v757, %v763
        %v1010 = vadd.f32 %v1009, %v769
        %v1011 = vadd.f32 %v1010, %v775
        %v1012 = vrot.slane %v1011, 4
        %v1013 = vadd.f32 %v1011, %v1012
        %v1014 = vrot.slane %v1013, 2
        %v1015 = vadd.f32 %v1013, %v1014
        %v1016 = vrot.slane %v1015, 1
        %v1017 = vadd.f32 %v1015, %v1016
        %v1018 = vadd.f32 %v758, %v764
        %v1019 = vadd.f32 %v1018, %v770
        %v1020 = vadd.f32 %v1019, %v776
        %v1021 = vrot.slane %v1020, 4
        %v1022 = vadd.f32 %v1020, %v1021
        %v1023 = vrot.slane %v1022, 2
        %v1024 = vadd.f32 %v1022, %v1023
        %v1025 = vrot.slane %v1024, 1
        %v1026 = vadd.f32 %v1024, %v1025
        %v1027 = vadd.f32 %v759, %v765
        %v1028 = vadd.f32 %v1027, %v771
        %v1029 = vadd.f32 %v1028, %v777
        %v1030 = vrot.slane %v1029, 4
        %v1031 = vadd.f32 %v1029, %v1030
        %v1032 = vrot.slane %v1031, 2
        %v1033 = vadd.f32 %v1031, %v1032
        %v1034 = vrot.slane %v1033, 1
        %v1035 = vadd.f32 %v1033, %v1034
        %v1036 = vadd.f32 %v760, %v766
        %v1037 = vadd.f32 %v1036, %v772
        %v1038 = vadd.f32 %v1037, %v778
        %v1039 = vrot.slane %v1038, 4
        %v1040 = vadd.f32 %v1038, %v1039
        %v1041 = vrot.slane %v1040, 2
        %v1042 = vadd.f32 %v1040, %v1041
        %v1043 = vrot.slane %v1042, 1
        %v1044 = vadd.f32 %v1042, %v1043
        %v1045 = vadd.f32 %v761, %v767
        %v1046 = vadd.f32 %v1045, %v773
        %v1047 = vadd.f32 %v1046, %v779
        %v1048 = vrot.slane %v1047, 4
        %v1049 = vadd.f32 %v1047, %v1048
        %v1050 = vrot.slane %v1049, 2
        %v1051 = vadd.f32 %v1049, %v1050
        %v1052 = vrot.slane %v1051, 1
        %v1053 = vadd.f32 %v1051, %v1052
        %v1054 = vadd.f32 %v762, %v768
        %v1055 = vadd.f32 %v1054, %v774
        %v1056 = vadd.f32 %v1055, %v780
        %v1057 = vrot.slane %v1056, 4
        %v1058 = vadd.f32 %v1056, %v1057
        %v1059 = vrot.slane %v1058, 2
        %v1060 = vadd.f32 %v1058, %v1059
        %v1061 = vrot.slane %v1060, 1
        %v1062 = vadd.f32 %v1060, %v1061
        %v1063 = vadd.f32 %v781, %v787
        %v1064 = vadd.f32 %v1063, %v793
        %v1065 = vadd.f32 %v1064, %v799
        %v1066 = vrot.slane %v1065, 4
        %v1067 = vadd.f32 %v1065, %v1066
        %v1068 = vrot.slane %v1067, 2
        %v1069 = vadd.f32 %v1067, %v1068
        %v1070 = vrot.slane %v1069, 1
        %v1071 = vadd.f32 %v1069, %v1070
        %v1072 = vadd.f32 %v782, %v788
        %v1073 = vadd.f32 %v1072, %v794
        %v1074 = vadd.f32 %v1073, %v800
        %v1075 = vrot.slane %v1074, 4
        %v1076 = vadd.f32 %v1074, %v1075
        %v1077 = vrot.slane %v1076, 2
        %v1078 = vadd.f32 %v1076, %v1077
        %v1079 = vrot.slane %v1078, 1
        %v1080 = vadd.f32 %v1078, %v1079
        %v1081 = vadd.f32 %v783, %v789
        %v1082 = vadd.f32 %v1081, %v795
        %v1083 = vadd.f32 %v1082, %v801
        %v1084 = vrot.slane %v1083, 4
        %v1085 = vadd.f32 %v1083, %v1084
        %v1086 = vrot.slane %v1085, 2
        %v1087 = vadd.f32 %v1085, %v1086
        %v1088 = vrot.slane %v1087, 1
        %v1089 = vadd.f32 %v1087, %v1088
        %v1090 = vadd.f32 %v784, %v790
        %v1091 = vadd.f32 %v1090, %v796
        %v1092 = vadd.f32 %v1091, %v802
        %v1093 = vrot.slane %v1092, 4
        %v1094 = vadd.f32 %v1092, %v1093
        %v1095 = vrot.slane %v1094, 2
        %v1096 = vadd.f32 %v1094, %v1095
        %v1097 = vrot.slane %v1096, 1
        %v1098 = vadd.f32 %v1096, %v1097
        %v1099 = vadd.f32 %v785, %v791
        %v1100 = vadd.f32 %v1099, %v797
        %v1101 = vadd.f32 %v1100, %v803
        %v1102 = vrot.slane %v1101, 4
        %v1103 = vadd.f32 %v1101, %v1102
        %v1104 = vrot.slane %v1103, 2
        %v1105 = vadd.f32 %v1103, %v1104
        %v1106 = vrot.slane %v1105, 1
        %v1107 = vadd.f32 %v1105, %v1106
        %v1108 = vadd.f32 %v786, %v792
        %v1109 = vadd.f32 %v1108, %v798
        %v1110 = vadd.f32 %v1109, %v804
        %v1111 = vrot.slane %v1110, 4
        %v1112 = vadd.f32 %v1110, %v1111
        %v1113 = vrot.slane %v1112, 2
        %v1114 = vadd.f32 %v1112, %v1113
        %v1115 = vrot.slane %v1114, 1
        %v1116 = vadd.f32 %v1114, %v1115
        %v1117 = vadd.f32 %v805, %v811
        %v1118 = vadd.f32 %v1117, %v817
        %v1119 = vadd.f32 %v1118, %v823
        %v1120 = vrot.slane %v1119, 4
        %v1121 = vadd.f32 %v1119, %v1120
        %v1122 = vrot.slane %v1121, 2
        %v1123 = vadd.f32 %v1121, %v1122
        %v1124 = vrot.slane %v1123, 1
        %v1125 = vadd.f32 %v1123, %v1124
        %v1126 = vadd.f32 %v806, %v812
        %v1127 = vadd.f32 %v1126, %v818
        %v1128 = vadd.f32 %v1127, %v824
        %v1129 = vrot.slane %v1128, 4
        %v1130 = vadd.f32 %v1128, %v1129
        %v1131 = vrot.slane %v1130, 2
        %v1132 = vadd.f32 %v1130, %v1131
        %v1133 = vrot.slane %v1132, 1
        %v1134 = vadd.f32 %v1132, %v1133
        %v1135 = vadd.f32 %v807, %v813
        %v1136 = vadd.f32 %v1135, %v819
        %v1137 = vadd.f32 %v1136, %v825
        %v1138 = vrot.slane %v1137, 4
        %v1139 = vadd.f32 %v1137, %v1138
        %v1140 = vrot.slane %v1139, 2
        %v1141 = vadd.f32 %v1139, %v1140
        %v1142 = vrot.slane %v1141, 1
        %v1143 = vadd.f32 %v1141, %v1142
        %v1144 = vadd.f32 %v808, %v814
        %v1145 = vadd.f32 %v1144, %v820
        %v1146 = vadd.f32 %v1145, %v826
        %v1147 = vrot.slane %v1146, 4
        %v1148 = vadd.f32 %v1146, %v1147
        %v1149 = vrot.slane %v1148, 2
        %v1150 = vadd.f32 %v1148, %v1149
        %v1151 = vrot.slane %v1150, 1
        %v1152 = vadd.f32 %v1150, %v1151
        %v1153 = vadd.f32 %v809, %v815
        %v1154 = vadd.f32 %v1153, %v821
        %v1155 = vadd.f32 %v1154, %v827
        %v1156 = vrot.slane %v1155, 4
        %v1157 = vadd.f32 %v1155, %v1156
        %v1158 = vrot.slane %v1157, 2
        %v1159 = vadd.f32 %v1157, %v1158
        %v1160 = vrot.slane %v1159, 1
        %v1161 = vadd.f32 %v1159, %v1160
        %v1162 = vadd.f32 %v810, %v816
        %v1163 = vadd.f32 %v1162, %v822
        %v1164 = vadd.f32 %v1163, %v828
        %v1165 = vrot.slane %v1164, 4
        %v1166 = vadd.f32 %v1164, %v1165
        %v1167 = vrot.slane %v1166, 2
        %v1168 = vadd.f32 %v1166, %v1167
        %v1169 = vrot.slane %v1168, 1
        %v1170 = vadd.f32 %v1168, %v1169
        %v1171 = vadd.f32 %v829, %v835
        %v1172 = vadd.f32 %v1171, %v841
        %v1173 = vadd.f32 %v1172, %v847
        %v1174 = vrot.slane %v1173, 4
        %v1175 = vadd.f32 %v1173, %v1174
        %v1176 = vrot.slane %v1175, 2
        %v1177 = vadd.f32 %v1175, %v1176
        %v1178 = vrot.slane %v1177, 1
        %v1179 = vadd.f32 %v1177, %v1178
        %v1180 = vadd.f32 %v830, %v836
        %v1181 = vadd.f32 %v1180, %v842
        %v1182 = vadd.f32 %v1181, %v848
        %v1183 = vrot.slane %v1182, 4
        %v1184 = vadd.f32 %v1182, %v1183
        %v1185 = vrot.slane %v1184, 2
        %v1186 = vadd.f32 %v1184, %v1185
        %v1187 = vrot.slane %v1186, 1
        %v1188 = vadd.f32 %v1186, %v1187
        %v1189 = vadd.f32 %v831, %v837
        %v1190 = vadd.f32 %v1189, %v843
        %v1191 = vadd.f32 %v1190, %v849
        %v1192 = vrot.slane %v1191, 4
        %v1193 = vadd.f32 %v1191, %v1192
        %v1194 = vrot.slane %v1193, 2
        %v1195 = vadd.f32 %v1193, %v1194
        %v1196 = vrot.slane %v1195, 1
        %v1197 = vadd.f32 %v1195, %v1196
        %v1198 = vadd.f32 %v832, %v838
        %v1199 = vadd.f32 %v1198, %v844
        %v1200 = vadd.f32 %v1199, %v850
        %v1201 = vrot.slane %v1200, 4
        %v1202 = vadd.f32 %v1200, %v1201
        %v1203 = vrot.slane %v1202, 2
        %v1204 = vadd.f32 %v1202, %v1203
        %v1205 = vrot.slane %v1204, 1
        %v1206 = vadd.f32 %v1204, %v1205
        %v1207 = vadd.f32 %v833, %v839
        %v1208 = vadd.f32 %v1207, %v845
        %v1209 = vadd.f32 %v1208, %v851
        %v1210 = vrot.slane %v1209, 4
        %v1211 = vadd.f32 %v1209, %v1210
        %v1212 = vrot.slane %v1211, 2
        %v1213 = vadd.f32 %v1211, %v1212
        %v1214 = vrot.slane %v1213, 1
        %v1215 = vadd.f32 %v1213, %v1214
        %v1216 = vadd.f32 %v834, %v840
        %v1217 = vadd.f32 %v1216, %v846
        %v1218 = vadd.f32 %v1217, %v852
        %v1219 = vrot.slane %v1218, 4
        %v1220 = vadd.f32 %v1218, %v1219
        %v1221 = vrot.slane %v1220, 2
        %v1222 = vadd.f32 %v1220, %v1221
        %v1223 = vrot.slane %v1222, 1
        %v1224 = vadd.f32 %v1222, %v1223
        %v1225 = vadd.f32 %v853, %v859
        %v1226 = vadd.f32 %v1225, %v865
        %v1227 = vadd.f32 %v1226, %v871
        %v1228 = vrot.slane %v1227, 4
        %v1229 = vadd.f32 %v1227, %v1228
        %v1230 = vrot.slane %v1229, 2
        %v1231 = vadd.f32 %v1229, %v1230
        %v1232 = vrot.slane %v1231, 1
        %v1233 = vadd.f32 %v1231, %v1232
        %v1234 = vadd.f32 %v854, %v860
        %v1235 = vadd.f32 %v1234, %v866
        %v1236 = vadd.f32 %v1235, %v872
        %v1237 = vrot.slane %v1236, 4
        %v1238 = vadd.f32 %v1236, %v1237
        %v1239 = vrot.slane %v1238, 2
        %v1240 = vadd.f32 %v1238, %v1239
        %v1241 = vrot.slane %v1240, 1
        %v1242 = vadd.f32 %v1240, %v1241
        %v1243 = vadd.f32 %v855, %v861
        %v1244 = vadd.f32 %v1243, %v867
        %v1245 = vadd.f32 %v1244, %v873
        %v1246 = vrot.slane %v1245, 4
        %v1247 = vadd.f32 %v1245, %v1246
        %v1248 = vrot.slane %v1247, 2
        %v1249 = vadd.f32 %v1247, %v1248
        %v1250 = vrot.slane %v1249, 1
        %v1251 = vadd.f32 %v1249, %v1250
        %v1252 = vadd.f32 %v856, %v862
        %v1253 = vadd.f32 %v1252, %v868
        %v1254 = vadd.f32 %v1253, %v874
        %v1255 = vrot.slane %v1254, 4
        %v1256 = vadd.f32 %v1254, %v1255
        %v1257 = vrot.slane %v1256, 2
        %v1258 = vadd.f32 %v1256, %v1257
        %v1259 = vrot.slane %v1258, 1
        %v1260 = vadd.f32 %v1258, %v1259
        %v1261 = vadd.f32 %v857, %v863
        %v1262 = vadd.f32 %v1261, %v869
        %v1263 = vadd.f32 %v1262, %v875
        %v1264 = vrot.slane %v1263, 4
        %v1265 = vadd.f32 %v1263, %v1264
        %v1266 = vrot.slane %v1265, 2
        %v1267 = vadd.f32 %v1265, %v1266
        %v1268 = vrot.slane %v1267, 1
        %v1269 = vadd.f32 %v1267, %v1268
        %v1270 = vadd.f32 %v858, %v864
        %v1271 = vadd.f32 %v1270, %v870
        %v1272 = vadd.f32 %v1271, %v876
        %v1273 = vrot.slane %v1272, 4
        %v1274 = vadd.f32 %v1272, %v1273
        %v1275 = vrot.slane %v1274, 2
        %v1276 = vadd.f32 %v1274, %v1275
        %v1277 = vrot.slane %v1276, 1
        %v1278 = vadd.f32 %v1276, %v1277
        %v1279 = vadd.f32 %v877, %v883
        %v1280 = vadd.f32 %v1279, %v889
        %v1281 = vadd.f32 %v1280, %v895
        %v1282 = vrot.slane %v1281, 4
        %v1283 = vadd.f32 %v1281, %v1282
        %v1284 = vrot.slane %v1283, 2
        %v1285 = vadd.f32 %v1283, %v1284
        %v1286 = vrot.slane %v1285, 1
        %v1287 = vadd.f32 %v1285, %v1286
        %v1288 = vadd.f32 %v878, %v884
        %v1289 = vadd.f32 %v1288, %v890
        %v1290 = vadd.f32 %v1289, %v896
        %v1291 = vrot.slane %v1290, 4
        %v1292 = vadd.f32 %v1290, %v1291
        %v1293 = vrot.slane %v1292, 2
        %v1294 = vadd.f32 %v1292, %v1293
        %v1295 = vrot.slane %v1294, 1
        %v1296 = vadd.f32 %v1294, %v1295
        %v1297 = vadd.f32 %v879, %v885
        %v1298 = vadd.f32 %v1297, %v891
        %v1299 = vadd.f32 %v1298, %v897
        %v1300 = vrot.slane %v1299, 4
        %v1301 = vadd.f32 %v1299, %v1300
        %v1302 = vrot.slane %v1301, 2
        %v1303 = vadd.f32 %v1301, %v1302
        %v1304 = vrot.slane %v1303, 1
        %v1305 = vadd.f32 %v1303, %v1304
        %v1306 = vadd.f32 %v880, %v886
        %v1307 = vadd.f32 %v1306, %v892
        %v1308 = vadd.f32 %v1307, %v898
        %v1309 = vrot.slane %v1308, 4
        %v1310 = vadd.f32 %v1308, %v1309
        %v1311 = vrot.slane %v1310, 2
        %v1312 = vadd.f32 %v1310, %v1311
        %v1313 = vrot.slane %v1312, 1
        %v1314 = vadd.f32 %v1312, %v1313
        %v1315 = vadd.f32 %v881, %v887
        %v1316 = vadd.f32 %v1315, %v893
        %v1317 = vadd.f32 %v1316, %v899
        %v1318 = vrot.slane %v1317, 4
        %v1319 = vadd.f32 %v1317, %v1318
        %v1320 = vrot.slane %v1319, 2
        %v1321 = vadd.f32 %v1319, %v1320
        %v1322 = vrot.slane %v1321, 1
        %v1323 = vadd.f32 %v1321, %v1322
        %v1324 = vadd.f32 %v882, %v888
        %v1325 = vadd.f32 %v1324, %v894
        %v1326 = vadd.f32 %v1325, %v900
        %v1327 = vrot.slane %v1326, 4
        %v1328 = vadd.f32 %v1326, %v1327
        %v1329 = vrot.slane %v1328, 2
        %v1330 = vadd.f32 %v1328, %v1329
        %v1331 = vrot.slane %v1330, 1
        %v1332 = vadd.f32 %v1330, %v1331
        %vm1333 = vcmask 261120
        %v1334 = vsel %vm1333, %v556, 0.0
        %1335 = vadd.xlane.f32.xlu0 %v1334
        %v1336 = vpop.xlane.xlu0 %1335
        %v1337 = vmax.f32 %v1336, 1.0
        %v1338 = vrcp.pop %v1337
        %v1340 = vrot.slane %v1338, 1
        %v1341 = vrot.slane %v1338, 2
        %v1342 = vrot.slane %v1338, 3
        %v1343 = vrot.slane %v1338, 4
        %v1344 = vrot.slane %v1338, 5
        %v1345 = vrot.slane %v1338, 6
        %v1346 = vrot.slane %v1338, 7
        %v1355 = vmul.f32 %v909, %v1338
        %v1356 = vmul.f32 %v918, %v1338
        %v1357 = vmul.f32 %v927, %v1338
        %v1358 = vmul.f32 %v936, %v1338
        %v1359 = vmul.f32 %v945, %v1338
        %v1360 = vmul.f32 %v954, %v1338
        %v1361 = vmul.f32 %v963, %v1340
        %v1362 = vmul.f32 %v972, %v1340
        %v1363 = vmul.f32 %v981, %v1340
        %v1364 = vmul.f32 %v990, %v1340
        %v1365 = vmul.f32 %v999, %v1340
        %v1366 = vmul.f32 %v1008, %v1340
        %v1367 = vmul.f32 %v1017, %v1341
        %v1368 = vmul.f32 %v1026, %v1341
        %v1369 = vmul.f32 %v1035, %v1341
        %v1370 = vmul.f32 %v1044, %v1341
        %v1371 = vmul.f32 %v1053, %v1341
        %v1372 = vmul.f32 %v1062, %v1341
        %v1373 = vmul.f32 %v1071, %v1342
        %v1374 = vmul.f32 %v1080, %v1342
        %v1375 = vmul.f32 %v1089, %v1342
        %v1376 = vmul.f32 %v1098, %v1342
        %v1377 = vmul.f32 %v1107, %v1342
        %v1378 = vmul.f32 %v1116, %v1342
        %v1379 = vmul.f32 %v1125, %v1343
        %v1380 = vmul.f32 %v1134, %v1343
        %v1381 = vmul.f32 %v1143, %v1343
        %v1382 = vmul.f32 %v1152, %v1343
        %v1383 = vmul.f32 %v1161, %v1343
        %v1384 = vmul.f32 %v1170, %v1343
        %v1385 = vmul.f32 %v1179, %v1344
        %v1386 = vmul.f32 %v1188, %v1344
        %v1387 = vmul.f32 %v1197, %v1344
        %v1388 = vmul.f32 %v1206, %v1344
        %v1389 = vmul.f32 %v1215, %v1344
        %v1390 = vmul.f32 %v1224, %v1344
        %v1391 = vmul.f32 %v1233, %v1345
        %v1392 = vmul.f32 %v1242, %v1345
        %v1393 = vmul.f32 %v1251, %v1345
        %v1394 = vmul.f32 %v1260, %v1345
        %v1395 = vmul.f32 %v1269, %v1345
        %v1396 = vmul.f32 %v1278, %v1345
        %v1397 = vmul.f32 %v1287, %v1346
        %v1398 = vmul.f32 %v1296, %v1346
        %v1399 = vmul.f32 %v1305, %v1346
        %v1400 = vmul.f32 %v1314, %v1346
        %v1401 = vmul.f32 %v1323, %v1346
        %v1402 = vmul.f32 %v1332, %v1346
        %v1403 = vpack.c.bf16 %v1355, %v1355
        %v1404 = vpack.c.bf16 %v1356, %v1356
        %v1405 = vpack.c.bf16 %v1357, %v1357
        %v1406 = vpack.c.bf16 %v1358, %v1358
        %v1407 = vpack.c.bf16 %v1359, %v1359
        %v1408 = vpack.c.bf16 %v1360, %v1360
        %v1409 = vpack.c.bf16 %v1361, %v1361
        %v1410 = vpack.c.bf16 %v1362, %v1362
        %v1411 = vpack.c.bf16 %v1363, %v1363
        %v1412 = vpack.c.bf16 %v1364, %v1364
        %v1413 = vpack.c.bf16 %v1365, %v1365
        %v1414 = vpack.c.bf16 %v1366, %v1366
        %v1415 = vpack.c.bf16 %v1367, %v1367
        %v1416 = vpack.c.bf16 %v1368, %v1368
        %v1417 = vpack.c.bf16 %v1369, %v1369
        %v1418 = vpack.c.bf16 %v1370, %v1370
        %v1419 = vpack.c.bf16 %v1371, %v1371
        %v1420 = vpack.c.bf16 %v1372, %v1372
        %v1421 = vpack.c.bf16 %v1373, %v1373
        %v1422 = vpack.c.bf16 %v1374, %v1374
        %v1423 = vpack.c.bf16 %v1375, %v1375
        %v1424 = vpack.c.bf16 %v1376, %v1376
        %v1425 = vpack.c.bf16 %v1377, %v1377
        %v1426 = vpack.c.bf16 %v1378, %v1378
        %v1427 = vpack.c.bf16 %v1379, %v1379
        %v1428 = vpack.c.bf16 %v1380, %v1380
        %v1429 = vpack.c.bf16 %v1381, %v1381
        %v1430 = vpack.c.bf16 %v1382, %v1382
        %v1431 = vpack.c.bf16 %v1383, %v1383
        %v1432 = vpack.c.bf16 %v1384, %v1384
        %v1433 = vpack.c.bf16 %v1385, %v1385
        %v1434 = vpack.c.bf16 %v1386, %v1386
        %v1435 = vpack.c.bf16 %v1387, %v1387
        %v1436 = vpack.c.bf16 %v1388, %v1388
        %v1437 = vpack.c.bf16 %v1389, %v1389
        %v1438 = vpack.c.bf16 %v1390, %v1390
        %v1439 = vpack.c.bf16 %v1391, %v1391
        %v1440 = vpack.c.bf16 %v1392, %v1392
        %v1441 = vpack.c.bf16 %v1393, %v1393
        %v1442 = vpack.c.bf16 %v1394, %v1394
        %v1443 = vpack.c.bf16 %v1395, %v1395
        %v1444 = vpack.c.bf16 %v1396, %v1396
        %v1445 = vpack.c.bf16 %v1397, %v1397
        %v1446 = vpack.c.bf16 %v1398, %v1398
        %v1447 = vpack.c.bf16 %v1399, %v1399
        %v1448 = vpack.c.bf16 %v1400, %v1400
        %v1449 = vpack.c.bf16 %v1401, %v1401
        %v1450 = vpack.c.bf16 %v1402, %v1402
        %v1451 = vld [vmem:[#allocation7] sm:$0xff]
        %v1452 = vld [vmem:[#allocation7 + $0x8] sm:$0xff]
        %v1453 = vld [vmem:[#allocation7 + $0x10] sm:$0xff]
        %v1454 = vld [vmem:[#allocation7 + $0x18] sm:$0xff]
        %v1455 = vld [vmem:[#allocation7 + $0x20] sm:$0xff]
        %v1456 = vld [vmem:[#allocation7 + $0x28] sm:$0xff]
        %v1457 = vld [vmem:[#allocation7 + $0x30] sm:$0xff]
        %v1458 = vld [vmem:[#allocation7 + $0x38] sm:$0xff]
        %v1459 = vld [vmem:[#allocation7 + $0x40] sm:$0xff]
        %v1460 = vld [vmem:[#allocation7 + $0x48] sm:$0xff]
        %v1461 = vld [vmem:[#allocation7 + $0x50] sm:$0xff]
        %v1462 = vld [vmem:[#allocation7 + $0x58] sm:$0xff]
        %v1463 = vld [vmem:[#allocation7 + $0x60] sm:$0xff]
        %v1464 = vld [vmem:[#allocation7 + $0x68] sm:$0xff]
        %v1465 = vld [vmem:[#allocation7 + $0x70] sm:$0xff]
        %v1466 = vld [vmem:[#allocation7 + $0x78] sm:$0xff]
        %v1467 = vld [vmem:[#allocation7 + $0x80] sm:$0xff]
        %v1468 = vld [vmem:[#allocation7 + $0x88] sm:$0xff]
        %v1469 = vld [vmem:[#allocation7 + $0x90] sm:$0xff]
        %v1470 = vld [vmem:[#allocation7 + $0x98] sm:$0xff]
        %v1471 = vld [vmem:[#allocation7 + $0xa0] sm:$0xff]
        %v1472 = vld [vmem:[#allocation7 + $0xa8] sm:$0xff]
        %v1473 = vld [vmem:[#allocation7 + $0xb0] sm:$0xff]
        %v1474 = vld [vmem:[#allocation7 + $0xb8] sm:$0xff]
        %v1475 = vld [vmem:[#allocation7 + $0xc0] sm:$0xff]
        %v1476 = vld [vmem:[#allocation7 + $0xc8] sm:$0xff]
        %v1477 = vld [vmem:[#allocation7 + $0xd0] sm:$0xff]
        %v1478 = vld [vmem:[#allocation7 + $0xd8] sm:$0xff]
        %v1479 = vld [vmem:[#allocation7 + $0xe0] sm:$0xff]
        %v1480 = vld [vmem:[#allocation7 + $0xe8] sm:$0xff]
        %v1481 = vld [vmem:[#allocation7 + $0xf0] sm:$0xff]
        %v1482 = vld [vmem:[#allocation7 + $0xf8] sm:$0xff]
        %v1483 = vld [vmem:[#allocation7 + $0x100] sm:$0xff]
        %v1484 = vld [vmem:[#allocation7 + $0x108] sm:$0xff]
        %v1485 = vld [vmem:[#allocation7 + $0x110] sm:$0xff]
        %v1486 = vld [vmem:[#allocation7 + $0x118] sm:$0xff]
        %v1487 = vld [vmem:[#allocation7 + $0x120] sm:$0xff]
        %v1488 = vld [vmem:[#allocation7 + $0x128] sm:$0xff]
        %v1489 = vld [vmem:[#allocation7 + $0x130] sm:$0xff]
        %v1490 = vld [vmem:[#allocation7 + $0x138] sm:$0xff]
        %v1491 = vld [vmem:[#allocation7 + $0x140] sm:$0xff]
        %v1492 = vld [vmem:[#allocation7 + $0x148] sm:$0xff]
        %v1493 = vld [vmem:[#allocation7 + $0x150] sm:$0xff]
        %v1494 = vld [vmem:[#allocation7 + $0x158] sm:$0xff]
        %v1495 = vld [vmem:[#allocation7 + $0x160] sm:$0xff]
        %v1496 = vld [vmem:[#allocation7 + $0x168] sm:$0xff]
        %v1497 = vld [vmem:[#allocation7 + $0x170] sm:$0xff]
        %v1498 = vld [vmem:[#allocation7 + $0x178] sm:$0xff]
        %v1499 = vld [vmem:[#allocation7 + $0x180] sm:$0xff]
        %v1500 = vld [vmem:[#allocation7 + $0x188] sm:$0xff]
        %v1501 = vld [vmem:[#allocation7 + $0x190] sm:$0xff]
        %v1502 = vld [vmem:[#allocation7 + $0x198] sm:$0xff]
        %v1503 = vld [vmem:[#allocation7 + $0x1a0] sm:$0xff]
        %v1504 = vld [vmem:[#allocation7 + $0x1a8] sm:$0xff]
        %v1505 = vld [vmem:[#allocation7 + $0x1b0] sm:$0xff]
        %v1506 = vld [vmem:[#allocation7 + $0x1b8] sm:$0xff]
        %v1507 = vld [vmem:[#allocation7 + $0x1c0] sm:$0xff]
        %v1508 = vld [vmem:[#allocation7 + $0x1c8] sm:$0xff]
        %v1509 = vld [vmem:[#allocation7 + $0x1d0] sm:$0xff]
        %v1510 = vld [vmem:[#allocation7 + $0x1d8] sm:$0xff]
        %v1511 = vld [vmem:[#allocation7 + $0x1e0] sm:$0xff]
        %v1512 = vld [vmem:[#allocation7 + $0x1e8] sm:$0xff]
        %v1513 = vld [vmem:[#allocation7 + $0x1f0] sm:$0xff]
        %v1514 = vld [vmem:[#allocation7 + $0x1f8] sm:$0xff]
        %v1515 = vld [vmem:[#allocation7 + $0x200] sm:$0xff]
        %v1516 = vld [vmem:[#allocation7 + $0x208] sm:$0xff]
        %v1517 = vld [vmem:[#allocation7 + $0x210] sm:$0xff]
        %v1518 = vld [vmem:[#allocation7 + $0x218] sm:$0xff]
        %v1519 = vld [vmem:[#allocation7 + $0x220] sm:$0xff]
        %v1520 = vld [vmem:[#allocation7 + $0x228] sm:$0xff]
        %v1521 = vld [vmem:[#allocation7 + $0x230] sm:$0xff]
        %v1522 = vld [vmem:[#allocation7 + $0x238] sm:$0xff]
        %v1523 = vld [vmem:[#allocation7 + $0x240] sm:$0xff]
        %v1524 = vld [vmem:[#allocation7 + $0x248] sm:$0xff]
        %v1525 = vld [vmem:[#allocation7 + $0x250] sm:$0xff]
        %v1526 = vld [vmem:[#allocation7 + $0x258] sm:$0xff]
        %v1527 = vld [vmem:[#allocation7 + $0x260] sm:$0xff]
        %v1528 = vld [vmem:[#allocation7 + $0x268] sm:$0xff]
        %v1529 = vld [vmem:[#allocation7 + $0x270] sm:$0xff]
        %v1530 = vld [vmem:[#allocation7 + $0x278] sm:$0xff]
        %v1531 = vld [vmem:[#allocation7 + $0x280] sm:$0xff]
        %v1532 = vld [vmem:[#allocation7 + $0x288] sm:$0xff]
        %v1533 = vld [vmem:[#allocation7 + $0x290] sm:$0xff]
        %v1534 = vld [vmem:[#allocation7 + $0x298] sm:$0xff]
        %v1535 = vld [vmem:[#allocation7 + $0x2a0] sm:$0xff]
        %v1536 = vld [vmem:[#allocation7 + $0x2a8] sm:$0xff]
        %v1537 = vld [vmem:[#allocation7 + $0x2b0] sm:$0xff]
        %v1538 = vld [vmem:[#allocation7 + $0x2b8] sm:$0xff]
        %v1539 = vld [vmem:[#allocation7 + $0x2c0] sm:$0xff]
        %v1540 = vld [vmem:[#allocation7 + $0x2c8] sm:$0xff]
        %v1541 = vld [vmem:[#allocation7 + $0x2d0] sm:$0xff]
        %v1542 = vld [vmem:[#allocation7 + $0x2d8] sm:$0xff]
        %v1543 = vld [vmem:[#allocation7 + $0x2e0] sm:$0xff]
        %v1544 = vld [vmem:[#allocation7 + $0x2e8] sm:$0xff]
        %v1545 = vld [vmem:[#allocation7 + $0x2f0] sm:$0xff]
        %v1546 = vld [vmem:[#allocation7 + $0x2f8] sm:$0xff]
        %v1547 = vld [vmem:[#allocation7 + $0x300] sm:$0xff]
        %v1548 = vld [vmem:[#allocation7 + $0x308] sm:$0xff]
        %v1549 = vld [vmem:[#allocation7 + $0x310] sm:$0xff]
        %v1550 = vld [vmem:[#allocation7 + $0x318] sm:$0xff]
        %v1551 = vld [vmem:[#allocation7 + $0x320] sm:$0xff]
        %v1552 = vld [vmem:[#allocation7 + $0x328] sm:$0xff]
        %v1553 = vld [vmem:[#allocation7 + $0x330] sm:$0xff]
        %v1554 = vld [vmem:[#allocation7 + $0x338] sm:$0xff]
        %v1555 = vld [vmem:[#allocation7 + $0x340] sm:$0xff]
        %v1556 = vld [vmem:[#allocation7 + $0x348] sm:$0xff]
        %v1557 = vld [vmem:[#allocation7 + $0x350] sm:$0xff]
        %v1558 = vld [vmem:[#allocation7 + $0x358] sm:$0xff]
        %v1559 = vld [vmem:[#allocation7 + $0x360] sm:$0xff]
        %v1560 = vld [vmem:[#allocation7 + $0x368] sm:$0xff]
        %v1561 = vld [vmem:[#allocation7 + $0x370] sm:$0xff]
        %v1562 = vld [vmem:[#allocation7 + $0x378] sm:$0xff]
        %v1563 = vld [vmem:[#allocation7 + $0x380] sm:$0xff]
        %v1564 = vld [vmem:[#allocation7 + $0x388] sm:$0xff]
        %v1565 = vld [vmem:[#allocation7 + $0x390] sm:$0xff]
        %v1566 = vld [vmem:[#allocation7 + $0x398] sm:$0xff]
        %v1567 = vld [vmem:[#allocation7 + $0x3a0] sm:$0xff]
        %v1568 = vld [vmem:[#allocation7 + $0x3a8] sm:$0xff]
        %v1569 = vld [vmem:[#allocation7 + $0x3b0] sm:$0xff]
        %v1570 = vld [vmem:[#allocation7 + $0x3b8] sm:$0xff]
        %v1571 = vld [vmem:[#allocation7 + $0x3c0] sm:$0xff]
        %v1572 = vld [vmem:[#allocation7 + $0x3c8] sm:$0xff]
        %v1573 = vld [vmem:[#allocation7 + $0x3d0] sm:$0xff]
        %v1574 = vld [vmem:[#allocation7 + $0x3d8] sm:$0xff]
        %v1575 = vld [vmem:[#allocation7 + $0x3e0] sm:$0xff]
        %v1576 = vld [vmem:[#allocation7 + $0x3e8] sm:$0xff]
        %v1577 = vld [vmem:[#allocation7 + $0x3f0] sm:$0xff]
        %v1578 = vld [vmem:[#allocation7 + $0x3f8] sm:$0xff]
        %v1579 = vld [vmem:[#allocation7 + $0x400] sm:$0xff]
        %v1580 = vld [vmem:[#allocation7 + $0x408] sm:$0xff]
        %v1581 = vld [vmem:[#allocation7 + $0x410] sm:$0xff]
        %v1582 = vld [vmem:[#allocation7 + $0x418] sm:$0xff]
        %v1583 = vld [vmem:[#allocation7 + $0x420] sm:$0xff]
        %v1584 = vld [vmem:[#allocation7 + $0x428] sm:$0xff]
        %v1585 = vld [vmem:[#allocation7 + $0x430] sm:$0xff]
        %v1586 = vld [vmem:[#allocation7 + $0x438] sm:$0xff]
        %v1587 = vld [vmem:[#allocation7 + $0x440] sm:$0xff]
        %v1588 = vld [vmem:[#allocation7 + $0x448] sm:$0xff]
        %v1589 = vld [vmem:[#allocation7 + $0x450] sm:$0xff]
        %v1590 = vld [vmem:[#allocation7 + $0x458] sm:$0xff]
        %v1591 = vld [vmem:[#allocation7 + $0x460] sm:$0xff]
        %v1592 = vld [vmem:[#allocation7 + $0x468] sm:$0xff]
        %v1593 = vld [vmem:[#allocation7 + $0x470] sm:$0xff]
        %v1594 = vld [vmem:[#allocation7 + $0x478] sm:$0xff]
        %v1595 = vld [vmem:[#allocation7 + $0x480] sm:$0xff]
        %v1596 = vld [vmem:[#allocation7 + $0x488] sm:$0xff]
        %v1597 = vld [vmem:[#allocation7 + $0x490] sm:$0xff]
        %v1598 = vld [vmem:[#allocation7 + $0x498] sm:$0xff]
        %v1599 = vld [vmem:[#allocation7 + $0x4a0] sm:$0xff]
        %v1600 = vld [vmem:[#allocation7 + $0x4a8] sm:$0xff]
        %v1601 = vld [vmem:[#allocation7 + $0x4b0] sm:$0xff]
        %v1602 = vld [vmem:[#allocation7 + $0x4b8] sm:$0xff]
        %v1603 = vld [vmem:[#allocation7 + $0x4c0] sm:$0xff]
        %v1604 = vld [vmem:[#allocation7 + $0x4c8] sm:$0xff]
        %v1605 = vld [vmem:[#allocation7 + $0x4d0] sm:$0xff]
        %v1606 = vld [vmem:[#allocation7 + $0x4d8] sm:$0xff]
        %v1607 = vld [vmem:[#allocation7 + $0x4e0] sm:$0xff]
        %v1608 = vld [vmem:[#allocation7 + $0x4e8] sm:$0xff]
        %v1609 = vld [vmem:[#allocation7 + $0x4f0] sm:$0xff]
        %v1610 = vld [vmem:[#allocation7 + $0x4f8] sm:$0xff]
        %v1611 = vld [vmem:[#allocation7 + $0x500] sm:$0xff]
        %v1612 = vld [vmem:[#allocation7 + $0x508] sm:$0xff]
        %v1613 = vld [vmem:[#allocation7 + $0x510] sm:$0xff]
        %v1614 = vld [vmem:[#allocation7 + $0x518] sm:$0xff]
        %v1615 = vld [vmem:[#allocation7 + $0x520] sm:$0xff]
        %v1616 = vld [vmem:[#allocation7 + $0x528] sm:$0xff]
        %v1617 = vld [vmem:[#allocation7 + $0x530] sm:$0xff]
        %v1618 = vld [vmem:[#allocation7 + $0x538] sm:$0xff]
        %v1619 = vld [vmem:[#allocation7 + $0x540] sm:$0xff]
        %v1620 = vld [vmem:[#allocation7 + $0x548] sm:$0xff]
        %v1621 = vld [vmem:[#allocation7 + $0x550] sm:$0xff]
        %v1622 = vld [vmem:[#allocation7 + $0x558] sm:$0xff]
        %v1623 = vld [vmem:[#allocation7 + $0x560] sm:$0xff]
        %v1624 = vld [vmem:[#allocation7 + $0x568] sm:$0xff]
        %v1625 = vld [vmem:[#allocation7 + $0x570] sm:$0xff]
        %v1626 = vld [vmem:[#allocation7 + $0x578] sm:$0xff]
        %v1627 = vld [vmem:[#allocation7 + $0x580] sm:$0xff]
        %v1628 = vld [vmem:[#allocation7 + $0x588] sm:$0xff]
        %v1629 = vld [vmem:[#allocation7 + $0x590] sm:$0xff]
        %v1630 = vld [vmem:[#allocation7 + $0x598] sm:$0xff]
        %v1631 = vld [vmem:[#allocation7 + $0x5a0] sm:$0xff]
        %v1632 = vld [vmem:[#allocation7 + $0x5a8] sm:$0xff]
        %v1633 = vld [vmem:[#allocation7 + $0x5b0] sm:$0xff]
        %v1634 = vld [vmem:[#allocation7 + $0x5b8] sm:$0xff]
        %v1635 = vld [vmem:[#allocation7 + $0x5c0] sm:$0xff]
        %v1636 = vld [vmem:[#allocation7 + $0x5c8] sm:$0xff]
        %v1637 = vld [vmem:[#allocation7 + $0x5d0] sm:$0xff]
        %v1638 = vld [vmem:[#allocation7 + $0x5d8] sm:$0xff]
        %v1639 = vld [vmem:[#allocation7 + $0x5e0] sm:$0xff]
        %v1640 = vld [vmem:[#allocation7 + $0x5e8] sm:$0xff]
        %v1641 = vld [vmem:[#allocation7 + $0x5f0] sm:$0xff]
        %v1642 = vld [vmem:[#allocation7 + $0x5f8] sm:$0xff]
        %v1643 = vld [vmem:[#allocation7 + $0x600] sm:$0xff]
        %v1644 = vld [vmem:[#allocation7 + $0x608] sm:$0xff]
        %v1645 = vld [vmem:[#allocation7 + $0x610] sm:$0xff]
        %v1646 = vld [vmem:[#allocation7 + $0x618] sm:$0xff]
        %v1647 = vld [vmem:[#allocation7 + $0x620] sm:$0xff]
        %v1648 = vld [vmem:[#allocation7 + $0x628] sm:$0xff]
        %v1649 = vld [vmem:[#allocation7 + $0x630] sm:$0xff]
        %v1650 = vld [vmem:[#allocation7 + $0x638] sm:$0xff]
        %v1651 = vld [vmem:[#allocation7 + $0x640] sm:$0xff]
        %v1652 = vld [vmem:[#allocation7 + $0x648] sm:$0xff]
        %v1653 = vld [vmem:[#allocation7 + $0x650] sm:$0xff]
        %v1654 = vld [vmem:[#allocation7 + $0x658] sm:$0xff]
        %v1655 = vld [vmem:[#allocation7 + $0x660] sm:$0xff]
        %v1656 = vld [vmem:[#allocation7 + $0x668] sm:$0xff]
        %v1657 = vld [vmem:[#allocation7 + $0x670] sm:$0xff]
        %v1658 = vld [vmem:[#allocation7 + $0x678] sm:$0xff]
        %v1659 = vld [vmem:[#allocation7 + $0x680] sm:$0xff]
        %v1660 = vld [vmem:[#allocation7 + $0x688] sm:$0xff]
        %v1661 = vld [vmem:[#allocation7 + $0x690] sm:$0xff]
        %v1662 = vld [vmem:[#allocation7 + $0x698] sm:$0xff]
        %v1663 = vld [vmem:[#allocation7 + $0x6a0] sm:$0xff]
        %v1664 = vld [vmem:[#allocation7 + $0x6a8] sm:$0xff]
        %v1665 = vld [vmem:[#allocation7 + $0x6b0] sm:$0xff]
        %v1666 = vld [vmem:[#allocation7 + $0x6b8] sm:$0xff]
        %v1667 = vld [vmem:[#allocation7 + $0x6c0] sm:$0xff]
        %v1668 = vld [vmem:[#allocation7 + $0x6c8] sm:$0xff]
        %v1669 = vld [vmem:[#allocation7 + $0x6d0] sm:$0xff]
        %v1670 = vld [vmem:[#allocation7 + $0x6d8] sm:$0xff]
        %v1671 = vld [vmem:[#allocation7 + $0x6e0] sm:$0xff]
        %v1672 = vld [vmem:[#allocation7 + $0x6e8] sm:$0xff]
        %v1673 = vld [vmem:[#allocation7 + $0x6f0] sm:$0xff]
        %v1674 = vld [vmem:[#allocation7 + $0x6f8] sm:$0xff]
        %v1675 = vld [vmem:[#allocation7 + $0x700] sm:$0xff]
        %v1676 = vld [vmem:[#allocation7 + $0x708] sm:$0xff]
        %v1677 = vld [vmem:[#allocation7 + $0x710] sm:$0xff]
        %v1678 = vld [vmem:[#allocation7 + $0x718] sm:$0xff]
        %v1679 = vld [vmem:[#allocation7 + $0x720] sm:$0xff]
        %v1680 = vld [vmem:[#allocation7 + $0x728] sm:$0xff]
        %v1681 = vld [vmem:[#allocation7 + $0x730] sm:$0xff]
        %v1682 = vld [vmem:[#allocation7 + $0x738] sm:$0xff]
        %v1683 = vld [vmem:[#allocation7 + $0x740] sm:$0xff]
        %v1684 = vld [vmem:[#allocation7 + $0x748] sm:$0xff]
        %v1685 = vld [vmem:[#allocation7 + $0x750] sm:$0xff]
        %v1686 = vld [vmem:[#allocation7 + $0x758] sm:$0xff]
        %v1687 = vld [vmem:[#allocation7 + $0x760] sm:$0xff]
        %v1688 = vld [vmem:[#allocation7 + $0x768] sm:$0xff]
        %v1689 = vld [vmem:[#allocation7 + $0x770] sm:$0xff]
        %v1690 = vld [vmem:[#allocation7 + $0x778] sm:$0xff]
        %v1691 = vld [vmem:[#allocation7 + $0x780] sm:$0xff]
        %v1692 = vld [vmem:[#allocation7 + $0x788] sm:$0xff]
        %v1693 = vld [vmem:[#allocation7 + $0x790] sm:$0xff]
        %v1694 = vld [vmem:[#allocation7 + $0x798] sm:$0xff]
        %v1695 = vld [vmem:[#allocation7 + $0x7a0] sm:$0xff]
        %v1696 = vld [vmem:[#allocation7 + $0x7a8] sm:$0xff]
        %v1697 = vld [vmem:[#allocation7 + $0x7b0] sm:$0xff]
        %v1698 = vld [vmem:[#allocation7 + $0x7b8] sm:$0xff]
        %v1699 = vld [vmem:[#allocation7 + $0x7c0] sm:$0xff]
        %v1700 = vld [vmem:[#allocation7 + $0x7c8] sm:$0xff]
        %v1701 = vld [vmem:[#allocation7 + $0x7d0] sm:$0xff]
        %v1702 = vld [vmem:[#allocation7 + $0x7d8] sm:$0xff]
        %v1703 = vld [vmem:[#allocation7 + $0x7e0] sm:$0xff]
        %v1704 = vld [vmem:[#allocation7 + $0x7e8] sm:$0xff]
        %v1705 = vld [vmem:[#allocation7 + $0x7f0] sm:$0xff]
        %v1706 = vld [vmem:[#allocation7 + $0x7f8] sm:$0xff]
        %v1707 = vld [vmem:[#allocation7 + $0x800] sm:$0xff]
        %v1708 = vld [vmem:[#allocation7 + $0x808] sm:$0xff]
        %v1709 = vld [vmem:[#allocation7 + $0x810] sm:$0xff]
        %v1710 = vld [vmem:[#allocation7 + $0x818] sm:$0xff]
        %v1711 = vld [vmem:[#allocation7 + $0x820] sm:$0xff]
        %v1712 = vld [vmem:[#allocation7 + $0x828] sm:$0xff]
        %v1713 = vld [vmem:[#allocation7 + $0x830] sm:$0xff]
        %v1714 = vld [vmem:[#allocation7 + $0x838] sm:$0xff]
        %v1715 = vld [vmem:[#allocation7 + $0x840] sm:$0xff]
        %v1716 = vld [vmem:[#allocation7 + $0x848] sm:$0xff]
        %v1717 = vld [vmem:[#allocation7 + $0x850] sm:$0xff]
        %v1718 = vld [vmem:[#allocation7 + $0x858] sm:$0xff]
        %v1719 = vld [vmem:[#allocation7 + $0x860] sm:$0xff]
        %v1720 = vld [vmem:[#allocation7 + $0x868] sm:$0xff]
        %v1721 = vld [vmem:[#allocation7 + $0x870] sm:$0xff]
        %v1722 = vld [vmem:[#allocation7 + $0x878] sm:$0xff]
        %v1723 = vld [vmem:[#allocation7 + $0x880] sm:$0xff]
        %v1724 = vld [vmem:[#allocation7 + $0x888] sm:$0xff]
        %v1725 = vld [vmem:[#allocation7 + $0x890] sm:$0xff]
        %v1726 = vld [vmem:[#allocation7 + $0x898] sm:$0xff]
        %v1727 = vld [vmem:[#allocation7 + $0x8a0] sm:$0xff]
        %v1728 = vld [vmem:[#allocation7 + $0x8a8] sm:$0xff]
        %v1729 = vld [vmem:[#allocation7 + $0x8b0] sm:$0xff]
        %v1730 = vld [vmem:[#allocation7 + $0x8b8] sm:$0xff]
        %v1731 = vld [vmem:[#allocation7 + $0x8c0] sm:$0xff]
        %v1732 = vld [vmem:[#allocation7 + $0x8c8] sm:$0xff]
        %v1733 = vld [vmem:[#allocation7 + $0x8d0] sm:$0xff]
        %v1734 = vld [vmem:[#allocation7 + $0x8d8] sm:$0xff]
        %v1735 = vld [vmem:[#allocation7 + $0x8e0] sm:$0xff]
        %v1736 = vld [vmem:[#allocation7 + $0x8e8] sm:$0xff]
        %v1737 = vld [vmem:[#allocation7 + $0x8f0] sm:$0xff]
        %v1738 = vld [vmem:[#allocation7 + $0x8f8] sm:$0xff]
        %v1739 = vld [vmem:[#allocation8] sm:$0x3f]
        %v1741 = vlaneseq
        %v1742 = vshrl.u32 %v1741, 7
        %v1743 = vsub.s32 0, %v1742
        %v1744 = vrot.slane %v1739, %v1743
        %v1745 = vlaneseq
        %v1746 = vshrl.u32 %v1745, 7
        %v1747 = vsub.s32 1, %v1746
        %v1748 = vrot.slane %v1739, %v1747
        %v1749 = vlaneseq
        %v1750 = vshrl.u32 %v1749, 7
        %v1751 = vsub.s32 2, %v1750
        %v1752 = vrot.slane %v1739, %v1751
        %v1753 = vlaneseq
        %v1754 = vshrl.u32 %v1753, 7
        %v1755 = vsub.s32 3, %v1754
        %v1756 = vrot.slane %v1739, %v1755
        %v1757 = vlaneseq
        %v1758 = vshrl.u32 %v1757, 7
        %v1759 = vsub.s32 4, %v1758
        %v1760 = vrot.slane %v1739, %v1759
        %v1761 = vlaneseq
        %v1762 = vshrl.u32 %v1761, 7
        %v1763 = vsub.s32 5, %v1762
        %v1764 = vrot.slane %v1739, %v1763
        %v1819 = vunpack.c.l.b16 %v1403
        %v1820 = vunpack.c.l.b16 %v1404
        %v1821 = vunpack.c.l.b16 %v1405
        %v1822 = vunpack.c.l.b16 %v1406
        %v1823 = vunpack.c.l.b16 %v1407
        %v1824 = vunpack.c.l.b16 %v1408
        %v1825 = vunpack.c.l.b16 %v1409
        %v1826 = vunpack.c.l.b16 %v1410
        %v1827 = vunpack.c.l.b16 %v1411
        %v1828 = vunpack.c.l.b16 %v1412
        %v1829 = vunpack.c.l.b16 %v1413
        %v1830 = vunpack.c.l.b16 %v1414
        %v1831 = vunpack.c.l.b16 %v1415
        %v1832 = vunpack.c.l.b16 %v1416
        %v1833 = vunpack.c.l.b16 %v1417
        %v1834 = vunpack.c.l.b16 %v1418
        %v1835 = vunpack.c.l.b16 %v1419
        %v1836 = vunpack.c.l.b16 %v1420
        %v1837 = vunpack.c.l.b16 %v1421
        %v1838 = vunpack.c.l.b16 %v1422
        %v1839 = vunpack.c.l.b16 %v1423
        %v1840 = vunpack.c.l.b16 %v1424
        %v1841 = vunpack.c.l.b16 %v1425
        %v1842 = vunpack.c.l.b16 %v1426
        %v1843 = vunpack.c.l.b16 %v1427
        %v1844 = vunpack.c.l.b16 %v1428
        %v1845 = vunpack.c.l.b16 %v1429
        %v1846 = vunpack.c.l.b16 %v1430
        %v1847 = vunpack.c.l.b16 %v1431
        %v1848 = vunpack.c.l.b16 %v1432
        %v1849 = vunpack.c.l.b16 %v1433
        %v1850 = vunpack.c.l.b16 %v1434
        %v1851 = vunpack.c.l.b16 %v1435
        %v1852 = vunpack.c.l.b16 %v1436
        %v1853 = vunpack.c.l.b16 %v1437
        %v1854 = vunpack.c.l.b16 %v1438
        %v1855 = vunpack.c.l.b16 %v1439
        %v1856 = vunpack.c.l.b16 %v1440
        %v1857 = vunpack.c.l.b16 %v1441
        %v1858 = vunpack.c.l.b16 %v1442
        %v1859 = vunpack.c.l.b16 %v1443
        %v1860 = vunpack.c.l.b16 %v1444
        %v1861 = vunpack.c.l.b16 %v1445
        %v1862 = vunpack.c.l.b16 %v1446
        %v1863 = vunpack.c.l.b16 %v1447
        %v1864 = vunpack.c.l.b16 %v1448
        %v1865 = vunpack.c.l.b16 %v1449
        %v1866 = vunpack.c.l.b16 %v1450
        %v1867 = vrot.slane %v1825, 7
        %vm1868 = vcmask 1041409
        %v1869 = vsel %vm1868, %v1867, %v1819
        %v1870 = vrot.slane %v1831, 6
        %vm1871 = vcmask 1042434
        %v1872 = vsel %vm1871, %v1870, %v1869
        %v1873 = vrot.slane %v1837, 5
        %vm1874 = vcmask 1043459
        %v1875 = vsel %vm1874, %v1873, %v1872
        %v1876 = vrot.slane %v1843, 4
        %vm1877 = vcmask 1044484
        %v1878 = vsel %vm1877, %v1876, %v1875
        %v1879 = vrot.slane %v1849, 3
        %vm1880 = vcmask 1045509
        %v1881 = vsel %vm1880, %v1879, %v1878
        %v1882 = vrot.slane %v1855, 2
        %vm1883 = vcmask 1046534
        %v1884 = vsel %vm1883, %v1882, %v1881
        %v1885 = vrot.slane %v1861, 1
        %vm1886 = vcmask 1047559
        %v1887 = vsel %vm1886, %v1885, %v1884
        %v1888 = vrot.slane %v1826, 7
        %v1889 = vsel %vm1868, %v1888, %v1820
        %v1890 = vrot.slane %v1832, 6
        %v1891 = vsel %vm1871, %v1890, %v1889
        %v1892 = vrot.slane %v1838, 5
        %v1893 = vsel %vm1874, %v1892, %v1891
        %v1894 = vrot.slane %v1844, 4
        %v1895 = vsel %vm1877, %v1894, %v1893
        %v1896 = vrot.slane %v1850, 3
        %v1897 = vsel %vm1880, %v1896, %v1895
        %v1898 = vrot.slane %v1856, 2
        %v1899 = vsel %vm1883, %v1898, %v1897
        %v1900 = vrot.slane %v1862, 1
        %v1901 = vsel %vm1886, %v1900, %v1899
        %v1902 = vrot.slane %v1827, 7
        %v1903 = vsel %vm1868, %v1902, %v1821
        %v1904 = vrot.slane %v1833, 6
        %v1905 = vsel %vm1871, %v1904, %v1903
        %v1906 = vrot.slane %v1839, 5
        %v1907 = vsel %vm1874, %v1906, %v1905
        %v1908 = vrot.slane %v1845, 4
        %v1909 = vsel %vm1877, %v1908, %v1907
        %v1910 = vrot.slane %v1851, 3
        %v1911 = vsel %vm1880, %v1910, %v1909
        %v1912 = vrot.slane %v1857, 2
        %v1913 = vsel %vm1883, %v1912, %v1911
        %v1914 = vrot.slane %v1863, 1
        %v1915 = vsel %vm1886, %v1914, %v1913
        %v1916 = vrot.slane %v1828, 7
        %v1917 = vsel %vm1868, %v1916, %v1822
        %v1918 = vrot.slane %v1834, 6
        %v1919 = vsel %vm1871, %v1918, %v1917
        %v1920 = vrot.slane %v1840, 5
        %v1921 = vsel %vm1874, %v1920, %v1919
        %v1922 = vrot.slane %v1846, 4
        %v1923 = vsel %vm1877, %v1922, %v1921
        %v1924 = vrot.slane %v1852, 3
        %v1925 = vsel %vm1880, %v1924, %v1923
        %v1926 = vrot.slane %v1858, 2
        %v1927 = vsel %vm1883, %v1926, %v1925
        %v1928 = vrot.slane %v1864, 1
        %v1929 = vsel %vm1886, %v1928, %v1927
        %v1930 = vrot.slane %v1829, 7
        %v1931 = vsel %vm1868, %v1930, %v1823
        %v1932 = vrot.slane %v1835, 6
        %v1933 = vsel %vm1871, %v1932, %v1931
        %v1934 = vrot.slane %v1841, 5
        %v1935 = vsel %vm1874, %v1934, %v1933
        %v1936 = vrot.slane %v1847, 4
        %v1937 = vsel %vm1877, %v1936, %v1935
        %v1938 = vrot.slane %v1853, 3
        %v1939 = vsel %vm1880, %v1938, %v1937
        %v1940 = vrot.slane %v1859, 2
        %v1941 = vsel %vm1883, %v1940, %v1939
        %v1942 = vrot.slane %v1865, 1
        %v1943 = vsel %vm1886, %v1942, %v1941
        %v1944 = vrot.slane %v1830, 7
        %v1945 = vsel %vm1868, %v1944, %v1824
        %v1946 = vrot.slane %v1836, 6
        %v1947 = vsel %vm1871, %v1946, %v1945
        %v1948 = vrot.slane %v1842, 5
        %v1949 = vsel %vm1874, %v1948, %v1947
        %v1950 = vrot.slane %v1848, 4
        %v1951 = vsel %vm1877, %v1950, %v1949
        %v1952 = vrot.slane %v1854, 3
        %v1953 = vsel %vm1880, %v1952, %v1951
        %v1954 = vrot.slane %v1860, 2
        %v1955 = vsel %vm1883, %v1954, %v1953
        %v1956 = vrot.slane %v1866, 1
        %v1957 = vsel %vm1886, %v1956, %v1955
        %v1958 = vpack.c.b16 %v1887, %v1887
        %v1959 = vpack.c.b16 %v1901, %v1901
        %v1960 = vpack.c.b16 %v1915, %v1915
        %v1961 = vpack.c.b16 %v1929, %v1929
        %v1962 = vpack.c.b16 %v1943, %v1943
        %v1963 = vpack.c.b16 %v1957, %v1957
        %v2258 = vunpack.c.l.b16 %v1451
        %v2259 = vunpack.c.h.b16 %v1451
        %v2260 = vunpack.c.l.b16 %v1452
        %v2261 = vunpack.c.h.b16 %v1452
        %v2262 = vunpack.c.l.b16 %v1453
        %v2263 = vunpack.c.h.b16 %v1453
        %v2264 = vunpack.c.l.b16 %v1454
        %v2265 = vunpack.c.h.b16 %v1454
        %v2266 = vunpack.c.l.b16 %v1455
        %v2267 = vunpack.c.h.b16 %v1455
        %v2268 = vunpack.c.l.b16 %v1456
        %v2269 = vunpack.c.h.b16 %v1456
        %v2270 = vunpack.c.l.b16 %v1457
        %v2271 = vunpack.c.h.b16 %v1457
        %v2272 = vunpack.c.l.b16 %v1458
        %v2273 = vunpack.c.h.b16 %v1458
        %v2274 = vunpack.c.l.b16 %v1459
        %v2275 = vunpack.c.h.b16 %v1459
        %v2276 = vunpack.c.l.b16 %v1460
        %v2277 = vunpack.c.h.b16 %v1460
        %v2278 = vunpack.c.l.b16 %v1461
        %v2279 = vunpack.c.h.b16 %v1461
        %v2280 = vunpack.c.l.b16 %v1462
        %v2281 = vunpack.c.h.b16 %v1462
        %v2282 = vunpack.c.l.b16 %v1463
        %v2283 = vunpack.c.h.b16 %v1463
        %v2284 = vunpack.c.l.b16 %v1464
        %v2285 = vunpack.c.h.b16 %v1464
        %v2286 = vunpack.c.l.b16 %v1465
        %v2287 = vunpack.c.h.b16 %v1465
        %v2288 = vunpack.c.l.b16 %v1466
        %v2289 = vunpack.c.h.b16 %v1466
        %v2290 = vunpack.c.l.b16 %v1467
        %v2291 = vunpack.c.h.b16 %v1467
        %v2292 = vunpack.c.l.b16 %v1468
        %v2293 = vunpack.c.h.b16 %v1468
        %v2294 = vunpack.c.l.b16 %v1469
        %v2295 = vunpack.c.h.b16 %v1469
        %v2296 = vunpack.c.l.b16 %v1470
        %v2297 = vunpack.c.h.b16 %v1470
        %v2298 = vunpack.c.l.b16 %v1471
        %v2299 = vunpack.c.h.b16 %v1471
        %v2300 = vunpack.c.l.b16 %v1472
        %v2301 = vunpack.c.h.b16 %v1472
        %v2302 = vunpack.c.l.b16 %v1473
        %v2303 = vunpack.c.h.b16 %v1473
        %v2304 = vunpack.c.l.b16 %v1474
        %v2305 = vunpack.c.h.b16 %v1474
        %v2306 = vunpack.c.l.b16 %v1475
        %v2307 = vunpack.c.h.b16 %v1475
        %v2308 = vunpack.c.l.b16 %v1476
        %v2309 = vunpack.c.h.b16 %v1476
        %v2310 = vunpack.c.l.b16 %v1477
        %v2311 = vunpack.c.h.b16 %v1477
        %v2312 = vunpack.c.l.b16 %v1478
        %v2313 = vunpack.c.h.b16 %v1478
        %v2314 = vunpack.c.l.b16 %v1479
        %v2315 = vunpack.c.h.b16 %v1479
        %v2316 = vunpack.c.l.b16 %v1480
        %v2317 = vunpack.c.h.b16 %v1480
        %v2318 = vunpack.c.l.b16 %v1481
        %v2319 = vunpack.c.h.b16 %v1481
        %v2320 = vunpack.c.l.b16 %v1482
        %v2321 = vunpack.c.h.b16 %v1482
        %v2322 = vunpack.c.l.b16 %v1483
        %v2323 = vunpack.c.h.b16 %v1483
        %v2324 = vunpack.c.l.b16 %v1484
        %v2325 = vunpack.c.h.b16 %v1484
        %v2326 = vunpack.c.l.b16 %v1485
        %v2327 = vunpack.c.h.b16 %v1485
        %v2328 = vunpack.c.l.b16 %v1486
        %v2329 = vunpack.c.h.b16 %v1486
        %v2330 = vunpack.c.l.b16 %v1487
        %v2331 = vunpack.c.h.b16 %v1487
        %v2332 = vunpack.c.l.b16 %v1488
        %v2333 = vunpack.c.h.b16 %v1488
        %v2334 = vunpack.c.l.b16 %v1489
        %v2335 = vunpack.c.h.b16 %v1489
        %v2336 = vunpack.c.l.b16 %v1490
        %v2337 = vunpack.c.h.b16 %v1490
        %v2338 = vunpack.c.l.b16 %v1491
        %v2339 = vunpack.c.h.b16 %v1491
        %v2340 = vunpack.c.l.b16 %v1492
        %v2341 = vunpack.c.h.b16 %v1492
        %v2342 = vunpack.c.l.b16 %v1493
        %v2343 = vunpack.c.h.b16 %v1493
        %v2344 = vunpack.c.l.b16 %v1494
        %v2345 = vunpack.c.h.b16 %v1494
        %v2346 = vunpack.c.l.b16 %v1495
        %v2347 = vunpack.c.h.b16 %v1495
        %v2348 = vunpack.c.l.b16 %v1496
        %v2349 = vunpack.c.h.b16 %v1496
        %v2350 = vunpack.c.l.b16 %v1497
        %v2351 = vunpack.c.h.b16 %v1497
        %v2352 = vunpack.c.l.b16 %v1498
        %v2353 = vunpack.c.h.b16 %v1498
        %v2354 = vunpack.c.l.b16 %v1499
        %v2355 = vunpack.c.h.b16 %v1499
        %v2356 = vunpack.c.l.b16 %v1500
        %v2357 = vunpack.c.h.b16 %v1500
        %v2358 = vunpack.c.l.b16 %v1501
        %v2359 = vunpack.c.h.b16 %v1501
        %v2360 = vunpack.c.l.b16 %v1502
        %v2361 = vunpack.c.h.b16 %v1502
        %v2362 = vunpack.c.l.b16 %v1503
        %v2363 = vunpack.c.h.b16 %v1503
        %v2364 = vunpack.c.l.b16 %v1504
        %v2365 = vunpack.c.h.b16 %v1504
        %v2366 = vunpack.c.l.b16 %v1505
        %v2367 = vunpack.c.h.b16 %v1505
        %v2368 = vunpack.c.l.b16 %v1506
        %v2369 = vunpack.c.h.b16 %v1506
        %v2370 = vunpack.c.l.b16 %v1507
        %v2371 = vunpack.c.h.b16 %v1507
        %v2372 = vunpack.c.l.b16 %v1508
        %v2373 = vunpack.c.h.b16 %v1508
        %v2374 = vunpack.c.l.b16 %v1509
        %v2375 = vunpack.c.h.b16 %v1509
        %v2376 = vunpack.c.l.b16 %v1510
        %v2377 = vunpack.c.h.b16 %v1510
        %v2378 = vunpack.c.l.b16 %v1511
        %v2379 = vunpack.c.h.b16 %v1511
        %v2380 = vunpack.c.l.b16 %v1512
        %v2381 = vunpack.c.h.b16 %v1512
        %v2382 = vunpack.c.l.b16 %v1513
        %v2383 = vunpack.c.h.b16 %v1513
        %v2384 = vunpack.c.l.b16 %v1514
        %v2385 = vunpack.c.h.b16 %v1514
        %v2386 = vunpack.c.l.b16 %v1515
        %v2387 = vunpack.c.h.b16 %v1515
        %v2388 = vunpack.c.l.b16 %v1516
        %v2389 = vunpack.c.h.b16 %v1516
        %v2390 = vunpack.c.l.b16 %v1517
        %v2391 = vunpack.c.h.b16 %v1517
        %v2392 = vunpack.c.l.b16 %v1518
        %v2393 = vunpack.c.h.b16 %v1518
        %v2394 = vunpack.c.l.b16 %v1519
        %v2395 = vunpack.c.h.b16 %v1519
        %v2396 = vunpack.c.l.b16 %v1520
        %v2397 = vunpack.c.h.b16 %v1520
        %v2398 = vunpack.c.l.b16 %v1521
        %v2399 = vunpack.c.h.b16 %v1521
        %v2400 = vunpack.c.l.b16 %v1522
        %v2401 = vunpack.c.h.b16 %v1522
        %v2402 = vunpack.c.l.b16 %v1523
        %v2403 = vunpack.c.h.b16 %v1523
        %v2404 = vunpack.c.l.b16 %v1524
        %v2405 = vunpack.c.h.b16 %v1524
        %v2406 = vunpack.c.l.b16 %v1525
        %v2407 = vunpack.c.h.b16 %v1525
        %v2408 = vunpack.c.l.b16 %v1526
        %v2409 = vunpack.c.h.b16 %v1526
        %v2410 = vunpack.c.l.b16 %v1527
        %v2411 = vunpack.c.h.b16 %v1527
        %v2412 = vunpack.c.l.b16 %v1528
        %v2413 = vunpack.c.h.b16 %v1528
        %v2414 = vunpack.c.l.b16 %v1529
        %v2415 = vunpack.c.h.b16 %v1529
        %v2416 = vunpack.c.l.b16 %v1530
        %v2417 = vunpack.c.h.b16 %v1530
        %v2418 = vunpack.c.l.b16 %v1531
        %v2419 = vunpack.c.h.b16 %v1531
        %v2420 = vunpack.c.l.b16 %v1532
        %v2421 = vunpack.c.h.b16 %v1532
        %v2422 = vunpack.c.l.b16 %v1533
        %v2423 = vunpack.c.h.b16 %v1533
        %v2424 = vunpack.c.l.b16 %v1534
        %v2425 = vunpack.c.h.b16 %v1534
        %v2426 = vunpack.c.l.b16 %v1535
        %v2427 = vunpack.c.h.b16 %v1535
        %v2428 = vunpack.c.l.b16 %v1536
        %v2429 = vunpack.c.h.b16 %v1536
        %v2430 = vunpack.c.l.b16 %v1537
        %v2431 = vunpack.c.h.b16 %v1537
        %v2432 = vunpack.c.l.b16 %v1538
        %v2433 = vunpack.c.h.b16 %v1538
        %v2434 = vunpack.c.l.b16 %v1539
        %v2435 = vunpack.c.h.b16 %v1539
        %v2436 = vunpack.c.l.b16 %v1540
        %v2437 = vunpack.c.h.b16 %v1540
        %v2438 = vunpack.c.l.b16 %v1541
        %v2439 = vunpack.c.h.b16 %v1541
        %v2440 = vunpack.c.l.b16 %v1542
        %v2441 = vunpack.c.h.b16 %v1542
        %v2442 = vunpack.c.l.b16 %v1543
        %v2443 = vunpack.c.h.b16 %v1543
        %v2444 = vunpack.c.l.b16 %v1544
        %v2445 = vunpack.c.h.b16 %v1544
        %v2446 = vunpack.c.l.b16 %v1545
        %v2447 = vunpack.c.h.b16 %v1545
        %v2448 = vunpack.c.l.b16 %v1546
        %v2449 = vunpack.c.h.b16 %v1546
        %v2450 = vunpack.c.l.b16 %v1547
        %v2451 = vunpack.c.h.b16 %v1547
        %v2452 = vunpack.c.l.b16 %v1548
        %v2453 = vunpack.c.h.b16 %v1548
        %v2454 = vunpack.c.l.b16 %v1549
        %v2455 = vunpack.c.h.b16 %v1549
        %v2456 = vunpack.c.l.b16 %v1550
        %v2457 = vunpack.c.h.b16 %v1550
        %v2458 = vunpack.c.l.b16 %v1551
        %v2459 = vunpack.c.h.b16 %v1551
        %v2460 = vunpack.c.l.b16 %v1552
        %v2461 = vunpack.c.h.b16 %v1552
        %v2462 = vunpack.c.l.b16 %v1553
        %v2463 = vunpack.c.h.b16 %v1553
        %v2464 = vunpack.c.l.b16 %v1554
        %v2465 = vunpack.c.h.b16 %v1554
        %v2466 = vunpack.c.l.b16 %v1555
        %v2467 = vunpack.c.h.b16 %v1555
        %v2468 = vunpack.c.l.b16 %v1556
        %v2469 = vunpack.c.h.b16 %v1556
        %v2470 = vunpack.c.l.b16 %v1557
        %v2471 = vunpack.c.h.b16 %v1557
        %v2472 = vunpack.c.l.b16 %v1558
        %v2473 = vunpack.c.h.b16 %v1558
        %v2474 = vunpack.c.l.b16 %v1559
        %v2475 = vunpack.c.h.b16 %v1559
        %v2476 = vunpack.c.l.b16 %v1560
        %v2477 = vunpack.c.h.b16 %v1560
        %v2478 = vunpack.c.l.b16 %v1561
        %v2479 = vunpack.c.h.b16 %v1561
        %v2480 = vunpack.c.l.b16 %v1562
        %v2481 = vunpack.c.h.b16 %v1562
        %v2482 = vunpack.c.l.b16 %v1563
        %v2483 = vunpack.c.h.b16 %v1563
        %v2484 = vunpack.c.l.b16 %v1564
        %v2485 = vunpack.c.h.b16 %v1564
        %v2486 = vunpack.c.l.b16 %v1565
        %v2487 = vunpack.c.h.b16 %v1565
        %v2488 = vunpack.c.l.b16 %v1566
        %v2489 = vunpack.c.h.b16 %v1566
        %v2490 = vunpack.c.l.b16 %v1567
        %v2491 = vunpack.c.h.b16 %v1567
        %v2492 = vunpack.c.l.b16 %v1568
        %v2493 = vunpack.c.h.b16 %v1568
        %v2494 = vunpack.c.l.b16 %v1569
        %v2495 = vunpack.c.h.b16 %v1569
        %v2496 = vunpack.c.l.b16 %v1570
        %v2497 = vunpack.c.h.b16 %v1570
        %v2498 = vunpack.c.l.b16 %v1571
        %v2499 = vunpack.c.h.b16 %v1571
        %v2500 = vunpack.c.l.b16 %v1572
        %v2501 = vunpack.c.h.b16 %v1572
        %v2502 = vunpack.c.l.b16 %v1573
        %v2503 = vunpack.c.h.b16 %v1573
        %v2504 = vunpack.c.l.b16 %v1574
        %v2505 = vunpack.c.h.b16 %v1574
        %v2506 = vunpack.c.l.b16 %v1575
        %v2507 = vunpack.c.h.b16 %v1575
        %v2508 = vunpack.c.l.b16 %v1576
        %v2509 = vunpack.c.h.b16 %v1576
        %v2510 = vunpack.c.l.b16 %v1577
        %v2511 = vunpack.c.h.b16 %v1577
        %v2512 = vunpack.c.l.b16 %v1578
        %v2513 = vunpack.c.h.b16 %v1578
        %v2514 = vunpack.c.l.b16 %v1579
        %v2515 = vunpack.c.h.b16 %v1579
        %v2516 = vunpack.c.l.b16 %v1580
        %v2517 = vunpack.c.h.b16 %v1580
        %v2518 = vunpack.c.l.b16 %v1581
        %v2519 = vunpack.c.h.b16 %v1581
        %v2520 = vunpack.c.l.b16 %v1582
        %v2521 = vunpack.c.h.b16 %v1582
        %v2522 = vunpack.c.l.b16 %v1583
        %v2523 = vunpack.c.h.b16 %v1583
        %v2524 = vunpack.c.l.b16 %v1584
        %v2525 = vunpack.c.h.b16 %v1584
        %v2526 = vunpack.c.l.b16 %v1585
        %v2527 = vunpack.c.h.b16 %v1585
        %v2528 = vunpack.c.l.b16 %v1586
        %v2529 = vunpack.c.h.b16 %v1586
        %v2530 = vunpack.c.l.b16 %v1587
        %v2531 = vunpack.c.h.b16 %v1587
        %v2532 = vunpack.c.l.b16 %v1588
        %v2533 = vunpack.c.h.b16 %v1588
        %v2534 = vunpack.c.l.b16 %v1589
        %v2535 = vunpack.c.h.b16 %v1589
        %v2536 = vunpack.c.l.b16 %v1590
        %v2537 = vunpack.c.h.b16 %v1590
        %v2538 = vunpack.c.l.b16 %v1591
        %v2539 = vunpack.c.h.b16 %v1591
        %v2540 = vunpack.c.l.b16 %v1592
        %v2541 = vunpack.c.h.b16 %v1592
        %v2542 = vunpack.c.l.b16 %v1593
        %v2543 = vunpack.c.h.b16 %v1593
        %v2544 = vunpack.c.l.b16 %v1594
        %v2545 = vunpack.c.h.b16 %v1594
        %v2546 = vunpack.c.l.b16 %v1595
        %v2547 = vunpack.c.h.b16 %v1595
        %v2548 = vunpack.c.l.b16 %v1596
        %v2549 = vunpack.c.h.b16 %v1596
        %v2550 = vunpack.c.l.b16 %v1597
        %v2551 = vunpack.c.h.b16 %v1597
        %v2552 = vunpack.c.l.b16 %v1598
        %v2553 = vunpack.c.h.b16 %v1598
        %v2554 = vunpack.c.l.b16 %v1599
        %v2555 = vunpack.c.h.b16 %v1599
        %v2556 = vunpack.c.l.b16 %v1600
        %v2557 = vunpack.c.h.b16 %v1600
        %v2558 = vunpack.c.l.b16 %v1601
        %v2559 = vunpack.c.h.b16 %v1601
        %v2560 = vunpack.c.l.b16 %v1602
        %v2561 = vunpack.c.h.b16 %v1602
        %v2562 = vunpack.c.l.b16 %v1603
        %v2563 = vunpack.c.h.b16 %v1603
        %v2564 = vunpack.c.l.b16 %v1604
        %v2565 = vunpack.c.h.b16 %v1604
        %v2566 = vunpack.c.l.b16 %v1605
        %v2567 = vunpack.c.h.b16 %v1605
        %v2568 = vunpack.c.l.b16 %v1606
        %v2569 = vunpack.c.h.b16 %v1606
        %v2570 = vunpack.c.l.b16 %v1607
        %v2571 = vunpack.c.h.b16 %v1607
        %v2572 = vunpack.c.l.b16 %v1608
        %v2573 = vunpack.c.h.b16 %v1608
        %v2574 = vunpack.c.l.b16 %v1609
        %v2575 = vunpack.c.h.b16 %v1609
        %v2576 = vunpack.c.l.b16 %v1610
        %v2577 = vunpack.c.h.b16 %v1610
        %v2578 = vunpack.c.l.b16 %v1611
        %v2579 = vunpack.c.h.b16 %v1611
        %v2580 = vunpack.c.l.b16 %v1612
        %v2581 = vunpack.c.h.b16 %v1612
        %v2582 = vunpack.c.l.b16 %v1613
        %v2583 = vunpack.c.h.b16 %v1613
        %v2584 = vunpack.c.l.b16 %v1614
        %v2585 = vunpack.c.h.b16 %v1614
        %v2586 = vunpack.c.l.b16 %v1615
        %v2587 = vunpack.c.h.b16 %v1615
        %v2588 = vunpack.c.l.b16 %v1616
        %v2589 = vunpack.c.h.b16 %v1616
        %v2590 = vunpack.c.l.b16 %v1617
        %v2591 = vunpack.c.h.b16 %v1617
        %v2592 = vunpack.c.l.b16 %v1618
        %v2593 = vunpack.c.h.b16 %v1618
        %v2594 = vunpack.c.l.b16 %v1619
        %v2595 = vunpack.c.h.b16 %v1619
        %v2596 = vunpack.c.l.b16 %v1620
        %v2597 = vunpack.c.h.b16 %v1620
        %v2598 = vunpack.c.l.b16 %v1621
        %v2599 = vunpack.c.h.b16 %v1621
        %v2600 = vunpack.c.l.b16 %v1622
        %v2601 = vunpack.c.h.b16 %v1622
        %v2602 = vunpack.c.l.b16 %v1623
        %v2603 = vunpack.c.h.b16 %v1623
        %v2604 = vunpack.c.l.b16 %v1624
        %v2605 = vunpack.c.h.b16 %v1624
        %v2606 = vunpack.c.l.b16 %v1625
        %v2607 = vunpack.c.h.b16 %v1625
        %v2608 = vunpack.c.l.b16 %v1626
        %v2609 = vunpack.c.h.b16 %v1626
        %v2610 = vunpack.c.l.b16 %v1627
        %v2611 = vunpack.c.h.b16 %v1627
        %v2612 = vunpack.c.l.b16 %v1628
        %v2613 = vunpack.c.h.b16 %v1628
        %v2614 = vunpack.c.l.b16 %v1629
        %v2615 = vunpack.c.h.b16 %v1629
        %v2616 = vunpack.c.l.b16 %v1630
        %v2617 = vunpack.c.h.b16 %v1630
        %v2618 = vunpack.c.l.b16 %v1631
        %v2619 = vunpack.c.h.b16 %v1631
        %v2620 = vunpack.c.l.b16 %v1632
        %v2621 = vunpack.c.h.b16 %v1632
        %v2622 = vunpack.c.l.b16 %v1633
        %v2623 = vunpack.c.h.b16 %v1633
        %v2624 = vunpack.c.l.b16 %v1634
        %v2625 = vunpack.c.h.b16 %v1634
        %v2626 = vunpack.c.l.b16 %v1635
        %v2627 = vunpack.c.h.b16 %v1635
        %v2628 = vunpack.c.l.b16 %v1636
        %v2629 = vunpack.c.h.b16 %v1636
        %v2630 = vunpack.c.l.b16 %v1637
        %v2631 = vunpack.c.h.b16 %v1637
        %v2632 = vunpack.c.l.b16 %v1638
        %v2633 = vunpack.c.h.b16 %v1638
        %v2634 = vunpack.c.l.b16 %v1639
        %v2635 = vunpack.c.h.b16 %v1639
        %v2636 = vunpack.c.l.b16 %v1640
        %v2637 = vunpack.c.h.b16 %v1640
        %v2638 = vunpack.c.l.b16 %v1641
        %v2639 = vunpack.c.h.b16 %v1641
        %v2640 = vunpack.c.l.b16 %v1642
        %v2641 = vunpack.c.h.b16 %v1642
        %v2642 = vunpack.c.l.b16 %v1643
        %v2643 = vunpack.c.h.b16 %v1643
        %v2644 = vunpack.c.l.b16 %v1644
        %v2645 = vunpack.c.h.b16 %v1644
        %v2646 = vunpack.c.l.b16 %v1645
        %v2647 = vunpack.c.h.b16 %v1645
        %v2648 = vunpack.c.l.b16 %v1646
        %v2649 = vunpack.c.h.b16 %v1646
        %v2650 = vunpack.c.l.b16 %v1647
        %v2651 = vunpack.c.h.b16 %v1647
        %v2652 = vunpack.c.l.b16 %v1648
        %v2653 = vunpack.c.h.b16 %v1648
        %v2654 = vunpack.c.l.b16 %v1649
        %v2655 = vunpack.c.h.b16 %v1649
        %v2656 = vunpack.c.l.b16 %v1650
        %v2657 = vunpack.c.h.b16 %v1650
        %v2658 = vunpack.c.l.b16 %v1651
        %v2659 = vunpack.c.h.b16 %v1651
        %v2660 = vunpack.c.l.b16 %v1652
        %v2661 = vunpack.c.h.b16 %v1652
        %v2662 = vunpack.c.l.b16 %v1653
        %v2663 = vunpack.c.h.b16 %v1653
        %v2664 = vunpack.c.l.b16 %v1654
        %v2665 = vunpack.c.h.b16 %v1654
        %v2666 = vunpack.c.l.b16 %v1655
        %v2667 = vunpack.c.h.b16 %v1655
        %v2668 = vunpack.c.l.b16 %v1656
        %v2669 = vunpack.c.h.b16 %v1656
        %v2670 = vunpack.c.l.b16 %v1657
        %v2671 = vunpack.c.h.b16 %v1657
        %v2672 = vunpack.c.l.b16 %v1658
        %v2673 = vunpack.c.h.b16 %v1658
        %v2674 = vunpack.c.l.b16 %v1659
        %v2675 = vunpack.c.h.b16 %v1659
        %v2676 = vunpack.c.l.b16 %v1660
        %v2677 = vunpack.c.h.b16 %v1660
        %v2678 = vunpack.c.l.b16 %v1661
        %v2679 = vunpack.c.h.b16 %v1661
        %v2680 = vunpack.c.l.b16 %v1662
        %v2681 = vunpack.c.h.b16 %v1662
        %v2682 = vunpack.c.l.b16 %v1663
        %v2683 = vunpack.c.h.b16 %v1663
        %v2684 = vunpack.c.l.b16 %v1664
        %v2685 = vunpack.c.h.b16 %v1664
        %v2686 = vunpack.c.l.b16 %v1665
        %v2687 = vunpack.c.h.b16 %v1665
        %v2688 = vunpack.c.l.b16 %v1666
        %v2689 = vunpack.c.h.b16 %v1666
        %v2690 = vunpack.c.l.b16 %v1667
        %v2691 = vunpack.c.h.b16 %v1667
        %v2692 = vunpack.c.l.b16 %v1668
        %v2693 = vunpack.c.h.b16 %v1668
        %v2694 = vunpack.c.l.b16 %v1669
        %v2695 = vunpack.c.h.b16 %v1669
        %v2696 = vunpack.c.l.b16 %v1670
        %v2697 = vunpack.c.h.b16 %v1670
        %v2698 = vunpack.c.l.b16 %v1671
        %v2699 = vunpack.c.h.b16 %v1671
        %v2700 = vunpack.c.l.b16 %v1672
        %v2701 = vunpack.c.h.b16 %v1672
        %v2702 = vunpack.c.l.b16 %v1673
        %v2703 = vunpack.c.h.b16 %v1673
        %v2704 = vunpack.c.l.b16 %v1674
        %v2705 = vunpack.c.h.b16 %v1674
        %v2706 = vunpack.c.l.b16 %v1675
        %v2707 = vunpack.c.h.b16 %v1675
        %v2708 = vunpack.c.l.b16 %v1676
        %v2709 = vunpack.c.h.b16 %v1676
        %v2710 = vunpack.c.l.b16 %v1677
        %v2711 = vunpack.c.h.b16 %v1677
        %v2712 = vunpack.c.l.b16 %v1678
        %v2713 = vunpack.c.h.b16 %v1678
        %v2714 = vunpack.c.l.b16 %v1679
        %v2715 = vunpack.c.h.b16 %v1679
        %v2716 = vunpack.c.l.b16 %v1680
        %v2717 = vunpack.c.h.b16 %v1680
        %v2718 = vunpack.c.l.b16 %v1681
        %v2719 = vunpack.c.h.b16 %v1681
        %v2720 = vunpack.c.l.b16 %v1682
        %v2721 = vunpack.c.h.b16 %v1682
        %v2722 = vunpack.c.l.b16 %v1683
        %v2723 = vunpack.c.h.b16 %v1683
        %v2724 = vunpack.c.l.b16 %v1684
        %v2725 = vunpack.c.h.b16 %v1684
        %v2726 = vunpack.c.l.b16 %v1685
        %v2727 = vunpack.c.h.b16 %v1685
        %v2728 = vunpack.c.l.b16 %v1686
        %v2729 = vunpack.c.h.b16 %v1686
        %v2730 = vunpack.c.l.b16 %v1687
        %v2731 = vunpack.c.h.b16 %v1687
        %v2732 = vunpack.c.l.b16 %v1688
        %v2733 = vunpack.c.h.b16 %v1688
        %v2734 = vunpack.c.l.b16 %v1689
        %v2735 = vunpack.c.h.b16 %v1689
        %v2736 = vunpack.c.l.b16 %v1690
        %v2737 = vunpack.c.h.b16 %v1690
        %v2738 = vunpack.c.l.b16 %v1691
        %v2739 = vunpack.c.h.b16 %v1691
        %v2740 = vunpack.c.l.b16 %v1692
        %v2741 = vunpack.c.h.b16 %v1692
        %v2742 = vunpack.c.l.b16 %v1693
        %v2743 = vunpack.c.h.b16 %v1693
        %v2744 = vunpack.c.l.b16 %v1694
        %v2745 = vunpack.c.h.b16 %v1694
        %v2746 = vunpack.c.l.b16 %v1695
        %v2747 = vunpack.c.h.b16 %v1695
        %v2748 = vunpack.c.l.b16 %v1696
        %v2749 = vunpack.c.h.b16 %v1696
        %v2750 = vunpack.c.l.b16 %v1697
        %v2751 = vunpack.c.h.b16 %v1697
        %v2752 = vunpack.c.l.b16 %v1698
        %v2753 = vunpack.c.h.b16 %v1698
        %v2754 = vunpack.c.l.b16 %v1699
        %v2755 = vunpack.c.h.b16 %v1699
        %v2756 = vunpack.c.l.b16 %v1700
        %v2757 = vunpack.c.h.b16 %v1700
        %v2758 = vunpack.c.l.b16 %v1701
        %v2759 = vunpack.c.h.b16 %v1701
        %v2760 = vunpack.c.l.b16 %v1702
        %v2761 = vunpack.c.h.b16 %v1702
        %v2762 = vunpack.c.l.b16 %v1703
        %v2763 = vunpack.c.h.b16 %v1703
        %v2764 = vunpack.c.l.b16 %v1704
        %v2765 = vunpack.c.h.b16 %v1704
        %v2766 = vunpack.c.l.b16 %v1705
        %v2767 = vunpack.c.h.b16 %v1705
        %v2768 = vunpack.c.l.b16 %v1706
        %v2769 = vunpack.c.h.b16 %v1706
        %v2770 = vunpack.c.l.b16 %v1707
        %v2771 = vunpack.c.h.b16 %v1707
        %v2772 = vunpack.c.l.b16 %v1708
        %v2773 = vunpack.c.h.b16 %v1708
        %v2774 = vunpack.c.l.b16 %v1709
        %v2775 = vunpack.c.h.b16 %v1709
        %v2776 = vunpack.c.l.b16 %v1710
        %v2777 = vunpack.c.h.b16 %v1710
        %v2778 = vunpack.c.l.b16 %v1711
        %v2779 = vunpack.c.h.b16 %v1711
        %v2780 = vunpack.c.l.b16 %v1712
        %v2781 = vunpack.c.h.b16 %v1712
        %v2782 = vunpack.c.l.b16 %v1713
        %v2783 = vunpack.c.h.b16 %v1713
        %v2784 = vunpack.c.l.b16 %v1714
        %v2785 = vunpack.c.h.b16 %v1714
        %v2786 = vunpack.c.l.b16 %v1715
        %v2787 = vunpack.c.h.b16 %v1715
        %v2788 = vunpack.c.l.b16 %v1716
        %v2789 = vunpack.c.h.b16 %v1716
        %v2790 = vunpack.c.l.b16 %v1717
        %v2791 = vunpack.c.h.b16 %v1717
        %v2792 = vunpack.c.l.b16 %v1718
        %v2793 = vunpack.c.h.b16 %v1718
        %v2794 = vunpack.c.l.b16 %v1719
        %v2795 = vunpack.c.h.b16 %v1719
        %v2796 = vunpack.c.l.b16 %v1720
        %v2797 = vunpack.c.h.b16 %v1720
        %v2798 = vunpack.c.l.b16 %v1721
        %v2799 = vunpack.c.h.b16 %v1721
        %v2800 = vunpack.c.l.b16 %v1722
        %v2801 = vunpack.c.h.b16 %v1722
        %v2802 = vunpack.c.l.b16 %v1723
        %v2803 = vunpack.c.h.b16 %v1723
        %v2804 = vunpack.c.l.b16 %v1724
        %v2805 = vunpack.c.h.b16 %v1724
        %v2806 = vunpack.c.l.b16 %v1725
        %v2807 = vunpack.c.h.b16 %v1725
        %v2808 = vunpack.c.l.b16 %v1726
        %v2809 = vunpack.c.h.b16 %v1726
        %v2810 = vunpack.c.l.b16 %v1727
        %v2811 = vunpack.c.h.b16 %v1727
        %v2812 = vunpack.c.l.b16 %v1728
        %v2813 = vunpack.c.h.b16 %v1728
        %v2814 = vunpack.c.l.b16 %v1729
        %v2815 = vunpack.c.h.b16 %v1729
        %v2816 = vunpack.c.l.b16 %v1730
        %v2817 = vunpack.c.h.b16 %v1730
        %v2818 = vunpack.c.l.b16 %v1731
        %v2819 = vunpack.c.h.b16 %v1731
        %v2820 = vunpack.c.l.b16 %v1732
        %v2821 = vunpack.c.h.b16 %v1732
        %v2822 = vunpack.c.l.b16 %v1733
        %v2823 = vunpack.c.h.b16 %v1733
        %v2824 = vunpack.c.l.b16 %v1734
        %v2825 = vunpack.c.h.b16 %v1734
        %v2826 = vunpack.c.l.b16 %v1735
        %v2827 = vunpack.c.h.b16 %v1735
        %v2828 = vunpack.c.l.b16 %v1736
        %v2829 = vunpack.c.h.b16 %v1736
        %v2830 = vunpack.c.l.b16 %v1737
        %v2831 = vunpack.c.h.b16 %v1737
        %v2832 = vunpack.c.l.b16 %v1738
        %v2833 = vunpack.c.h.b16 %v1738
        %v2834 = vpack.c.b16 %v2264, %v2258
        %v2835 = vpack.c.b16 %v2265, %v2259
        %v2836 = vpack.c.b16 %v2266, %v2260
        %v2837 = vpack.c.b16 %v2267, %v2261
        %v2838 = vpack.c.b16 %v2268, %v2262
        %v2839 = vpack.c.b16 %v2269, %v2263
        %v2840 = vpack.c.b16 %v2276, %v2270
        %v2841 = vpack.c.b16 %v2277, %v2271
        %v2842 = vpack.c.b16 %v2278, %v2272
        %v2843 = vpack.c.b16 %v2279, %v2273
        %v2844 = vpack.c.b16 %v2280, %v2274
        %v2845 = vpack.c.b16 %v2281, %v2275
        %v2846 = vpack.c.b16 %v2288, %v2282
        %v2847 = vpack.c.b16 %v2289, %v2283
        %v2848 = vpack.c.b16 %v2290, %v2284
        %v2849 = vpack.c.b16 %v2291, %v2285
        %v2850 = vpack.c.b16 %v2292, %v2286
        %v2851 = vpack.c.b16 %v2293, %v2287
        %v2852 = vpack.c.b16 %v2300, %v2294
        %v2853 = vpack.c.b16 %v2301, %v2295
        %v2854 = vpack.c.b16 %v2302, %v2296
        %v2855 = vpack.c.b16 %v2303, %v2297
        %v2856 = vpack.c.b16 %v2304, %v2298
        %v2857 = vpack.c.b16 %v2305, %v2299
        %v2858 = vpack.c.b16 %v2312, %v2306
        %v2859 = vpack.c.b16 %v2313, %v2307
        %v2860 = vpack.c.b16 %v2314, %v2308
        %v2861 = vpack.c.b16 %v2315, %v2309
        %v2862 = vpack.c.b16 %v2316, %v2310
        %v2863 = vpack.c.b16 %v2317, %v2311
        %v2864 = vpack.c.b16 %v2324, %v2318
        %v2865 = vpack.c.b16 %v2325, %v2319
        %v2866 = vpack.c.b16 %v2326, %v2320
        %v2867 = vpack.c.b16 %v2327, %v2321
        %v2868 = vpack.c.b16 %v2328, %v2322
        %v2869 = vpack.c.b16 %v2329, %v2323
        %v2870 = vpack.c.b16 %v2336, %v2330
        %v2871 = vpack.c.b16 %v2337, %v2331
        %v2872 = vpack.c.b16 %v2338, %v2332
        %v2873 = vpack.c.b16 %v2339, %v2333
        %v2874 = vpack.c.b16 %v2340, %v2334
        %v2875 = vpack.c.b16 %v2341, %v2335
        %v2876 = vpack.c.b16 %v2348, %v2342
        %v2877 = vpack.c.b16 %v2349, %v2343
        %v2878 = vpack.c.b16 %v2350, %v2344
        %v2879 = vpack.c.b16 %v2351, %v2345
        %v2880 = vpack.c.b16 %v2352, %v2346
        %v2881 = vpack.c.b16 %v2353, %v2347
        %v2882 = vpack.c.b16 %v2360, %v2354
        %v2883 = vpack.c.b16 %v2361, %v2355
        %v2884 = vpack.c.b16 %v2362, %v2356
        %v2885 = vpack.c.b16 %v2363, %v2357
        %v2886 = vpack.c.b16 %v2364, %v2358
        %v2887 = vpack.c.b16 %v2365, %v2359
        %v2888 = vpack.c.b16 %v2372, %v2366
        %v2889 = vpack.c.b16 %v2373, %v2367
        %v2890 = vpack.c.b16 %v2374, %v2368
        %v2891 = vpack.c.b16 %v2375, %v2369
        %v2892 = vpack.c.b16 %v2376, %v2370
        %v2893 = vpack.c.b16 %v2377, %v2371
        %v2894 = vpack.c.b16 %v2384, %v2378
        %v2895 = vpack.c.b16 %v2385, %v2379
        %v2896 = vpack.c.b16 %v2386, %v2380
        %v2897 = vpack.c.b16 %v2387, %v2381
        %v2898 = vpack.c.b16 %v2388, %v2382
        %v2899 = vpack.c.b16 %v2389, %v2383
        %v2900 = vpack.c.b16 %v2396, %v2390
        %v2901 = vpack.c.b16 %v2397, %v2391
        %v2902 = vpack.c.b16 %v2398, %v2392
        %v2903 = vpack.c.b16 %v2399, %v2393
        %v2904 = vpack.c.b16 %v2400, %v2394
        %v2905 = vpack.c.b16 %v2401, %v2395
        %v2906 = vpack.c.b16 %v2408, %v2402
        %v2907 = vpack.c.b16 %v2409, %v2403
        %v2908 = vpack.c.b16 %v2410, %v2404
        %v2909 = vpack.c.b16 %v2411, %v2405
        %v2910 = vpack.c.b16 %v2412, %v2406
        %v2911 = vpack.c.b16 %v2413, %v2407
        %v2912 = vpack.c.b16 %v2420, %v2414
        %v2913 = vpack.c.b16 %v2421, %v2415
        %v2914 = vpack.c.b16 %v2422, %v2416
        %v2915 = vpack.c.b16 %v2423, %v2417
        %v2916 = vpack.c.b16 %v2424, %v2418
        %v2917 = vpack.c.b16 %v2425, %v2419
        %v2918 = vpack.c.b16 %v2432, %v2426
        %v2919 = vpack.c.b16 %v2433, %v2427
        %v2920 = vpack.c.b16 %v2434, %v2428
        %v2921 = vpack.c.b16 %v2435, %v2429
        %v2922 = vpack.c.b16 %v2436, %v2430
        %v2923 = vpack.c.b16 %v2437, %v2431
        %v2924 = vpack.c.b16 %v2444, %v2438
        %v2925 = vpack.c.b16 %v2445, %v2439
        %v2926 = vpack.c.b16 %v2446, %v2440
        %v2927 = vpack.c.b16 %v2447, %v2441
        %v2928 = vpack.c.b16 %v2448, %v2442
        %v2929 = vpack.c.b16 %v2449, %v2443
        %v2930 = vpack.c.b16 %v2456, %v2450
        %v2931 = vpack.c.b16 %v2457, %v2451
        %v2932 = vpack.c.b16 %v2458, %v2452
        %v2933 = vpack.c.b16 %v2459, %v2453
        %v2934 = vpack.c.b16 %v2460, %v2454
        %v2935 = vpack.c.b16 %v2461, %v2455
        %v2936 = vpack.c.b16 %v2468, %v2462
        %v2937 = vpack.c.b16 %v2469, %v2463
        %v2938 = vpack.c.b16 %v2470, %v2464
        %v2939 = vpack.c.b16 %v2471, %v2465
        %v2940 = vpack.c.b16 %v2472, %v2466
        %v2941 = vpack.c.b16 %v2473, %v2467
        %v2942 = vpack.c.b16 %v2480, %v2474
        %v2943 = vpack.c.b16 %v2481, %v2475
        %v2944 = vpack.c.b16 %v2482, %v2476
        %v2945 = vpack.c.b16 %v2483, %v2477
        %v2946 = vpack.c.b16 %v2484, %v2478
        %v2947 = vpack.c.b16 %v2485, %v2479
        %v2948 = vpack.c.b16 %v2492, %v2486
        %v2949 = vpack.c.b16 %v2493, %v2487
        %v2950 = vpack.c.b16 %v2494, %v2488
        %v2951 = vpack.c.b16 %v2495, %v2489
        %v2952 = vpack.c.b16 %v2496, %v2490
        %v2953 = vpack.c.b16 %v2497, %v2491
        %v2954 = vpack.c.b16 %v2504, %v2498
        %v2955 = vpack.c.b16 %v2505, %v2499
        %v2956 = vpack.c.b16 %v2506, %v2500
        %v2957 = vpack.c.b16 %v2507, %v2501
        %v2958 = vpack.c.b16 %v2508, %v2502
        %v2959 = vpack.c.b16 %v2509, %v2503
        %v2960 = vpack.c.b16 %v2516, %v2510
        %v2961 = vpack.c.b16 %v2517, %v2511
        %v2962 = vpack.c.b16 %v2518, %v2512
        %v2963 = vpack.c.b16 %v2519, %v2513
        %v2964 = vpack.c.b16 %v2520, %v2514
        %v2965 = vpack.c.b16 %v2521, %v2515
        %v2966 = vpack.c.b16 %v2528, %v2522
        %v2967 = vpack.c.b16 %v2529, %v2523
        %v2968 = vpack.c.b16 %v2530, %v2524
        %v2969 = vpack.c.b16 %v2531, %v2525
        %v2970 = vpack.c.b16 %v2532, %v2526
        %v2971 = vpack.c.b16 %v2533, %v2527
        %v2972 = vpack.c.b16 %v2540, %v2534
        %v2973 = vpack.c.b16 %v2541, %v2535
        %v2974 = vpack.c.b16 %v2542, %v2536
        %v2975 = vpack.c.b16 %v2543, %v2537
        %v2976 = vpack.c.b16 %v2544, %v2538
        %v2977 = vpack.c.b16 %v2545, %v2539
        %v2978 = vpack.c.b16 %v2552, %v2546
        %v2979 = vpack.c.b16 %v2553, %v2547
        %v2980 = vpack.c.b16 %v2554, %v2548
        %v2981 = vpack.c.b16 %v2555, %v2549
        %v2982 = vpack.c.b16 %v2556, %v2550
        %v2983 = vpack.c.b16 %v2557, %v2551
        %v2984 = vpack.c.b16 %v2564, %v2558
        %v2985 = vpack.c.b16 %v2565, %v2559
        %v2986 = vpack.c.b16 %v2566, %v2560
        %v2987 = vpack.c.b16 %v2567, %v2561
        %v2988 = vpack.c.b16 %v2568, %v2562
        %v2989 = vpack.c.b16 %v2569, %v2563
        %v2990 = vpack.c.b16 %v2576, %v2570
        %v2991 = vpack.c.b16 %v2577, %v2571
        %v2992 = vpack.c.b16 %v2578, %v2572
        %v2993 = vpack.c.b16 %v2579, %v2573
        %v2994 = vpack.c.b16 %v2580, %v2574
        %v2995 = vpack.c.b16 %v2581, %v2575
        %v2996 = vpack.c.b16 %v2588, %v2582
        %v2997 = vpack.c.b16 %v2589, %v2583
        %v2998 = vpack.c.b16 %v2590, %v2584
        %v2999 = vpack.c.b16 %v2591, %v2585
        %v3000 = vpack.c.b16 %v2592, %v2586
        %v3001 = vpack.c.b16 %v2593, %v2587
        %v3002 = vpack.c.b16 %v2600, %v2594
        %v3003 = vpack.c.b16 %v2601, %v2595
        %v3004 = vpack.c.b16 %v2602, %v2596
        %v3005 = vpack.c.b16 %v2603, %v2597
        %v3006 = vpack.c.b16 %v2604, %v2598
        %v3007 = vpack.c.b16 %v2605, %v2599
        %v3008 = vpack.c.b16 %v2612, %v2606
        %v3009 = vpack.c.b16 %v2613, %v2607
        %v3010 = vpack.c.b16 %v2614, %v2608
        %v3011 = vpack.c.b16 %v2615, %v2609
        %v3012 = vpack.c.b16 %v2616, %v2610
        %v3013 = vpack.c.b16 %v2617, %v2611
        %v3014 = vpack.c.b16 %v2624, %v2618
        %v3015 = vpack.c.b16 %v2625, %v2619
        %v3016 = vpack.c.b16 %v2626, %v2620
        %v3017 = vpack.c.b16 %v2627, %v2621
        %v3018 = vpack.c.b16 %v2628, %v2622
        %v3019 = vpack.c.b16 %v2629, %v2623
        %v3020 = vpack.c.b16 %v2636, %v2630
        %v3021 = vpack.c.b16 %v2637, %v2631
        %v3022 = vpack.c.b16 %v2638, %v2632
        %v3023 = vpack.c.b16 %v2639, %v2633
        %v3024 = vpack.c.b16 %v2640, %v2634
        %v3025 = vpack.c.b16 %v2641, %v2635
        %v3026 = vpack.c.b16 %v2648, %v2642
        %v3027 = vpack.c.b16 %v2649, %v2643
        %v3028 = vpack.c.b16 %v2650, %v2644
        %v3029 = vpack.c.b16 %v2651, %v2645
        %v3030 = vpack.c.b16 %v2652, %v2646
        %v3031 = vpack.c.b16 %v2653, %v2647
        %v3032 = vpack.c.b16 %v2660, %v2654
        %v3033 = vpack.c.b16 %v2661, %v2655
        %v3034 = vpack.c.b16 %v2662, %v2656
        %v3035 = vpack.c.b16 %v2663, %v2657
        %v3036 = vpack.c.b16 %v2664, %v2658
        %v3037 = vpack.c.b16 %v2665, %v2659
        %v3038 = vpack.c.b16 %v2672, %v2666
        %v3039 = vpack.c.b16 %v2673, %v2667
        %v3040 = vpack.c.b16 %v2674, %v2668
        %v3041 = vpack.c.b16 %v2675, %v2669
        %v3042 = vpack.c.b16 %v2676, %v2670
        %v3043 = vpack.c.b16 %v2677, %v2671
        %v3044 = vpack.c.b16 %v2684, %v2678
        %v3045 = vpack.c.b16 %v2685, %v2679
        %v3046 = vpack.c.b16 %v2686, %v2680
        %v3047 = vpack.c.b16 %v2687, %v2681
        %v3048 = vpack.c.b16 %v2688, %v2682
        %v3049 = vpack.c.b16 %v2689, %v2683
        %v3050 = vpack.c.b16 %v2696, %v2690
        %v3051 = vpack.c.b16 %v2697, %v2691
        %v3052 = vpack.c.b16 %v2698, %v2692
        %v3053 = vpack.c.b16 %v2699, %v2693
        %v3054 = vpack.c.b16 %v2700, %v2694
        %v3055 = vpack.c.b16 %v2701, %v2695
        %v3056 = vpack.c.b16 %v2708, %v2702
        %v3057 = vpack.c.b16 %v2709, %v2703
        %v3058 = vpack.c.b16 %v2710, %v2704
        %v3059 = vpack.c.b16 %v2711, %v2705
        %v3060 = vpack.c.b16 %v2712, %v2706
        %v3061 = vpack.c.b16 %v2713, %v2707
        %v3062 = vpack.c.b16 %v2720, %v2714
        %v3063 = vpack.c.b16 %v2721, %v2715
        %v3064 = vpack.c.b16 %v2722, %v2716
        %v3065 = vpack.c.b16 %v2723, %v2717
        %v3066 = vpack.c.b16 %v2724, %v2718
        %v3067 = vpack.c.b16 %v2725, %v2719
        %v3068 = vpack.c.b16 %v2732, %v2726
        %v3069 = vpack.c.b16 %v2733, %v2727
        %v3070 = vpack.c.b16 %v2734, %v2728
        %v3071 = vpack.c.b16 %v2735, %v2729
        %v3072 = vpack.c.b16 %v2736, %v2730
        %v3073 = vpack.c.b16 %v2737, %v2731
        %v3074 = vpack.c.b16 %v2744, %v2738
        %v3075 = vpack.c.b16 %v2745, %v2739
        %v3076 = vpack.c.b16 %v2746, %v2740
        %v3077 = vpack.c.b16 %v2747, %v2741
        %v3078 = vpack.c.b16 %v2748, %v2742
        %v3079 = vpack.c.b16 %v2749, %v2743
        %v3080 = vpack.c.b16 %v2756, %v2750
        %v3081 = vpack.c.b16 %v2757, %v2751
        %v3082 = vpack.c.b16 %v2758, %v2752
        %v3083 = vpack.c.b16 %v2759, %v2753
        %v3084 = vpack.c.b16 %v2760, %v2754
        %v3085 = vpack.c.b16 %v2761, %v2755
        %v3086 = vpack.c.b16 %v2768, %v2762
        %v3087 = vpack.c.b16 %v2769, %v2763
        %v3088 = vpack.c.b16 %v2770, %v2764
        %v3089 = vpack.c.b16 %v2771, %v2765
        %v3090 = vpack.c.b16 %v2772, %v2766
        %v3091 = vpack.c.b16 %v2773, %v2767
        %v3092 = vpack.c.b16 %v2780, %v2774
        %v3093 = vpack.c.b16 %v2781, %v2775
        %v3094 = vpack.c.b16 %v2782, %v2776
        %v3095 = vpack.c.b16 %v2783, %v2777
        %v3096 = vpack.c.b16 %v2784, %v2778
        %v3097 = vpack.c.b16 %v2785, %v2779
        %v3098 = vpack.c.b16 %v2792, %v2786
        %v3099 = vpack.c.b16 %v2793, %v2787
        %v3100 = vpack.c.b16 %v2794, %v2788
        %v3101 = vpack.c.b16 %v2795, %v2789
        %v3102 = vpack.c.b16 %v2796, %v2790
        %v3103 = vpack.c.b16 %v2797, %v2791
        %v3104 = vpack.c.b16 %v2804, %v2798
        %v3105 = vpack.c.b16 %v2805, %v2799
        %v3106 = vpack.c.b16 %v2806, %v2800
        %v3107 = vpack.c.b16 %v2807, %v2801
        %v3108 = vpack.c.b16 %v2808, %v2802
        %v3109 = vpack.c.b16 %v2809, %v2803
        %v3110 = vpack.c.b16 %v2816, %v2810
        %v3111 = vpack.c.b16 %v2817, %v2811
        %v3112 = vpack.c.b16 %v2818, %v2812
        %v3113 = vpack.c.b16 %v2819, %v2813
        %v3114 = vpack.c.b16 %v2820, %v2814
        %v3115 = vpack.c.b16 %v2821, %v2815
        %v3116 = vpack.c.b16 %v2828, %v2822
        %v3117 = vpack.c.b16 %v2829, %v2823
        %v3118 = vpack.c.b16 %v2830, %v2824
        %v3119 = vpack.c.b16 %v2831, %v2825
        %v3120 = vpack.c.b16 %v2832, %v2826
        %v3121 = vpack.c.b16 %v2833, %v2827
        %3410 = vmatprep.subr.bf16.mxu0 %v2835
        %3411 = vmatpush1.bf16.msra.mxu0 %v2834
        %3412 = vmatprep.subr.bf16.mxu0 %v2841
        %3413 = vmatpush1.bf16.msra.mxu0 %v2840
        %3414 = vmatprep.subr.bf16.mxu0 %v2847
        %3415 = vmatpush1.bf16.msra.mxu0 %v2846
        %3416 = vmatprep.subr.bf16.mxu0 %v2853
        %3417 = vmatpush1.bf16.msra.mxu0 %v2852
        %3418 = vmatprep.subr.bf16.mxu0 %v2859
        %3419 = vmatpush1.bf16.msra.mxu0 %v2858
        %3420 = vmatprep.subr.bf16.mxu0 %v2865
        %3421 = vmatpush1.bf16.msra.mxu0 %v2864
        %3422 = vmatprep.subr.bf16.mxu0 %v2871
        %3423 = vmatpush1.bf16.msra.mxu0 %v2870
        %3424 = vmatprep.subr.bf16.mxu0 %v2877
        %3425 = vmatpush1.bf16.msra.mxu0 %v2876
        %3426 = vmatprep.subr.bf16.mxu0 %v2883
        %3427 = vmatpush1.bf16.msra.mxu0 %v2882
        %3428 = vmatprep.subr.bf16.mxu0 %v2889
        %3429 = vmatpush1.bf16.msra.mxu0 %v2888
        %3430 = vmatprep.subr.bf16.mxu0 %v2895
        %3431 = vmatpush1.bf16.msra.mxu0 %v2894
        %3432 = vmatprep.subr.bf16.mxu0 %v2901
        %3433 = vmatpush1.bf16.msra.mxu0 %v2900
        %3434 = vmatprep.subr.bf16.mxu0 %v2907
        %3435 = vmatpush1.bf16.msra.mxu0 %v2906
        %3436 = vmatprep.subr.bf16.mxu0 %v2913
        %3437 = vmatpush1.bf16.msra.mxu0 %v2912
        %3438 = vmatprep.subr.bf16.mxu0 %v2919
        %3439 = vmatpush1.bf16.msra.mxu0 %v2918
        %3440 = vmatprep.subr.bf16.mxu0 %v2925
        %3441 = vmatpush1.bf16.msra.mxu0 %v2924
        %3442 = vmatprep.mubr.bf16.mxu0 %v1959
        %3443 = vmatmul.mubr.bf16.gmra.mrb[0].mxu0 %v1958
        %v3444 = vpop.f32.mrb[0].mxu0
        %v3445 = vadd.f32 %v1744, %v3444
        %v3446 = vpop.f32.mrb[0].mxu0
        %v3447 = vadd.f32 %v1748, %v3446
        %v3448 = vpop.f32.mrb[0].mxu0
        %v3449 = vpop.f32.mrb[0].mxu0
        %3450 = vdwg.mxu0
        %3451 = vmatprep.subr.bf16.mxu0 %v2931
        %3452 = vmatpush1.bf16.msra.mxu0 %v2930
        %3453 = vmatprep.subr.bf16.mxu0 %v2937
        %3454 = vmatpush1.bf16.msra.mxu0 %v2936
        %3455 = vmatprep.subr.bf16.mxu0 %v2943
        %3456 = vmatpush1.bf16.msra.mxu0 %v2942
        %3457 = vmatprep.subr.bf16.mxu0 %v2949
        %3458 = vmatpush1.bf16.msra.mxu0 %v2948
        %3459 = vmatprep.subr.bf16.mxu0 %v2955
        %3460 = vmatpush1.bf16.msra.mxu0 %v2954
        %3461 = vmatprep.subr.bf16.mxu0 %v2961
        %3462 = vmatpush1.bf16.msra.mxu0 %v2960
        %3463 = vmatprep.subr.bf16.mxu0 %v2967
        %3464 = vmatpush1.bf16.msra.mxu0 %v2966
        %3465 = vmatprep.subr.bf16.mxu0 %v2973
        %3466 = vmatpush1.bf16.msra.mxu0 %v2972
        %3467 = vmatprep.subr.bf16.mxu0 %v2979
        %3468 = vmatpush1.bf16.msra.mxu0 %v2978
        %3469 = vmatprep.subr.bf16.mxu0 %v2985
        %3470 = vmatpush1.bf16.msra.mxu0 %v2984
        %3471 = vmatprep.subr.bf16.mxu0 %v2991
        %3472 = vmatpush1.bf16.msra.mxu0 %v2990
        %3473 = vmatprep.subr.bf16.mxu0 %v2997
        %3474 = vmatpush1.bf16.msra.mxu0 %v2996
        %3475 = vmatprep.subr.bf16.mxu0 %v3003
        %3476 = vmatpush1.bf16.msra.mxu0 %v3002
        %3477 = vmatprep.subr.bf16.mxu0 %v3009
        %3478 = vmatpush1.bf16.msra.mxu0 %v3008
        %3479 = vmatprep.subr.bf16.mxu0 %v3015
        %3480 = vmatpush1.bf16.msra.mxu0 %v3014
        %3481 = vmatprep.subr.bf16.mxu0 %v3021
        %3482 = vmatpush1.bf16.msra.mxu0 %v3020
        %3483 = vmatprep.mubr.bf16.mxu0 %v1961
        %3484 = vmatmul.mubr.bf16.gmra.mrb[0].mxu0 %v1960
        %v3485 = vpop.f32.mrb[0].mxu0
        %v3486 = vadd.f32 %v3445, %v3485
        %v3487 = vpop.f32.mrb[0].mxu0
        %v3488 = vadd.f32 %v3447, %v3487
        %v3489 = vpop.f32.mrb[0].mxu0
        %v3490 = vpop.f32.mrb[0].mxu0
        %3491 = vdwg.mxu0
        %3492 = vmatprep.subr.bf16.mxu0 %v3027
        %3493 = vmatpush1.bf16.msra.mxu0 %v3026
        %3494 = vmatprep.subr.bf16.mxu0 %v3033
        %3495 = vmatpush1.bf16.msra.mxu0 %v3032
        %3496 = vmatprep.subr.bf16.mxu0 %v3039
        %3497 = vmatpush1.bf16.msra.mxu0 %v3038
        %3498 = vmatprep.subr.bf16.mxu0 %v3045
        %3499 = vmatpush1.bf16.msra.mxu0 %v3044
        %3500 = vmatprep.subr.bf16.mxu0 %v3051
        %3501 = vmatpush1.bf16.msra.mxu0 %v3050
        %3502 = vmatprep.subr.bf16.mxu0 %v3057
        %3503 = vmatpush1.bf16.msra.mxu0 %v3056
        %3504 = vmatprep.subr.bf16.mxu0 %v3063
        %3505 = vmatpush1.bf16.msra.mxu0 %v3062
        %3506 = vmatprep.subr.bf16.mxu0 %v3069
        %3507 = vmatpush1.bf16.msra.mxu0 %v3068
        %3508 = vmatprep.subr.bf16.mxu0 %v3075
        %3509 = vmatpush1.bf16.msra.mxu0 %v3074
        %3510 = vmatprep.subr.bf16.mxu0 %v3081
        %3511 = vmatpush1.bf16.msra.mxu0 %v3080
        %3512 = vmatprep.subr.bf16.mxu0 %v3087
        %3513 = vmatpush1.bf16.msra.mxu0 %v3086
        %3514 = vmatprep.subr.bf16.mxu0 %v3093
        %3515 = vmatpush1.bf16.msra.mxu0 %v3092
        %3516 = vmatprep.subr.bf16.mxu0 %v3099
        %3517 = vmatpush1.bf16.msra.mxu0 %v3098
        %3518 = vmatprep.subr.bf16.mxu0 %v3105
        %3519 = vmatpush1.bf16.msra.mxu0 %v3104
        %3520 = vmatprep.subr.bf16.mxu0 %v3111
        %3521 = vmatpush1.bf16.msra.mxu0 %v3110
        %3522 = vmatprep.subr.bf16.mxu0 %v3117
        %3523 = vmatpush1.bf16.msra.mxu0 %v3116
        %3524 = vmatprep.mubr.bf16.mxu0 %v1963
        %3525 = vmatmul.mubr.bf16.gmra.mrb[0].mxu0 %v1962
        %v3526 = vpop.f32.mrb[0].mxu0
        %v3527 = vadd.f32 %v3486, %v3526
        %v3528 = vpop.f32.mrb[0].mxu0
        %v3529 = vadd.f32 %v3488, %v3528
        %v3530 = vpop.f32.mrb[0].mxu0
        %v3531 = vpop.f32.mrb[0].mxu0
        %3532 = vdwg.mxu0
        %3533 = vmatprep.subr.bf16.mxu0 %v2837
        %3534 = vmatpush1.bf16.msra.mxu0 %v2836
        %3535 = vmatprep.subr.bf16.mxu0 %v2843
        %3536 = vmatpush1.bf16.msra.mxu0 %v2842
        %3537 = vmatprep.subr.bf16.mxu0 %v2849
        %3538 = vmatpush1.bf16.msra.mxu0 %v2848
        %3539 = vmatprep.subr.bf16.mxu0 %v2855
        %3540 = vmatpush1.bf16.msra.mxu0 %v2854
        %3541 = vmatprep.subr.bf16.mxu0 %v2861
        %3542 = vmatpush1.bf16.msra.mxu0 %v2860
        %3543 = vmatprep.subr.bf16.mxu0 %v2867
        %3544 = vmatpush1.bf16.msra.mxu0 %v2866
        %3545 = vmatprep.subr.bf16.mxu0 %v2873
        %3546 = vmatpush1.bf16.msra.mxu0 %v2872
        %3547 = vmatprep.subr.bf16.mxu0 %v2879
        %3548 = vmatpush1.bf16.msra.mxu0 %v2878
        %3549 = vmatprep.subr.bf16.mxu0 %v2885
        %3550 = vmatpush1.bf16.msra.mxu0 %v2884
        %3551 = vmatprep.subr.bf16.mxu0 %v2891
        %3552 = vmatpush1.bf16.msra.mxu0 %v2890
        %3553 = vmatprep.subr.bf16.mxu0 %v2897
        %3554 = vmatpush1.bf16.msra.mxu0 %v2896
        %3555 = vmatprep.subr.bf16.mxu0 %v2903
        %3556 = vmatpush1.bf16.msra.mxu0 %v2902
        %3557 = vmatprep.subr.bf16.mxu0 %v2909
        %3558 = vmatpush1.bf16.msra.mxu0 %v2908
        %3559 = vmatprep.subr.bf16.mxu0 %v2915
        %3560 = vmatpush1.bf16.msra.mxu0 %v2914
        %3561 = vmatprep.subr.bf16.mxu0 %v2921
        %3562 = vmatpush1.bf16.msra.mxu0 %v2920
        %3563 = vmatprep.subr.bf16.mxu0 %v2927
        %3564 = vmatpush1.bf16.msra.mxu0 %v2926
        %3565 = vmatprep.mubr.bf16.mxu0 %v1959
        %3566 = vmatmul.mubr.bf16.gmra.mrb[0].mxu0 %v1958
        %v3567 = vpop.f32.mrb[0].mxu0
        %v3568 = vadd.f32 %v1752, %v3567
        %v3569 = vpop.f32.mrb[0].mxu0
        %v3570 = vadd.f32 %v1756, %v3569
        %v3571 = vpop.f32.mrb[0].mxu0
        %v3572 = vpop.f32.mrb[0].mxu0
        %3573 = vdwg.mxu0
        %3574 = vmatprep.subr.bf16.mxu0 %v2933
        %3575 = vmatpush1.bf16.msra.mxu0 %v2932
        %3576 = vmatprep.subr.bf16.mxu0 %v2939
        %3577 = vmatpush1.bf16.msra.mxu0 %v2938
        %3578 = vmatprep.subr.bf16.mxu0 %v2945
        %3579 = vmatpush1.bf16.msra.mxu0 %v2944
        %3580 = vmatprep.subr.bf16.mxu0 %v2951
        %3581 = vmatpush1.bf16.msra.mxu0 %v2950
        %3582 = vmatprep.subr.bf16.mxu0 %v2957
        %3583 = vmatpush1.bf16.msra.mxu0 %v2956
        %3584 = vmatprep.subr.bf16.mxu0 %v2963
        %3585 = vmatpush1.bf16.msra.mxu0 %v2962
        %3586 = vmatprep.subr.bf16.mxu0 %v2969
        %3587 = vmatpush1.bf16.msra.mxu0 %v2968
        %3588 = vmatprep.subr.bf16.mxu0 %v2975
        %3589 = vmatpush1.bf16.msra.mxu0 %v2974
        %3590 = vmatprep.subr.bf16.mxu0 %v2981
        %3591 = vmatpush1.bf16.msra.mxu0 %v2980
        %3592 = vmatprep.subr.bf16.mxu0 %v2987
        %3593 = vmatpush1.bf16.msra.mxu0 %v2986
        %3594 = vmatprep.subr.bf16.mxu0 %v2993
        %3595 = vmatpush1.bf16.msra.mxu0 %v2992
        %3596 = vmatprep.subr.bf16.mxu0 %v2999
        %3597 = vmatpush1.bf16.msra.mxu0 %v2998
        %3598 = vmatprep.subr.bf16.mxu0 %v3005
        %3599 = vmatpush1.bf16.msra.mxu0 %v3004
        %3600 = vmatprep.subr.bf16.mxu0 %v3011
        %3601 = vmatpush1.bf16.msra.mxu0 %v3010
        %3602 = vmatprep.subr.bf16.mxu0 %v3017
        %3603 = vmatpush1.bf16.msra.mxu0 %v3016
        %3604 = vmatprep.subr.bf16.mxu0 %v3023
        %3605 = vmatpush1.bf16.msra.mxu0 %v3022
        %3606 = vmatprep.mubr.bf16.mxu0 %v1961
        %3607 = vmatmul.mubr.bf16.gmra.mrb[0].mxu0 %v1960
        %v3608 = vpop.f32.mrb[0].mxu0
        %v3609 = vadd.f32 %v3568, %v3608
        %v3610 = vpop.f32.mrb[0].mxu0
        %v3611 = vadd.f32 %v3570, %v3610
        %v3612 = vpop.f32.mrb[0].mxu0
        %v3613 = vpop.f32.mrb[0].mxu0
        %3614 = vdwg.mxu0
        %3615 = vmatprep.subr.bf16.mxu0 %v3029
        %3616 = vmatpush1.bf16.msra.mxu0 %v3028
        %3617 = vmatprep.subr.bf16.mxu0 %v3035
        %3618 = vmatpush1.bf16.msra.mxu0 %v3034
        %3619 = vmatprep.subr.bf16.mxu0 %v3041
        %3620 = vmatpush1.bf16.msra.mxu0 %v3040
        %3621 = vmatprep.subr.bf16.mxu0 %v3047
        %3622 = vmatpush1.bf16.msra.mxu0 %v3046
        %3623 = vmatprep.subr.bf16.mxu0 %v3053
        %3624 = vmatpush1.bf16.msra.mxu0 %v3052
        %3625 = vmatprep.subr.bf16.mxu0 %v3059
        %3626 = vmatpush1.bf16.msra.mxu0 %v3058
        %3627 = vmatprep.subr.bf16.mxu0 %v3065
        %3628 = vmatpush1.bf16.msra.mxu0 %v3064
        %3629 = vmatprep.subr.bf16.mxu0 %v3071
        %3630 = vmatpush1.bf16.msra.mxu0 %v3070
        %3631 = vmatprep.subr.bf16.mxu0 %v3077
        %3632 = vmatpush1.bf16.msra.mxu0 %v3076
        %3633 = vmatprep.subr.bf16.mxu0 %v3083
        %3634 = vmatpush1.bf16.msra.mxu0 %v3082
        %3635 = vmatprep.subr.bf16.mxu0 %v3089
        %3636 = vmatpush1.bf16.msra.mxu0 %v3088
        %3637 = vmatprep.subr.bf16.mxu0 %v3095
        %3638 = vmatpush1.bf16.msra.mxu0 %v3094
        %3639 = vmatprep.subr.bf16.mxu0 %v3101
        %3640 = vmatpush1.bf16.msra.mxu0 %v3100
        %3641 = vmatprep.subr.bf16.mxu0 %v3107
        %3642 = vmatpush1.bf16.msra.mxu0 %v3106
        %3643 = vmatprep.subr.bf16.mxu0 %v3113
        %3644 = vmatpush1.bf16.msra.mxu0 %v3112
        %3645 = vmatprep.subr.bf16.mxu0 %v3119
        %3646 = vmatpush1.bf16.msra.mxu0 %v3118
        %3647 = vmatprep.mubr.bf16.mxu0 %v1963
        %3648 = vmatmul.mubr.bf16.gmra.mrb[0].mxu0 %v1962
        %v3649 = vpop.f32.mrb[0].mxu0
        %v3650 = vadd.f32 %v3609, %v3649
        %v3651 = vpop.f32.mrb[0].mxu0
        %v3652 = vadd.f32 %v3611, %v3651
        %v3653 = vpop.f32.mrb[0].mxu0
        %v3654 = vpop.f32.mrb[0].mxu0
        %3655 = vdwg.mxu0
        %3656 = vmatprep.subr.bf16.mxu0 %v2839
        %3657 = vmatpush1.bf16.msra.mxu0 %v2838
        %3658 = vmatprep.subr.bf16.mxu0 %v2845
        %3659 = vmatpush1.bf16.msra.mxu0 %v2844
        %3660 = vmatprep.subr.bf16.mxu0 %v2851
        %3661 = vmatpush1.bf16.msra.mxu0 %v2850
        %3662 = vmatprep.subr.bf16.mxu0 %v2857
        %3663 = vmatpush1.bf16.msra.mxu0 %v2856
        %3664 = vmatprep.subr.bf16.mxu0 %v2863
        %3665 = vmatpush1.bf16.msra.mxu0 %v2862
        %3666 = vmatprep.subr.bf16.mxu0 %v2869
        %3667 = vmatpush1.bf16.msra.mxu0 %v2868
        %3668 = vmatprep.subr.bf16.mxu0 %v2875
        %3669 = vmatpush1.bf16.msra.mxu0 %v2874
        %3670 = vmatprep.subr.bf16.mxu0 %v2881
        %3671 = vmatpush1.bf16.msra.mxu0 %v2880
        %3672 = vmatprep.subr.bf16.mxu0 %v2887
        %3673 = vmatpush1.bf16.msra.mxu0 %v2886
        %3674 = vmatprep.subr.bf16.mxu0 %v2893
        %3675 = vmatpush1.bf16.msra.mxu0 %v2892
        %3676 = vmatprep.subr.bf16.mxu0 %v2899
        %3677 = vmatpush1.bf16.msra.mxu0 %v2898
        %3678 = vmatprep.subr.bf16.mxu0 %v2905
        %3679 = vmatpush1.bf16.msra.mxu0 %v2904
        %3680 = vmatprep.subr.bf16.mxu0 %v2911
        %3681 = vmatpush1.bf16.msra.mxu0 %v2910
        %3682 = vmatprep.subr.bf16.mxu0 %v2917
        %3683 = vmatpush1.bf16.msra.mxu0 %v2916
        %3684 = vmatprep.subr.bf16.mxu0 %v2923
        %3685 = vmatpush1.bf16.msra.mxu0 %v2922
        %3686 = vmatprep.subr.bf16.mxu0 %v2929
        %3687 = vmatpush1.bf16.msra.mxu0 %v2928
        %3688 = vmatprep.mubr.bf16.mxu0 %v1959
        %3689 = vmatmul.mubr.bf16.gmra.mrb[0].mxu0 %v1958
        %v3690 = vpop.f32.mrb[0].mxu0
        %v3691 = vadd.f32 %v1760, %v3690
        %v3692 = vpop.f32.mrb[0].mxu0
        %v3693 = vadd.f32 %v1764, %v3692
        %v3694 = vpop.f32.mrb[0].mxu0
        %v3695 = vpop.f32.mrb[0].mxu0
        %3696 = vdwg.mxu0
        %3697 = vmatprep.subr.bf16.mxu0 %v2935
        %3698 = vmatpush1.bf16.msra.mxu0 %v2934
        %3699 = vmatprep.subr.bf16.mxu0 %v2941
        %3700 = vmatpush1.bf16.msra.mxu0 %v2940
        %3701 = vmatprep.subr.bf16.mxu0 %v2947
        %3702 = vmatpush1.bf16.msra.mxu0 %v2946
        %3703 = vmatprep.subr.bf16.mxu0 %v2953
        %3704 = vmatpush1.bf16.msra.mxu0 %v2952
        %3705 = vmatprep.subr.bf16.mxu0 %v2959
        %3706 = vmatpush1.bf16.msra.mxu0 %v2958
        %3707 = vmatprep.subr.bf16.mxu0 %v2965
        %3708 = vmatpush1.bf16.msra.mxu0 %v2964
        %3709 = vmatprep.subr.bf16.mxu0 %v2971
        %3710 = vmatpush1.bf16.msra.mxu0 %v2970
        %3711 = vmatprep.subr.bf16.mxu0 %v2977
        %3712 = vmatpush1.bf16.msra.mxu0 %v2976
        %3713 = vmatprep.subr.bf16.mxu0 %v2983
        %3714 = vmatpush1.bf16.msra.mxu0 %v2982
        %3715 = vmatprep.subr.bf16.mxu0 %v2989
        %3716 = vmatpush1.bf16.msra.mxu0 %v2988
        %3717 = vmatprep.subr.bf16.mxu0 %v2995
        %3718 = vmatpush1.bf16.msra.mxu0 %v2994
        %3719 = vmatprep.subr.bf16.mxu0 %v3001
        %3720 = vmatpush1.bf16.msra.mxu0 %v3000
        %3721 = vmatprep.subr.bf16.mxu0 %v3007
        %3722 = vmatpush1.bf16.msra.mxu0 %v3006
        %3723 = vmatprep.subr.bf16.mxu0 %v3013
        %3724 = vmatpush1.bf16.msra.mxu0 %v3012
        %3725 = vmatprep.subr.bf16.mxu0 %v3019
        %3726 = vmatpush1.bf16.msra.mxu0 %v3018
        %3727 = vmatprep.subr.bf16.mxu0 %v3025
        %3728 = vmatpush1.bf16.msra.mxu0 %v3024
        %3729 = vmatprep.mubr.bf16.mxu0 %v1961
        %3730 = vmatmul.mubr.bf16.gmra.mrb[0].mxu0 %v1960
        %v3731 = vpop.f32.mrb[0].mxu0
        %v3732 = vadd.f32 %v3691, %v3731
        %v3733 = vpop.f32.mrb[0].mxu0
        %v3734 = vadd.f32 %v3693, %v3733
        %v3735 = vpop.f32.mrb[0].mxu0
        %v3736 = vpop.f32.mrb[0].mxu0
        %3737 = vdwg.mxu0
        %3738 = vmatprep.subr.bf16.mxu0 %v3031
        %3739 = vmatpush1.bf16.msra.mxu0 %v3030
        %3740 = vmatprep.subr.bf16.mxu0 %v3037
        %3741 = vmatpush1.bf16.msra.mxu0 %v3036
        %3742 = vmatprep.subr.bf16.mxu0 %v3043
        %3743 = vmatpush1.bf16.msra.mxu0 %v3042
        %3744 = vmatprep.subr.bf16.mxu0 %v3049
        %3745 = vmatpush1.bf16.msra.mxu0 %v3048
        %3746 = vmatprep.subr.bf16.mxu0 %v3055
        %3747 = vmatpush1.bf16.msra.mxu0 %v3054
        %3748 = vmatprep.subr.bf16.mxu0 %v3061
        %3749 = vmatpush1.bf16.msra.mxu0 %v3060
        %3750 = vmatprep.subr.bf16.mxu0 %v3067
        %3751 = vmatpush1.bf16.msra.mxu0 %v3066
        %3752 = vmatprep.subr.bf16.mxu0 %v3073
        %3753 = vmatpush1.bf16.msra.mxu0 %v3072
        %3754 = vmatprep.subr.bf16.mxu0 %v3079
        %3755 = vmatpush1.bf16.msra.mxu0 %v3078
        %3756 = vmatprep.subr.bf16.mxu0 %v3085
        %3757 = vmatpush1.bf16.msra.mxu0 %v3084
        %3758 = vmatprep.subr.bf16.mxu0 %v3091
        %3759 = vmatpush1.bf16.msra.mxu0 %v3090
        %3760 = vmatprep.subr.bf16.mxu0 %v3097
        %3761 = vmatpush1.bf16.msra.mxu0 %v3096
        %3762 = vmatprep.subr.bf16.mxu0 %v3103
        %3763 = vmatpush1.bf16.msra.mxu0 %v3102
        %3764 = vmatprep.subr.bf16.mxu0 %v3109
        %3765 = vmatpush1.bf16.msra.mxu0 %v3108
        %3766 = vmatprep.subr.bf16.mxu0 %v3115
        %3767 = vmatpush1.bf16.msra.mxu0 %v3114
        %3768 = vmatprep.subr.bf16.mxu0 %v3121
        %3769 = vmatpush1.bf16.msra.mxu0 %v3120
        %3770 = vmatprep.mubr.bf16.mxu0 %v1963
        %3771 = vmatmul.mubr.bf16.gmra.mrb[0].mxu0 %v1962
        %v3772 = vpop.f32.mrb[0].mxu0
        %v3773 = vadd.f32 %v3732, %v3772
        %v3774 = vpop.f32.mrb[0].mxu0
        %v3775 = vadd.f32 %v3734, %v3774
        %v3776 = vpop.f32.mrb[0].mxu0
        %v3777 = vpop.f32.mrb[0].mxu0
        %3778 = vdwg.mxu0
        %v3779 = vtanh.pop %v3527
        %v3780 = vtanh.pop %v3529
        %v3781 = vtanh.pop %v3650
        %v3782 = vtanh.pop %v3652
        %v3783 = vtanh.pop %v3773
        %v3784 = vtanh.pop %v3775
        %v3785 = vpack.c.bf16 %v3779, %v3779
        %v3786 = vpack.c.bf16 %v3780, %v3780
        %v3787 = vpack.c.bf16 %v3781, %v3781
        %v3788 = vpack.c.bf16 %v3782, %v3782
        %v3789 = vpack.c.bf16 %v3783, %v3783
        %v3790 = vpack.c.bf16 %v3784, %v3784
        %v3791 = vld [vmem:[#allocation10] sm:$0xf]
        %v3792 = vld [vmem:[#allocation10 + $0x4] sm:$0xf]
        %v3793 = vld [vmem:[#allocation10 + $0x8] sm:$0xf]
        %v3794 = vld [vmem:[#allocation10 + $0xc] sm:$0xf]
        %v3795 = vld [vmem:[#allocation10 + $0x10] sm:$0xf]
        %v3796 = vld [vmem:[#allocation10 + $0x14] sm:$0xf]
        %v3797 = vld [vmem:[#allocation10 + $0x18] sm:$0xf]
        %v3798 = vld [vmem:[#allocation10 + $0x1c] sm:$0xf]
        %v3799 = vld [vmem:[#allocation10 + $0x20] sm:$0xf]
        %v3800 = vld [vmem:[#allocation10 + $0x24] sm:$0xf]
        %v3801 = vld [vmem:[#allocation10 + $0x28] sm:$0xf]
        %v3802 = vld [vmem:[#allocation10 + $0x2c] sm:$0xf]
        %v3803 = vld [vmem:[#allocation10 + $0x30] sm:$0xf]
        %v3804 = vld [vmem:[#allocation10 + $0x34] sm:$0xf]
        %v3805 = vld [vmem:[#allocation10 + $0x38] sm:$0xf]
        %v3806 = vld [vmem:[#allocation10 + $0x3c] sm:$0xf]
        %v3807 = vld [vmem:[#allocation10 + $0x40] sm:$0xf]
        %v3808 = vld [vmem:[#allocation10 + $0x44] sm:$0xf]
        %v3809 = vld [vmem:[#allocation10 + $0x48] sm:$0xf]
        %v3810 = vld [vmem:[#allocation10 + $0x4c] sm:$0xf]
        %v3811 = vld [vmem:[#allocation10 + $0x50] sm:$0xf]
        %v3812 = vld [vmem:[#allocation10 + $0x54] sm:$0xf]
        %v3813 = vld [vmem:[#allocation10 + $0x58] sm:$0xf]
        %v3814 = vld [vmem:[#allocation10 + $0x5c] sm:$0xf]
        %v3815 = vld [vmem:[#allocation10 + $0x60] sm:$0xf]
        %v3816 = vld [vmem:[#allocation10 + $0x64] sm:$0xf]
        %v3817 = vld [vmem:[#allocation10 + $0x68] sm:$0xf]
        %v3818 = vld [vmem:[#allocation10 + $0x6c] sm:$0xf]
        %v3819 = vld [vmem:[#allocation10 + $0x70] sm:$0xf]
        %v3820 = vld [vmem:[#allocation10 + $0x74] sm:$0xf]
        %v3821 = vld [vmem:[#allocation10 + $0x78] sm:$0xf]
        %v3822 = vld [vmem:[#allocation10 + $0x7c] sm:$0xf]
        %v3823 = vld [vmem:[#allocation10 + $0x80] sm:$0xf]
        %v3824 = vld [vmem:[#allocation10 + $0x84] sm:$0xf]
        %v3825 = vld [vmem:[#allocation10 + $0x88] sm:$0xf]
        %v3826 = vld [vmem:[#allocation10 + $0x8c] sm:$0xf]
        %v3827 = vld [vmem:[#allocation10 + $0x90] sm:$0xf]
        %v3828 = vld [vmem:[#allocation10 + $0x94] sm:$0xf]
        %v3829 = vld [vmem:[#allocation10 + $0x98] sm:$0xf]
        %v3830 = vld [vmem:[#allocation10 + $0x9c] sm:$0xf]
        %v3831 = vld [vmem:[#allocation10 + $0xa0] sm:$0xf]
        %v3832 = vld [vmem:[#allocation10 + $0xa4] sm:$0xf]
        %v3833 = vld [vmem:[#allocation10 + $0xa8] sm:$0xf]
        %v3834 = vld [vmem:[#allocation10 + $0xac] sm:$0xf]
        %v3835 = vld [vmem:[#allocation10 + $0xb0] sm:$0xf]
        %v3836 = vld [vmem:[#allocation10 + $0xb4] sm:$0xf]
        %v3837 = vld [vmem:[#allocation10 + $0xb8] sm:$0xf]
        %v3838 = vld [vmem:[#allocation10 + $0xbc] sm:$0xf]
        %v3839 = vld [vmem:[#allocation10 + $0xc0] sm:$0xf]
        %v3840 = vld [vmem:[#allocation10 + $0xc4] sm:$0xf]
        %v3841 = vld [vmem:[#allocation10 + $0xc8] sm:$0xf]
        %v3842 = vld [vmem:[#allocation10 + $0xcc] sm:$0xf]
        %v3843 = vld [vmem:[#allocation10 + $0xd0] sm:$0xf]
        %v3844 = vld [vmem:[#allocation10 + $0xd4] sm:$0xf]
        %v3845 = vld [vmem:[#allocation10 + $0xd8] sm:$0xf]
        %v3846 = vld [vmem:[#allocation10 + $0xdc] sm:$0xf]
        %v3847 = vld [vmem:[#allocation10 + $0xe0] sm:$0xf]
        %v3848 = vld [vmem:[#allocation10 + $0xe4] sm:$0xf]
        %v3849 = vld [vmem:[#allocation10 + $0xe8] sm:$0xf]
        %v3850 = vld [vmem:[#allocation10 + $0xec] sm:$0xf]
        %v3851 = vld [vmem:[#allocation10 + $0xf0] sm:$0xf]
        %v3852 = vld [vmem:[#allocation10 + $0xf4] sm:$0xf]
        %v3853 = vld [vmem:[#allocation10 + $0xf8] sm:$0xf]
        %v3854 = vld [vmem:[#allocation10 + $0xfc] sm:$0xf]
        %v3855 = vld [vmem:[#allocation10 + $0x100] sm:$0xf]
        %v3856 = vld [vmem:[#allocation10 + $0x104] sm:$0xf]
        %v3857 = vld [vmem:[#allocation10 + $0x108] sm:$0xf]
        %v3858 = vld [vmem:[#allocation10 + $0x10c] sm:$0xf]
        %v3859 = vld [vmem:[#allocation10 + $0x110] sm:$0xf]
        %v3860 = vld [vmem:[#allocation10 + $0x114] sm:$0xf]
        %v3861 = vld [vmem:[#allocation10 + $0x118] sm:$0xf]
        %v3862 = vld [vmem:[#allocation10 + $0x11c] sm:$0xf]
        %v3863 = vld [vmem:[#allocation10 + $0x120] sm:$0xf]
        %v3864 = vld [vmem:[#allocation10 + $0x124] sm:$0xf]
        %v3865 = vld [vmem:[#allocation10 + $0x128] sm:$0xf]
        %v3866 = vld [vmem:[#allocation10 + $0x12c] sm:$0xf]
        %v3867 = vld [vmem:[#allocation10 + $0x130] sm:$0xf]
        %v3868 = vld [vmem:[#allocation10 + $0x134] sm:$0xf]
        %v3869 = vld [vmem:[#allocation10 + $0x138] sm:$0xf]
        %v3870 = vld [vmem:[#allocation10 + $0x13c] sm:$0xf]
        %v3871 = vld [vmem:[#allocation10 + $0x140] sm:$0xf]
        %v3872 = vld [vmem:[#allocation10 + $0x144] sm:$0xf]
        %v3873 = vld [vmem:[#allocation10 + $0x148] sm:$0xf]
        %v3874 = vld [vmem:[#allocation10 + $0x14c] sm:$0xf]
        %v3875 = vld [vmem:[#allocation10 + $0x150] sm:$0xf]
        %v3876 = vld [vmem:[#allocation10 + $0x154] sm:$0xf]
        %v3877 = vld [vmem:[#allocation10 + $0x158] sm:$0xf]
        %v3878 = vld [vmem:[#allocation10 + $0x15c] sm:$0xf]
        %v3879 = vld [vmem:[#allocation10 + $0x160] sm:$0xf]
        %v3880 = vld [vmem:[#allocation10 + $0x164] sm:$0xf]
        %v3881 = vld [vmem:[#allocation10 + $0x168] sm:$0xf]
        %v3882 = vld [vmem:[#allocation10 + $0x16c] sm:$0xf]
        %v3883 = vld [vmem:[#allocation10 + $0x170] sm:$0xf]
        %v3884 = vld [vmem:[#allocation10 + $0x174] sm:$0xf]
        %v3885 = vld [vmem:[#allocation10 + $0x178] sm:$0xf]
        %v3886 = vld [vmem:[#allocation10 + $0x17c] sm:$0xf]
        %v3887 = vld [vmem:[#allocation11] sm:$0x1]
        %v3889 = vlaneseq
        %v3890 = vshrl.u32 %v3889, 7
        %v3891 = vsub.s32 0, %v3890
        %v3892 = vrot.slane %v3887, %v3891
        %v3990 = vunpack.c.l.b16 %v3791
        %v3991 = vunpack.c.l.b16 %v3792
        %v3992 = vunpack.c.l.b16 %v3793
        %v3993 = vunpack.c.l.b16 %v3794
        %v3994 = vunpack.c.l.b16 %v3795
        %v3995 = vunpack.c.l.b16 %v3796
        %v3996 = vunpack.c.l.b16 %v3797
        %v3997 = vunpack.c.l.b16 %v3798
        %v3998 = vunpack.c.l.b16 %v3799
        %v3999 = vunpack.c.l.b16 %v3800
        %v4000 = vunpack.c.l.b16 %v3801
        %v4001 = vunpack.c.l.b16 %v3802
        %v4002 = vunpack.c.l.b16 %v3803
        %v4003 = vunpack.c.l.b16 %v3804
        %v4004 = vunpack.c.l.b16 %v3805
        %v4005 = vunpack.c.l.b16 %v3806
        %v4006 = vunpack.c.l.b16 %v3807
        %v4007 = vunpack.c.l.b16 %v3808
        %v4008 = vunpack.c.l.b16 %v3809
        %v4009 = vunpack.c.l.b16 %v3810
        %v4010 = vunpack.c.l.b16 %v3811
        %v4011 = vunpack.c.l.b16 %v3812
        %v4012 = vunpack.c.l.b16 %v3813
        %v4013 = vunpack.c.l.b16 %v3814
        %v4014 = vunpack.c.l.b16 %v3815
        %v4015 = vunpack.c.l.b16 %v3816
        %v4016 = vunpack.c.l.b16 %v3817
        %v4017 = vunpack.c.l.b16 %v3818
        %v4018 = vunpack.c.l.b16 %v3819
        %v4019 = vunpack.c.l.b16 %v3820
        %v4020 = vunpack.c.l.b16 %v3821
        %v4021 = vunpack.c.l.b16 %v3822
        %v4022 = vunpack.c.l.b16 %v3823
        %v4023 = vunpack.c.l.b16 %v3824
        %v4024 = vunpack.c.l.b16 %v3825
        %v4025 = vunpack.c.l.b16 %v3826
        %v4026 = vunpack.c.l.b16 %v3827
        %v4027 = vunpack.c.l.b16 %v3828
        %v4028 = vunpack.c.l.b16 %v3829
        %v4029 = vunpack.c.l.b16 %v3830
        %v4030 = vunpack.c.l.b16 %v3831
        %v4031 = vunpack.c.l.b16 %v3832
        %v4032 = vunpack.c.l.b16 %v3833
        %v4033 = vunpack.c.l.b16 %v3834
        %v4034 = vunpack.c.l.b16 %v3835
        %v4035 = vunpack.c.l.b16 %v3836
        %v4036 = vunpack.c.l.b16 %v3837
        %v4037 = vunpack.c.l.b16 %v3838
        %v4038 = vunpack.c.l.b16 %v3839
        %v4039 = vunpack.c.l.b16 %v3840
        %v4040 = vunpack.c.l.b16 %v3841
        %v4041 = vunpack.c.l.b16 %v3842
        %v4042 = vunpack.c.l.b16 %v3843
        %v4043 = vunpack.c.l.b16 %v3844
        %v4044 = vunpack.c.l.b16 %v3845
        %v4045 = vunpack.c.l.b16 %v3846
        %v4046 = vunpack.c.l.b16 %v3847
        %v4047 = vunpack.c.l.b16 %v3848
        %v4048 = vunpack.c.l.b16 %v3849
        %v4049 = vunpack.c.l.b16 %v3850
        %v4050 = vunpack.c.l.b16 %v3851
        %v4051 = vunpack.c.l.b16 %v3852
        %v4052 = vunpack.c.l.b16 %v3853
        %v4053 = vunpack.c.l.b16 %v3854
        %v4054 = vunpack.c.l.b16 %v3855
        %v4055 = vunpack.c.l.b16 %v3856
        %v4056 = vunpack.c.l.b16 %v3857
        %v4057 = vunpack.c.l.b16 %v3858
        %v4058 = vunpack.c.l.b16 %v3859
        %v4059 = vunpack.c.l.b16 %v3860
        %v4060 = vunpack.c.l.b16 %v3861
        %v4061 = vunpack.c.l.b16 %v3862
        %v4062 = vunpack.c.l.b16 %v3863
        %v4063 = vunpack.c.l.b16 %v3864
        %v4064 = vunpack.c.l.b16 %v3865
        %v4065 = vunpack.c.l.b16 %v3866
        %v4066 = vunpack.c.l.b16 %v3867
        %v4067 = vunpack.c.l.b16 %v3868
        %v4068 = vunpack.c.l.b16 %v3869
        %v4069 = vunpack.c.l.b16 %v3870
        %v4070 = vunpack.c.l.b16 %v3871
        %v4071 = vunpack.c.l.b16 %v3872
        %v4072 = vunpack.c.l.b16 %v3873
        %v4073 = vunpack.c.l.b16 %v3874
        %v4074 = vunpack.c.l.b16 %v3875
        %v4075 = vunpack.c.l.b16 %v3876
        %v4076 = vunpack.c.l.b16 %v3877
        %v4077 = vunpack.c.l.b16 %v3878
        %v4078 = vunpack.c.l.b16 %v3879
        %v4079 = vunpack.c.l.b16 %v3880
        %v4080 = vunpack.c.l.b16 %v3881
        %v4081 = vunpack.c.l.b16 %v3882
        %v4082 = vunpack.c.l.b16 %v3883
        %v4083 = vunpack.c.l.b16 %v3884
        %v4084 = vunpack.c.l.b16 %v3885
        %v4085 = vunpack.c.l.b16 %v3886
        %v4086 = vpack.c.b16 %v3991, %v3990
        %v4087 = vpack.c.b16 %v3993, %v3992
        %v4088 = vpack.c.b16 %v3995, %v3994
        %v4089 = vpack.c.b16 %v3997, %v3996
        %v4090 = vpack.c.b16 %v3999, %v3998
        %v4091 = vpack.c.b16 %v4001, %v4000
        %v4092 = vpack.c.b16 %v4003, %v4002
        %v4093 = vpack.c.b16 %v4005, %v4004
        %v4094 = vpack.c.b16 %v4007, %v4006
        %v4095 = vpack.c.b16 %v4009, %v4008
        %v4096 = vpack.c.b16 %v4011, %v4010
        %v4097 = vpack.c.b16 %v4013, %v4012
        %v4098 = vpack.c.b16 %v4015, %v4014
        %v4099 = vpack.c.b16 %v4017, %v4016
        %v4100 = vpack.c.b16 %v4019, %v4018
        %v4101 = vpack.c.b16 %v4021, %v4020
        %v4102 = vpack.c.b16 %v4023, %v4022
        %v4103 = vpack.c.b16 %v4025, %v4024
        %v4104 = vpack.c.b16 %v4027, %v4026
        %v4105 = vpack.c.b16 %v4029, %v4028
        %v4106 = vpack.c.b16 %v4031, %v4030
        %v4107 = vpack.c.b16 %v4033, %v4032
        %v4108 = vpack.c.b16 %v4035, %v4034
        %v4109 = vpack.c.b16 %v4037, %v4036
        %v4110 = vpack.c.b16 %v4039, %v4038
        %v4111 = vpack.c.b16 %v4041, %v4040
        %v4112 = vpack.c.b16 %v4043, %v4042
        %v4113 = vpack.c.b16 %v4045, %v4044
        %v4114 = vpack.c.b16 %v4047, %v4046
        %v4115 = vpack.c.b16 %v4049, %v4048
        %v4116 = vpack.c.b16 %v4051, %v4050
        %v4117 = vpack.c.b16 %v4053, %v4052
        %v4118 = vpack.c.b16 %v4055, %v4054
        %v4119 = vpack.c.b16 %v4057, %v4056
        %v4120 = vpack.c.b16 %v4059, %v4058
        %v4121 = vpack.c.b16 %v4061, %v4060
        %v4122 = vpack.c.b16 %v4063, %v4062
        %v4123 = vpack.c.b16 %v4065, %v4064
        %v4124 = vpack.c.b16 %v4067, %v4066
        %v4125 = vpack.c.b16 %v4069, %v4068
        %v4126 = vpack.c.b16 %v4071, %v4070
        %v4127 = vpack.c.b16 %v4073, %v4072
        %v4128 = vpack.c.b16 %v4075, %v4074
        %v4129 = vpack.c.b16 %v4077, %v4076
        %v4130 = vpack.c.b16 %v4079, %v4078
        %v4131 = vpack.c.b16 %v4081, %v4080
        %v4132 = vpack.c.b16 %v4083, %v4082
        %v4133 = vpack.c.b16 %v4085, %v4084
        %4182 = vmatprep.subr.bf16.mxu0 0
        %4183 = vmatpush1.bf16.msra.mxu0 %v4086
        %4184 = vmatprep.subr.bf16.mxu0 0
        %4185 = vmatpush1.bf16.msra.mxu0 %v4087
        %4186 = vmatprep.subr.bf16.mxu0 0
        %4187 = vmatpush1.bf16.msra.mxu0 %v4088
        %4188 = vmatprep.subr.bf16.mxu0 0
        %4189 = vmatpush1.bf16.msra.mxu0 %v4089
        %4190 = vmatprep.subr.bf16.mxu0 0
        %4191 = vmatpush1.bf16.msra.mxu0 %v4090
        %4192 = vmatprep.subr.bf16.mxu0 0
        %4193 = vmatpush1.bf16.msra.mxu0 %v4091
        %4194 = vmatprep.subr.bf16.mxu0 0
        %4195 = vmatpush1.bf16.msra.mxu0 %v4092
        %4196 = vmatprep.subr.bf16.mxu0 0
        %4197 = vmatpush1.bf16.msra.mxu0 %v4093
        %4198 = vmatprep.subr.bf16.mxu0 0
        %4199 = vmatpush1.bf16.msra.mxu0 %v4094
        %4200 = vmatprep.subr.bf16.mxu0 0
        %4201 = vmatpush1.bf16.msra.mxu0 %v4095
        %4202 = vmatprep.subr.bf16.mxu0 0
        %4203 = vmatpush1.bf16.msra.mxu0 %v4096
        %4204 = vmatprep.subr.bf16.mxu0 0
        %4205 = vmatpush1.bf16.msra.mxu0 %v4097
        %4206 = vmatprep.subr.bf16.mxu0 0
        %4207 = vmatpush1.bf16.msra.mxu0 %v4098
        %4208 = vmatprep.subr.bf16.mxu0 0
        %4209 = vmatpush1.bf16.msra.mxu0 %v4099
        %4210 = vmatprep.subr.bf16.mxu0 0
        %4211 = vmatpush1.bf16.msra.mxu0 %v4100
        %4212 = vmatprep.subr.bf16.mxu0 0
        %4213 = vmatpush1.bf16.msra.mxu0 %v4101
        %4214 = vmatprep.mubr.bf16.mxu0 %v3786
        %4215 = vmatmul.mubr.bf16.gmra.mrb[0].mxu0 %v3785
        %v4216 = vpop.f32.mrb[0].mxu0
        %v4217 = vadd.f32 %v3892, %v4216
        %v4218 = vpop.f32.mrb[0].mxu0
        %v4219 = vpop.f32.mrb[0].mxu0
        %v4220 = vpop.f32.mrb[0].mxu0
        %4221 = vdwg.mxu0
        %4222 = vmatprep.subr.bf16.mxu0 0
        %4223 = vmatpush1.bf16.msra.mxu0 %v4102
        %4224 = vmatprep.subr.bf16.mxu0 0
        %4225 = vmatpush1.bf16.msra.mxu0 %v4103
        %4226 = vmatprep.subr.bf16.mxu0 0
        %4227 = vmatpush1.bf16.msra.mxu0 %v4104
        %4228 = vmatprep.subr.bf16.mxu0 0
        %4229 = vmatpush1.bf16.msra.mxu0 %v4105
        %4230 = vmatprep.subr.bf16.mxu0 0
        %4231 = vmatpush1.bf16.msra.mxu0 %v4106
        %4232 = vmatprep.subr.bf16.mxu0 0
        %4233 = vmatpush1.bf16.msra.mxu0 %v4107
        %4234 = vmatprep.subr.bf16.mxu0 0
        %4235 = vmatpush1.bf16.msra.mxu0 %v4108
        %4236 = vmatprep.subr.bf16.mxu0 0
        %4237 = vmatpush1.bf16.msra.mxu0 %v4109
        %4238 = vmatprep.subr.bf16.mxu0 0
        %4239 = vmatpush1.bf16.msra.mxu0 %v4110
        %4240 = vmatprep.subr.bf16.mxu0 0
        %4241 = vmatpush1.bf16.msra.mxu0 %v4111
        %4242 = vmatprep.subr.bf16.mxu0 0
        %4243 = vmatpush1.bf16.msra.mxu0 %v4112
        %4244 = vmatprep.subr.bf16.mxu0 0
        %4245 = vmatpush1.bf16.msra.mxu0 %v4113
        %4246 = vmatprep.subr.bf16.mxu0 0
        %4247 = vmatpush1.bf16.msra.mxu0 %v4114
        %4248 = vmatprep.subr.bf16.mxu0 0
        %4249 = vmatpush1.bf16.msra.mxu0 %v4115
        %4250 = vmatprep.subr.bf16.mxu0 0
        %4251 = vmatpush1.bf16.msra.mxu0 %v4116
        %4252 = vmatprep.subr.bf16.mxu0 0
        %4253 = vmatpush1.bf16.msra.mxu0 %v4117
        %4254 = vmatprep.mubr.bf16.mxu0 %v3788
        %4255 = vmatmul.mubr.bf16.gmra.mrb[0].mxu0 %v3787
        %v4256 = vpop.f32.mrb[0].mxu0
        %v4257 = vadd.f32 %v4217, %v4256
        %v4258 = vpop.f32.mrb[0].mxu0
        %v4259 = vpop.f32.mrb[0].mxu0
        %v4260 = vpop.f32.mrb[0].mxu0
        %4261 = vdwg.mxu0
        %4262 = vmatprep.subr.bf16.mxu0 0
        %4263 = vmatpush1.bf16.msra.mxu0 %v4118
        %4264 = vmatprep.subr.bf16.mxu0 0
        %4265 = vmatpush1.bf16.msra.mxu0 %v4119
        %4266 = vmatprep.subr.bf16.mxu0 0
        %4267 = vmatpush1.bf16.msra.mxu0 %v4120
        %4268 = vmatprep.subr.bf16.mxu0 0
        %4269 = vmatpush1.bf16.msra.mxu0 %v4121
        %4270 = vmatprep.subr.bf16.mxu0 0
        %4271 = vmatpush1.bf16.msra.mxu0 %v4122
        %4272 = vmatprep.subr.bf16.mxu0 0
        %4273 = vmatpush1.bf16.msra.mxu0 %v4123
        %4274 = vmatprep.subr.bf16.mxu0 0
        %4275 = vmatpush1.bf16.msra.mxu0 %v4124
        %4276 = vmatprep.subr.bf16.mxu0 0
        %4277 = vmatpush1.bf16.msra.mxu0 %v4125
        %4278 = vmatprep.subr.bf16.mxu0 0
        %4279 = vmatpush1.bf16.msra.mxu0 %v4126
        %4280 = vmatprep.subr.bf16.mxu0 0
        %4281 = vmatpush1.bf16.msra.mxu0 %v4127
        %4282 = vmatprep.subr.bf16.mxu0 0
        %4283 = vmatpush1.bf16.msra.mxu0 %v4128
        %4284 = vmatprep.subr.bf16.mxu0 0
        %4285 = vmatpush1.bf16.msra.mxu0 %v4129
        %4286 = vmatprep.subr.bf16.mxu0 0
        %4287 = vmatpush1.bf16.msra.mxu0 %v4130
        %4288 = vmatprep.subr.bf16.mxu0 0
        %4289 = vmatpush1.bf16.msra.mxu0 %v4131
        %4290 = vmatprep.subr.bf16.mxu0 0
        %4291 = vmatpush1.bf16.msra.mxu0 %v4132
        %4292 = vmatprep.subr.bf16.mxu0 0
        %4293 = vmatpush1.bf16.msra.mxu0 %v4133
        %4294 = vmatprep.mubr.bf16.mxu0 %v3790
        %4295 = vmatmul.mubr.bf16.gmra.mrb[0].mxu0 %v3789
        %v4296 = vpop.f32.mrb[0].mxu0
        %v4297 = vadd.f32 %v4257, %v4296
        %v4298 = vpop.f32.mrb[0].mxu0
        %v4299 = vpop.f32.mrb[0].mxu0
        %v4300 = vpop.f32.mrb[0].mxu0
        %4301 = vdwg.mxu0
        %4302 = vst [vmem:[%s361] sm:$0xff] %v4297
        %s4303 = sand.u32 %s172, 1
        %s4304 = scalar_lea.sflag [#allocation4], %s4303
        %s4305 = sand.u32 %s172, 1
        %s4306 = smul.addr %s4305, 8
        %s4307 = scalar_lea.vmem [#allocation13], %s4306
        // Predicated region
        $region69: #{tpu_custom_call.1} parent=43 // pred_check
          %p4308 = pneg %p182
        $region70: #{tpu_custom_call.1} parent=43 // pred_check_branch
          %4310 = sbr.rel (%p4308) target = $region72
        $region71: #{tpu_custom_call.1} parent=43 // pred_region
          %s4312 = ssub.s32 128, 128
          %4313 = vsyncadd %s4304, %s4312
          %s4314 = smul.addr %s28, 128
          %s4315 = scalar_lea.hbm %s6, %s4314
          %s4317 = sshll.u32 %s4307, 4
          %s4318 = int_to_ptr.vmem [resolvable:$true] %s4317
          %4320 = dma.vmem_to_hbm [thread:$0]  %s4318, 128, %s4315, %s4304
        $region72: #{tpu_custom_call.1} parent=43 // pred_fallthru
          _
      $region44: #{tpu_custom_call.1} parent=5 // pred_fallthru
        _
      %p4321 = scmp.le.s32.totalorder 2, %s23
      // Predicated region
      $region73: #{tpu_custom_call.1} parent=5 // pred_check
        %p4322 = pneg %p4321
      $region74: #{tpu_custom_call.1} parent=5 // pred_check_branch
        %4324 = sbr.rel (%p4322) target = $region76
      $region75: #{tpu_custom_call.1} parent=5 // pred_region
        %s4325 = ssub.s32 %s23, 2
        // Predicated region
        $region77: #{tpu_custom_call.1} parent=75 // pred_check
          %p4326 = pneg %p188
        $region78: #{tpu_custom_call.1} parent=75 // pred_check_branch
          %4328 = sbr.rel (%p4326) target = $region80
        $region79: #{tpu_custom_call.1} parent=75 // pred_region
          %s4329 = sand.u32 %s173, 1
          %s4330 = scalar_lea.sflag [#allocation4], %s4329
          %s4331 = sand.u32 %s173, 1
          %s4332 = smul.addr %s4331, 8
          %s4333 = scalar_lea.vmem [#allocation13], %s4332
          %4334 = dma.done %s4330, 128
        $region80: #{tpu_custom_call.1} parent=75 // pred_fallthru
          _
      $region76: #{tpu_custom_call.1} parent=5 // pred_fallthru
        _
    $region6: #{tpu_custom_call.1} parent=1 // loop_footer
      %s27 = sadd.s32 1, %s23
    $region7: #{tpu_custom_call.1} parent=1 // loop_footer_branch
      %22 = sbr.rel target = $region3
    $region8: #{tpu_custom_call.1} parent=1 // loop_exit
      _
    %4335 = vsyncpa [#allocation3], 1
    %s4336 = scalar_lea.sflag [#allocation3], 1
    %4337 = vsyncpa %s4336, 1
    %4338 = vsyncpa [#allocation6], 1
    %s4339 = scalar_lea.sflag [#allocation6], 1
    %4340 = vsyncpa %s4339, 1
    %4341 = vsyncpa [#allocation9], 1
    %4342 = vsyncpa [#allocation12], 1
    %4343 = vsyncpa [#allocation4], 1
    %s4344 = scalar_lea.sflag [#allocation4], 1
    %4345 = vsyncpa %s4344, 1

</llo_original>
